<compile_context>
chip_gen: v7x
topology: tpu7x:2x2x1
jax: 0.10.0
libtpu: 0.0.40
codegen_flags: <defaults>
</compile_context>

<pallas_src>
import functools
import math

import numpy as np
import jax
import jax.numpy as jnp
from jax.experimental import pallas as pl
from jax.experimental.pallas import tpu as pltpu

# ----------------------------- config (small) -------------------------------
INPUT_SIZE = 16
PATCH = 2
IN_CH = 4
HIDDEN = 64
DEPTH = 2
NUM_HEADS = 4
MLP_RATIO = 4.0
NUM_CLASSES = 10
LEARN_SIGMA = True
FREQ_DIM = 256

OUT_CH = IN_CH * 2 if LEARN_SIGMA else IN_CH
GRID_H = INPUT_SIZE // PATCH
NUM_PATCHES = GRID_H * GRID_H                  # T = 64
MLP_HIDDEN = int(HIDDEN * MLP_RATIO)           # 256
HEAD_DIM = HIDDEN // NUM_HEADS                 # 16
PATCH_DIM = IN_CH * PATCH * PATCH              # 16
OUT_DIM = PATCH * PATCH * OUT_CH               # 32
OUT_PAD = 128                                  # lane-dense padded head width
MODS_TOTAL = DEPTH * 6 * HIDDEN + 2 * HIDDEN   # 896 (lane-dense multiple of 128)


# ----------------------- sincos pos-embed (reference) -----------------------
def get_1d_sincos_pos_embed_from_grid(embed_dim, pos):
    assert embed_dim % 2 == 0
    omega = np.arange(embed_dim // 2, dtype=np.float64)
    omega /= embed_dim / 2.0
    omega = 1.0 / 10000 ** omega
    pos = pos.reshape(-1)
    out = np.einsum('m,d->md', pos, omega)
    return np.concatenate([np.sin(out), np.cos(out)], axis=1)


def get_2d_sincos_pos_embed(embed_dim, grid_size):
    grid_h = np.arange(grid_size, dtype=np.float32)
    grid_w = np.arange(grid_size, dtype=np.float32)
    grid = np.meshgrid(grid_w, grid_h)
    grid = np.stack(grid, axis=0).reshape([2, 1, grid_size, grid_size])
    emb_h = get_1d_sincos_pos_embed_from_grid(embed_dim // 2, grid[0])
    emb_w = get_1d_sincos_pos_embed_from_grid(embed_dim // 2, grid[1])
    return np.concatenate([emb_h, emb_w], axis=1)


# ------------------------------ in-kernel math -------------------------------
def _layer_norm(v, eps=1e-6):
    mu = jnp.mean(v, axis=-1, keepdims=True)
    var = jnp.mean((v - mu) ** 2, axis=-1, keepdims=True)
    return (v - mu) * jax.lax.rsqrt(var + eps)


def _gelu_tanh(v):
    return 0.5 * v * (1.0 + jnp.tanh(0.7978845608028654 * (v + 0.044715 * v ** 3)))


# --------------------- conditioning kernel (1 launch) ------------------------
# c = MLP_t(t_freq) + y_emb;  mods = SiLU(c) @ [ada_w_0 | ... | ada_w_{D-1} | final_ada_w]
def _cond_kernel(tf_ref, ye_ref, w0_ref, b0_ref, w2_ref, b2_ref, mw_ref, mb_ref, o_ref):
    h = jnp.dot(tf_ref[...], w0_ref[...], preferred_element_type=jnp.float32) + b0_ref[...]
    h = h * jax.nn.sigmoid(h)                                     # SiLU
    c = (jnp.dot(h, w2_ref[...], preferred_element_type=jnp.float32)
         + b2_ref[...] + ye_ref[...])
    cs = c * jax.nn.sigmoid(c)                                    # SiLU before adaLN linears
    o_ref[...] = (jnp.dot(cs, mw_ref[...], preferred_element_type=jnp.float32)
                  + mb_ref[...])


def conditioning(t_freq, y_emb, prm):
    N = t_freq.shape[0]
    return pl.pallas_call(
        _cond_kernel,
        out_shape=jax.ShapeDtypeStruct((N, MODS_TOTAL), jnp.float32),
        grid=(1,),
        in_specs=[
            pl.BlockSpec((N, FREQ_DIM), lambda i: (0, 0)),
            pl.BlockSpec((N, HIDDEN), lambda i: (0, 0)),
            pl.BlockSpec((FREQ_DIM, HIDDEN), lambda i: (0, 0)),
            pl.BlockSpec((1, HIDDEN), lambda i: (0, 0)),
            pl.BlockSpec((HIDDEN, HIDDEN), lambda i: (0, 0)),
            pl.BlockSpec((1, HIDDEN), lambda i: (0, 0)),
            pl.BlockSpec((HIDDEN, MODS_TOTAL), lambda i: (0, 0)),
            pl.BlockSpec((1, MODS_TOTAL), lambda i: (0, 0)),
        ],
        out_specs=pl.BlockSpec((N, MODS_TOTAL), lambda i: (0, 0)),
    )(t_freq, y_emb, prm['t_w0'], prm['t_b0'], prm['t_w2'], prm['t_b2'],
      prm['mods_w'], prm['mods_b'])


# ------------- fused DiT kernel: grid = (batch tiles, depth) -----------------
def _fused_dit_kernel(patch_ref, pos_ref, pw_ref, pb_ref,
                      modb_ref, qkvw_ref, qkvb_ref, projw_ref, projb_ref,
                      fc1w_ref, fc1b_ref, fc2w_ref, fc2b_ref,
                      modf_ref, fw_ref, fb_ref,
                      o_ref, tok_ref, *, num_heads, batch_tile):
    d = pl.program_id(1)
    n_depth = pl.num_programs(1)
    B = batch_tile
    T = NUM_PATCHES
    H = HIDDEN
    nh = num_heads
    hd = H // nh

    # depth 0: patch embedding (conv k=stride=p == linear) + fixed pos embed
    @pl.when(d == 0)
    def _():
        pv = patch_ref[...].reshape(B * T, PATCH_DIM).astype(jnp.bfloat16)
        emb = (jnp.dot(pv, pw_ref[...], preferred_element_type=jnp.float32)
               + pb_ref[...])
        tok_ref[...] = emb.reshape(B, T, H) + pos_ref[...]

    x = tok_ref[...]                                              # (B, T, H) f32

    mod = modb_ref[:, 0]                                          # (B, 6, H)
    shift_msa, scale_msa, gate_msa = mod[:, 0:1], mod[:, 1:2], mod[:, 2:3]
    shift_mlp, scale_mlp, gate_mlp = mod[:, 3:4], mod[:, 4:5], mod[:, 5:6]

    # ------------------------ attention (fused QKV) --------------------------
    xn = _layer_norm(x) * (1.0 + scale_msa) + shift_msa           # (B, T, H) f32
    qkv = (jnp.dot(xn.reshape(B * T, H).astype(jnp.bfloat16), qkvw_ref[0],
                   preferred_element_type=jnp.float32)
           + qkvb_ref[0])                                         # (B*T, 3H) f32
    qkv = qkv.astype(jnp.bfloat16).reshape(B, T, 3 * H)           # single hoisted cast

    inv_sqrt_hd = 1.0 / math.sqrt(hd)
    head_out = []
    for h in range(nh):                                           # static unrolled loop
        q_h = qkv[:, :, h * hd:(h + 1) * hd]                      # (B, T, hd) bf16
        k_h = qkv[:, :, H + h * hd:H + (h + 1) * hd]
        v_h = qkv[:, :, 2 * H + h * hd:2 * H + (h + 1) * hd]
        s = jnp.einsum('bqd,bkd->bqk', q_h, k_h,
                       preferred_element_type=jnp.float32) * inv_sqrt_hd
        s = s - jnp.max(s, axis=-1, keepdims=True)
        p = jnp.exp(s)
        p = p * pl.reciprocal(jnp.sum(p, axis=-1, keepdims=True), approx=True)
        head_out.append(jnp.einsum('bqk,bkd->bqd', p.astype(jnp.bfloat16), v_h,
                                   preferred_element_type=jnp.float32))
    # head merge = lane concat; single (B*T, H) @ (H, H) output projection (K = H)
    ao = jnp.concatenate(head_out, axis=-1)                       # (B, T, H) f32
    attn = (jnp.dot(ao.reshape(B * T, H).astype(jnp.bfloat16), projw_ref[0],
                    preferred_element_type=jnp.float32)
            + projb_ref[0])                                       # (B*T, H)
    x = x + gate_msa * attn.reshape(B, T, H)

    # --------------------------------- MLP -----------------------------------
    xn2 = _layer_norm(x) * (1.0 + scale_mlp) + shift_mlp
    h1 = (jnp.dot(xn2.reshape(B * T, H).astype(jnp.bfloat16), fc1w_ref[0],
                  preferred_element_type=jnp.float32) + fc1b_ref[0])
    h1 = _gelu_tanh(h1)
    h2 = (jnp.dot(h1.astype(jnp.bfloat16), fc2w_ref[0],
                  preferred_element_type=jnp.float32) + fc2b_ref[0])
    x = x + gate_mlp * h2.reshape(B, T, H)

    tok_ref[...] = x                                              # carry to next depth

    # last depth: FinalLayer (adaLN modulate + lane-dense padded linear head)
    @pl.when(d == n_depth - 1)
    def _():
        modf = modf_ref[...]                                      # (B, 2, H): [shift; scale]
        xf = _layer_norm(x) * (1.0 + modf[:, 1:2]) + modf[:, 0:1]
        out = (jnp.dot(xf.reshape(B * T, H).astype(jnp.bfloat16), fw_ref[...],
                       preferred_element_type=jnp.float32) + fb_ref[...])
        o_ref[...] = out.reshape(B, T, OUT_PAD)


def _fused_cost(n):
    T, H, MH, PD = NUM_PATCHES, HIDDEN, MLP_HIDDEN, PATCH_DIM
    nh, hd = NUM_HEADS, HEAD_DIM
    per_block_flops = (2 * T * H * 3 * H           # fused qkv
                       + 2 * nh * T * T * hd * 2   # scores + p@v
                       + 2 * T * H * H             # out proj
                       + 2 * 2 * T * H * MH)       # fc1 + fc2
    flops = n * (DEPTH * per_block_flops
                 + 2 * T * PD * H + 2 * T * H * OUT_PAD)
    transcendentals = n * DEPTH * (nh * T * T + T * MH)
    per_step_bytes = (H * 3 * H * 2 + H * H * 2 + 2 * H * MH * 2            # bf16 mats
                      + (3 * H + H + MH + H) * 4                            # f32 biases
                      + PD * H * 2 + H * 4 + T * H * 4                      # patch w/b + pos
                      + H * OUT_PAD * 2 + OUT_PAD * 4                       # final w/b
                      + 8 * H * 4 + T * PD * 4)                             # mods + patches
    bytes_accessed = n * DEPTH * per_step_bytes + n * T * OUT_PAD * 4
    return pl.CostEstimate(flops=int(flops), transcendentals=int(transcendentals),
                           bytes_accessed=int(bytes_accessed))


def _pick_batch_tile(n):
    """Largest batch tile <= 8 dividing n while keeping >= 2 parallel grid
    tiles (so both v7x TensorCores get work)."""
    if n <= 1:
        return 1
    best = 1
    for b in range(1, min(8, n) + 1):
        if n % b == 0 and n // b >= 2:
            best = b
    return best


def fused_dit(patches, mod_blocks, mod_final, prm, batch_tile):
    N, T, PD = patches.shape
    H, MH = HIDDEN, MLP_HIDDEN
    B = batch_tile
    kernel = functools.partial(_fused_dit_kernel, num_heads=NUM_HEADS, batch_tile=B)
    return pl.pallas_call(
        kernel,
        out_shape=jax.ShapeDtypeStruct((N, T, OUT_PAD), jnp.float32),
        grid=(N // B, DEPTH),
        in_specs=[
            pl.BlockSpec((B, T, PD), lambda b, d: (b, 0, 0)),               # patches
            pl.BlockSpec((T, H), lambda b, d: (0, 0)),                      # pos_embed
            pl.BlockSpec((PD, H), lambda b, d: (0, 0)),                     # patch_w (bf16)
            pl.BlockSpec((1, H), lambda b, d: (0, 0)),                      # patch_b
            pl.BlockSpec((B, 1, 6, H), lambda b, d: (b, d, 0, 0)),          # block mods
            pl.BlockSpec((1, H, 3 * H), lambda b, d: (d, 0, 0)),            # fused qkv_w (bf16)
            pl.BlockSpec((1, 1, 3 * H), lambda b, d: (d, 0, 0)),            # fused qkv_b
            pl.BlockSpec((1, H, H), lambda b, d: (d, 0, 0)),                # proj_w (bf16)
            pl.BlockSpec((1, 1, H), lambda b, d: (d, 0, 0)),                # proj_b
            pl.BlockSpec((1, H, MH), lambda b, d: (d, 0, 0)),               # fc1_w (bf16)
            pl.BlockSpec((1, 1, MH), lambda b, d: (d, 0, 0)),               # fc1_b
            pl.BlockSpec((1, MH, H), lambda b, d: (d, 0, 0)),               # fc2_w (bf16)
            pl.BlockSpec((1, 1, H), lambda b, d: (d, 0, 0)),                # fc2_b
            pl.BlockSpec((B, 2, H), lambda b, d: (b, 0, 0)),                # final mods
            pl.BlockSpec((H, OUT_PAD), lambda b, d: (0, 0)),                # final_w (padded)
            pl.BlockSpec((1, OUT_PAD), lambda b, d: (0, 0)),                # final_b (padded)
        ],
        out_specs=pl.BlockSpec((B, T, OUT_PAD), lambda b, d: (b, 0, 0)),
        scratch_shapes=[pltpu.VMEM((B, T, H), jnp.float32)],                # resident tokens
        compiler_params=pltpu.CompilerParams(
            dimension_semantics=("parallel", "arbitrary")),
        cost_estimate=_fused_cost(N),
    )(patches, prm['pos_embed'], prm['patch_w'], prm['patch_b'],
      mod_blocks, prm['qkv_w'], prm['qkv_b'], prm['proj_w'], prm['proj_b'],
      prm['fc1_w'], prm['fc1_b'], prm['fc2_w'], prm['fc2_b'],
      mod_final, prm['final_w'], prm['final_b'])


# ------------------------------- parameters ----------------------------------
def init_params(key):
    def nrm(k, shape, std=0.02):
        return std * jax.random.normal(k, shape, jnp.float32)

    keys = iter(jax.random.split(key, 64))
    p = {}
    p['patch_w'] = nrm(next(keys), (PATCH_DIM, HIDDEN))
    p['patch_b'] = nrm(next(keys), (HIDDEN,))
    p['pos_embed'] = jnp.asarray(get_2d_sincos_pos_embed(HIDDEN, GRID_H), jnp.float32)
    p['t_w0'] = nrm(next(keys), (FREQ_DIM, HIDDEN))
    p['t_b0'] = nrm(next(keys), (HIDDEN,))
    p['t_w2'] = nrm(next(keys), (HIDDEN, HIDDEN))
    p['t_b2'] = nrm(next(keys), (HIDDEN,))
    p['label_table'] = nrm(next(keys), (NUM_CLASSES + 1, HIDDEN))
    blocks = []
    for _ in range(DEPTH):
        blocks.append({
            'ada_w': nrm(next(keys), (HIDDEN, 6 * HIDDEN)),
            'ada_b': nrm(next(keys), (6 * HIDDEN,)),
            'qkv_w': nrm(next(keys), (HIDDEN, 3 * HIDDEN)),   # cols ordered [q|k|v], head-major
            'qkv_b': nrm(next(keys), (3 * HIDDEN,)),
            'proj_w': nrm(next(keys), (HIDDEN, HIDDEN)),
            'proj_b': nrm(next(keys), (HIDDEN,)),
            'fc1_w': nrm(next(keys), (HIDDEN, MLP_HIDDEN)),
            'fc1_b': nrm(next(keys), (MLP_HIDDEN,)),
            'fc2_w': nrm(next(keys), (MLP_HIDDEN, HIDDEN)),
            'fc2_b': nrm(next(keys), (HIDDEN,)),
        })
    p['blocks'] = blocks
    p['final_ada_w'] = nrm(next(keys), (HIDDEN, 2 * HIDDEN))
    p['final_ada_b'] = nrm(next(keys), (2 * HIDDEN,))
    p['final_w'] = nrm(next(keys), (HIDDEN, OUT_DIM))
    p['final_b'] = nrm(next(keys), (OUT_DIM,))
    return p


def prep_params(p):
    """Repack raw params into the kernel-friendly layout: depth-stacked,
    lane-dense (fused qkv columns, padded final head), bf16 weight matrices /
    f32 biases & stats."""
    bf16 = jnp.bfloat16
    q = {
        'patch_w': p['patch_w'].astype(bf16),
        'patch_b': p['patch_b'].reshape(1, HIDDEN),
        'pos_embed': p['pos_embed'],
        't_w0': p['t_w0'], 't_b0': p['t_b0'].reshape(1, HIDDEN),
        't_w2': p['t_w2'], 't_b2': p['t_b2'].reshape(1, HIDDEN),
        'label_table': p['label_table'],
    }
    # lane-dense final head: pad OUT_DIM (32) -> OUT_PAD (128) with zero columns.
    fw = jnp.zeros((HIDDEN, OUT_PAD), jnp.float32).at[:, :OUT_DIM].set(p['final_w'])
    fb = jnp.zeros((OUT_PAD,), jnp.float32).at[:OUT_DIM].set(p['final_b'])
    q['final_w'] = fw.astype(bf16)
    q['final_b'] = fb.reshape(1, OUT_PAD)

    blocks = p['blocks']
    q['qkv_w'] = jnp.stack([b['qkv_w'] for b in blocks]).astype(bf16)            # (D, H, 3H)
    q['qkv_b'] = jnp.stack([b['qkv_b'].reshape(1, 3 * HIDDEN) for b in blocks])  # (D, 1, 3H)
    q['proj_w'] = jnp.stack([b['proj_w'] for b in blocks]).astype(bf16)          # (D, H, H)
    q['proj_b'] = jnp.stack([b['proj_b'].reshape(1, HIDDEN) for b in blocks])    # (D, 1, H)
    q['fc1_w'] = jnp.stack([b['fc1_w'] for b in blocks]).astype(bf16)            # (D, H, MH)
    q['fc1_b'] = jnp.stack([b['fc1_b'].reshape(1, MLP_HIDDEN) for b in blocks])
    q['fc2_w'] = jnp.stack([b['fc2_w'] for b in blocks]).astype(bf16)            # (D, MH, H)
    q['fc2_b'] = jnp.stack([b['fc2_b'].reshape(1, HIDDEN) for b in blocks])

    mods_w = jnp.concatenate([b['ada_w'] for b in blocks] + [p['final_ada_w']], axis=1)
    mods_b = jnp.concatenate([b['ada_b'] for b in blocks] + [p['final_ada_b']])
    q['mods_w'] = mods_w                                   # (H, MODS_TOTAL)
    q['mods_b'] = mods_b.reshape(1, MODS_TOTAL)
    return q


# -------------------------------- forward ------------------------------------
def dit_forward(prm, x, t, y):
    """x:(N, C, H, W) NCHW, t:(N,) float, y:(N,) int -> (N, OUT_CH, H, W)."""
    N = x.shape[0]
    p_, Hp = PATCH, GRID_H

    # patch extraction (glue): conv(k=stride=p) == linear on patch vectors
    xp = x.reshape(N, IN_CH, Hp, p_, Hp, p_)
    xp = xp.transpose(0, 2, 4, 1, 3, 5).reshape(N, NUM_PATCHES, PATCH_DIM)

    # timestep sinusoid features (glue)
    half = FREQ_DIM // 2
    freqs = jnp.exp(-math.log(10000.0) * jnp.arange(half, dtype=jnp.float32) / half)
    args = t.astype(jnp.float32)[:, None] * freqs[None]
    t_freq = jnp.concatenate([jnp.cos(args), jnp.sin(args)], axis=-1)   # (N, 256)

    # label embedding (eval mode: no CFG label dropout)
    # TODO(synk): training-time stochastic label dropout (classifier-free guidance) not modeled.
    y_emb = prm['label_table'][y]                                        # (N, H)

    # fused conditioning: t-MLP + y add + all adaLN modulation projections
    mods = conditioning(t_freq, y_emb, prm)                              # (N, MODS_TOTAL)
    nb = DEPTH * 6 * HIDDEN
    mod_blocks = mods[:, :nb].reshape(N, DEPTH, 6, HIDDEN)
    mod_final = mods[:, nb:].reshape(N, 2, HIDDEN)

    # fused transformer: patch-embed + DEPTH DiT blocks + final layer
    B = _pick_batch_tile(N)
    out = fused_dit(xp, mod_blocks, mod_final, prm, B)                   # (N, T, OUT_PAD)
    out = out[:, :, :OUT_DIM]                                            # drop lane padding

    # unpatchify (glue)
    out = out.reshape(N, Hp, Hp, p_, p_, OUT_CH)
    out = jnp.einsum('nhwpqc->nchpwq', out)
    return out.reshape(N, OUT_CH, Hp * p_, Hp * p_)


# --------------------------------- main ---------------------------------------
if __name__ == "__main__":
    root = jax.random.PRNGKey(0)
    k_param, k_x, k_t, k_y = jax.random.split(root, 4)

    params = prep_params(init_params(k_param))
    x = jax.random.normal(k_x, (2, IN_CH, INPUT_SIZE, INPUT_SIZE), jnp.float32)
    t = jax.random.uniform(k_t, (2,), jnp.float32, 0.0, 1000.0)
    y = jax.random.randint(k_y, (2,), 0, NUM_CLASSES)

    fwd = jax.jit(lambda x, t, y: dit_forward(params, x, t, y))
    out = fwd(x, t, y)
    jax.block_until_ready(out)

    assert out.shape == (2, OUT_CH, INPUT_SIZE, INPUT_SIZE), out.shape
    assert jnp.all(jnp.isfinite(out))
    print("KERNEL_OK")
</pallas_src>

<mosaic_0001>
module attributes {stable_mosaic.version = 11 : i64} {
  func.func @_cond_kernel(%arg0: i32, %arg1: memref<2x256xf32, #tpu.memory_space<vmem>>, %arg2: memref<2x64xf32, #tpu.memory_space<vmem>>, %arg3: memref<256x64xf32, #tpu.memory_space<vmem>>, %arg4: memref<1x64xf32, #tpu.memory_space<vmem>>, %arg5: memref<64x64xf32, #tpu.memory_space<vmem>>, %arg6: memref<1x64xf32, #tpu.memory_space<vmem>>, %arg7: memref<64x896xf32, #tpu.memory_space<vmem>>, %arg8: memref<1x896xf32, #tpu.memory_space<vmem>>, %arg9: memref<2x896xf32, #tpu.memory_space<vmem>>) attributes {dimension_semantics = [#tpu.dimension_semantics<arbitrary>], iteration_bounds = array<i64: 1>, scalar_prefetch = 0 : i64, scratch_operands = 0 : i64, tpu.core_type = #tpu.core_type<tc>, window_params = [{pipeline_mode = #tpu.pipeline_mode<synchronous>, transform_indices = @transform_0, window_bounds = array<i64: 2, 256>}, {pipeline_mode = #tpu.pipeline_mode<synchronous>, transform_indices = @transform_1, window_bounds = array<i64: 2, 64>}, {pipeline_mode = #tpu.pipeline_mode<synchronous>, transform_indices = @transform_2, window_bounds = array<i64: 256, 64>}, {pipeline_mode = #tpu.pipeline_mode<synchronous>, transform_indices = @transform_3, window_bounds = array<i64: 1, 64>}, {pipeline_mode = #tpu.pipeline_mode<synchronous>, transform_indices = @transform_4, window_bounds = array<i64: 64, 64>}, {pipeline_mode = #tpu.pipeline_mode<synchronous>, transform_indices = @transform_5, window_bounds = array<i64: 1, 64>}, {pipeline_mode = #tpu.pipeline_mode<synchronous>, transform_indices = @transform_6, window_bounds = array<i64: 64, 896>}, {pipeline_mode = #tpu.pipeline_mode<synchronous>, transform_indices = @transform_7, window_bounds = array<i64: 1, 896>}, {pipeline_mode = #tpu.pipeline_mode<synchronous>, transform_indices = @transform_8, window_bounds = array<i64: 2, 896>}]} {
    %c0 = arith.constant 0 : index
    %c0_0 = arith.constant 0 : index
    %0 = vector.load %arg1[%c0, %c0_0] : memref<2x256xf32, #tpu.memory_space<vmem>>, vector<2x256xf32>
    %c0_1 = arith.constant 0 : index
    %c0_2 = arith.constant 0 : index
    %1 = vector.load %arg3[%c0_1, %c0_2] : memref<256x64xf32, #tpu.memory_space<vmem>>, vector<256x64xf32>
    %cst = arith.constant dense<0.000000e+00> : vector<2x64xf32>
    %2 = tpu.matmul %0, %1, %cst {dimension_numbers = #tpu.dot_dimension_numbers<[1], [0], [0], [1], [0, 0, 1, 1], [], []>} : vector<2x256xf32>, vector<256x64xf32>, vector<2x64xf32> -> vector<2x64xf32>
    %c0_3 = arith.constant 0 : index
    %c0_4 = arith.constant 0 : index
    %3 = vector.load %arg4[%c0_3, %c0_4] : memref<1x64xf32, #tpu.memory_space<vmem>>, vector<1x64xf32>
    %4 = vector.broadcast %3 : vector<1x64xf32> to vector<2x64xf32>
    %5 = arith.addf %2, %4 : vector<2x64xf32>
    %6 = arith.negf %5 : vector<2x64xf32>
    %7 = math.exp %6 : vector<2x64xf32>
    %cst_5 = arith.constant 1.000000e+00 : f32
    %8 = vector.broadcast %cst_5 : f32 to vector<2x64xf32>
    %9 = arith.addf %8, %7 : vector<2x64xf32>
    %10 = arith.divf %8, %9 : vector<2x64xf32>
    %11 = arith.mulf %5, %10 : vector<2x64xf32>
    %c0_6 = arith.constant 0 : index
    %c0_7 = arith.constant 0 : index
    %12 = vector.load %arg5[%c0_6, %c0_7] : memref<64x64xf32, #tpu.memory_space<vmem>>, vector<64x64xf32>
    %cst_8 = arith.constant dense<0.000000e+00> : vector<2x64xf32>
    %13 = tpu.matmul %11, %12, %cst_8 {dimension_numbers = #tpu.dot_dimension_numbers<[1], [0], [0], [1], [0, 0, 1, 1], [], []>} : vector<2x64xf32>, vector<64x64xf32>, vector<2x64xf32> -> vector<2x64xf32>
    %c0_9 = arith.constant 0 : index
    %c0_10 = arith.constant 0 : index
    %14 = vector.load %arg6[%c0_9, %c0_10] : memref<1x64xf32, #tpu.memory_space<vmem>>, vector<1x64xf32>
    %15 = vector.broadcast %14 : vector<1x64xf32> to vector<2x64xf32>
    %16 = arith.addf %13, %15 : vector<2x64xf32>
    %c0_11 = arith.constant 0 : index
    %c0_12 = arith.constant 0 : index
    %17 = vector.load %arg2[%c0_11, %c0_12] : memref<2x64xf32, #tpu.memory_space<vmem>>, vector<2x64xf32>
    %18 = arith.addf %16, %17 : vector<2x64xf32>
    %19 = arith.negf %18 : vector<2x64xf32>
    %20 = math.exp %19 : vector<2x64xf32>
    %cst_13 = arith.constant 1.000000e+00 : f32
    %21 = vector.broadcast %cst_13 : f32 to vector<2x64xf32>
    %22 = arith.addf %21, %20 : vector<2x64xf32>
    %23 = arith.divf %21, %22 : vector<2x64xf32>
    %24 = arith.mulf %18, %23 : vector<2x64xf32>
    %c0_14 = arith.constant 0 : index
    %c0_15 = arith.constant 0 : index
    %25 = vector.load %arg7[%c0_14, %c0_15] : memref<64x896xf32, #tpu.memory_space<vmem>>, vector<64x896xf32>
    %cst_16 = arith.constant dense<0.000000e+00> : vector<2x896xf32>
    %26 = tpu.matmul %24, %25, %cst_16 {dimension_numbers = #tpu.dot_dimension_numbers<[1], [0], [0], [1], [0, 0, 1, 1], [], []>} : vector<2x64xf32>, vector<64x896xf32>, vector<2x896xf32> -> vector<2x896xf32>
    %c0_17 = arith.constant 0 : index
    %c0_18 = arith.constant 0 : index
    %27 = vector.load %arg8[%c0_17, %c0_18] : memref<1x896xf32, #tpu.memory_space<vmem>>, vector<1x896xf32>
    %28 = vector.broadcast %27 : vector<1x896xf32> to vector<2x896xf32>
    %29 = arith.addf %26, %28 : vector<2x896xf32>
    %c0_19 = arith.constant 0 : index
    %c0_20 = arith.constant 0 : index
    %30 = vector.load %arg9[%c0_19, %c0_20] : memref<2x896xf32, #tpu.memory_space<vmem>>, vector<2x896xf32>
    tpu.vector_store %arg9[%c0_19, %c0_20], %29 {strides = array<i32>} : memref<2x896xf32, #tpu.memory_space<vmem>>, vector<2x896xf32>,
    return
  }
  func.func @transform_0(%arg0: i32) -> (i32, i32) {
    %c0_i32 = arith.constant 0 : i32
    %c0_i32_0 = arith.constant 0 : i32
    %c0_i32_1 = arith.constant 0 : i32
    return %c0_i32, %c0_i32_0 : i32, i32
  }
  func.func @transform_1(%arg0: i32) -> (i32, i32) {
    %c0_i32 = arith.constant 0 : i32
    %c0_i32_0 = arith.constant 0 : i32
    %c0_i32_1 = arith.constant 0 : i32
    return %c0_i32, %c0_i32_0 : i32, i32
  }
  func.func @transform_2(%arg0: i32) -> (i32, i32) {
    %c0_i32 = arith.constant 0 : i32
    %c0_i32_0 = arith.constant 0 : i32
    %c0_i32_1 = arith.constant 0 : i32
    return %c0_i32, %c0_i32_0 : i32, i32
  }
  func.func @transform_3(%arg0: i32) -> (i32, i32) {
    %c0_i32 = arith.constant 0 : i32
    %c0_i32_0 = arith.constant 0 : i32
    %c0_i32_1 = arith.constant 0 : i32
    return %c0_i32, %c0_i32_0 : i32, i32
  }
  func.func @transform_4(%arg0: i32) -> (i32, i32) {
    %c0_i32 = arith.constant 0 : i32
    %c0_i32_0 = arith.constant 0 : i32
    %c0_i32_1 = arith.constant 0 : i32
    return %c0_i32, %c0_i32_0 : i32, i32
  }
  func.func @transform_5(%arg0: i32) -> (i32, i32) {
    %c0_i32 = arith.constant 0 : i32
    %c0_i32_0 = arith.constant 0 : i32
    %c0_i32_1 = arith.constant 0 : i32
    return %c0_i32, %c0_i32_0 : i32, i32
  }
  func.func @transform_6(%arg0: i32) -> (i32, i32) {
    %c0_i32 = arith.constant 0 : i32
    %c0_i32_0 = arith.constant 0 : i32
    %c0_i32_1 = arith.constant 0 : i32
    return %c0_i32, %c0_i32_0 : i32, i32
  }
  func.func @transform_7(%arg0: i32) -> (i32, i32) {
    %c0_i32 = arith.constant 0 : i32
    %c0_i32_0 = arith.constant 0 : i32
    %c0_i32_1 = arith.constant 0 : i32
    return %c0_i32, %c0_i32_0 : i32, i32
  }
  func.func @transform_8(%arg0: i32) -> (i32, i32) {
    %c0_i32 = arith.constant 0 : i32
    %c0_i32_0 = arith.constant 0 : i32
    %c0_i32_1 = arith.constant 0 : i32
    return %c0_i32, %c0_i32_0 : i32, i32
  }
}

module attributes {stable_mosaic.version = 11 : i64} {
  func.func @_fused_dit_kernel(%arg0: i32, %arg1: i32, %arg2: memref<1x64x16xf32, #tpu.memory_space<vmem>>, %arg3: memref<64x64xf32, #tpu.memory_space<vmem>>, %arg4: memref<16x64xbf16, #tpu.memory_space<vmem>>, %arg5: memref<1x64xf32, #tpu.memory_space<vmem>>, %arg6: memref<1x1x6x64xf32, #tpu.memory_space<vmem>>, %arg7: memref<1x64x192xbf16, #tpu.memory_space<vmem>>, %arg8: memref<1x1x192xf32, #tpu.memory_space<vmem>>, %arg9: memref<1x64x64xbf16, #tpu.memory_space<vmem>>, %arg10: memref<1x1x64xf32, #tpu.memory_space<vmem>>, %arg11: memref<1x64x256xbf16, #tpu.memory_space<vmem>>, %arg12: memref<1x1x256xf32, #tpu.memory_space<vmem>>, %arg13: memref<1x256x64xbf16, #tpu.memory_space<vmem>>, %arg14: memref<1x1x64xf32, #tpu.memory_space<vmem>>, %arg15: memref<1x2x64xf32, #tpu.memory_space<vmem>>, %arg16: memref<64x128xbf16, #tpu.memory_space<vmem>>, %arg17: memref<1x128xf32, #tpu.memory_space<vmem>>, %arg18: memref<1x64x128xf32, #tpu.memory_space<vmem>>, %arg19: memref<1x64x64xf32, #tpu.memory_space<vmem>>) attributes {dimension_semantics = [#tpu.dimension_semantics<parallel>, #tpu.dimension_semantics<arbitrary>], iteration_bounds = array<i64: 2, 2>, scalar_prefetch = 0 : i64, scratch_operands = 1 : i64, tpu.core_type = #tpu.core_type<tc>, window_params = [{transform_indices = @transform_0, window_bounds = array<i64: 1, 64, 16>}, {pipeline_mode = #tpu.pipeline_mode<synchronous>, transform_indices = @transform_1, window_bounds = array<i64: 64, 64>}, {pipeline_mode = #tpu.pipeline_mode<synchronous>, transform_indices = @transform_2, window_bounds = array<i64: 16, 64>}, {pipeline_mode = #tpu.pipeline_mode<synchronous>, transform_indices = @transform_3, window_bounds = array<i64: 1, 64>}, {transform_indices = @transform_4, window_bounds = array<i64: 1, 1, 6, 64>}, {transform_indices = @transform_5, window_bounds = array<i64: 1, 64, 192>}, {transform_indices = @transform_6, window_bounds = array<i64: 1, 1, 192>}, {transform_indices = @transform_7, window_bounds = array<i64: 1, 64, 64>}, {transform_indices = @transform_8, window_bounds = array<i64: 1, 1, 64>}, {transform_indices = @transform_9, window_bounds = array<i64: 1, 64, 256>}, {transform_indices = @transform_10, window_bounds = array<i64: 1, 1, 256>}, {transform_indices = @transform_11, window_bounds = array<i64: 1, 256, 64>}, {transform_indices = @transform_12, window_bounds = array<i64: 1, 1, 64>}, {transform_indices = @transform_13, window_bounds = array<i64: 1, 2, 64>}, {pipeline_mode = #tpu.pipeline_mode<synchronous>, transform_indices = @transform_14, window_bounds = array<i64: 64, 128>}, {pipeline_mode = #tpu.pipeline_mode<synchronous>, transform_indices = @transform_15, window_bounds = array<i64: 1, 128>}, {transform_indices = @transform_16, window_bounds = array<i64: 1, 64, 128>}]} {
    %c0_i32 = arith.constant 0 : i32
    %0 = arith.cmpi eq, %arg1, %c0_i32 : i32
    %1 = arith.extui %0 : i1 to i32
    %c0_i32_0 = arith.constant 0 : i32
    %2 = arith.cmpi ne, %1, %c0_i32_0 : i32
    scf.if %2 {
      %c0_74 = arith.constant 0 : index
      %c0_75 = arith.constant 0 : index
      %c0_76 = arith.constant 0 : index
      %195 = vector.load %arg2[%c0_74, %c0_75, %c0_76] : memref<1x64x16xf32, #tpu.memory_space<vmem>>, vector<1x64x16xf32>
      %196 = vector.shape_cast %195 : vector<1x64x16xf32> to vector<64x16xf32>
      %197 = arith.truncf %196 : vector<64x16xf32> to vector<64x16xbf16>
      %c0_77 = arith.constant 0 : index
      %c0_78 = arith.constant 0 : index
      %198 = vector.load %arg4[%c0_77, %c0_78] : memref<16x64xbf16, #tpu.memory_space<vmem>>, vector<16x64xbf16>
      %cst_79 = arith.constant dense<0.000000e+00> : vector<64x64xf32>
      %199 = tpu.matmul %197, %198, %cst_79 {dimension_numbers = #tpu.dot_dimension_numbers<[1], [0], [0], [1], [0, 0, 1, 1], [], []>} : vector<64x16xbf16>, vector<16x64xbf16>, vector<64x64xf32> -> vector<64x64xf32>
      %c0_80 = arith.constant 0 : index
      %c0_81 = arith.constant 0 : index
      %200 = vector.load %arg5[%c0_80, %c0_81] : memref<1x64xf32, #tpu.memory_space<vmem>>, vector<1x64xf32>
      %201 = vector.broadcast %200 : vector<1x64xf32> to vector<64x64xf32>
      %202 = arith.addf %199, %201 : vector<64x64xf32>
      %203 = vector.shape_cast %202 : vector<64x64xf32> to vector<1x64x64xf32>
      %c0_82 = arith.constant 0 : index
      %c0_83 = arith.constant 0 : index
      %204 = vector.load %arg3[%c0_82, %c0_83] : memref<64x64xf32, #tpu.memory_space<vmem>>, vector<64x64xf32>
      %205 = vector.shape_cast %204 : vector<64x64xf32> to vector<1x64x64xf32>
      %206 = arith.addf %203, %205 : vector<1x64x64xf32>
      %c0_84 = arith.constant 0 : index
      %c0_85 = arith.constant 0 : index
      %c0_86 = arith.constant 0 : index
      %207 = vector.load %arg19[%c0_84, %c0_85, %c0_86] : memref<1x64x64xf32, #tpu.memory_space<vmem>>, vector<1x64x64xf32>
      tpu.vector_store %arg19[%c0_84, %c0_85, %c0_86], %206 {strides = array<i32>} : memref<1x64x64xf32, #tpu.memory_space<vmem>>, vector<1x64x64xf32>,
    } else {
    }
    %c0 = arith.constant 0 : index
    %c0_1 = arith.constant 0 : index
    %c0_2 = arith.constant 0 : index
    %3 = vector.load %arg19[%c0, %c0_1, %c0_2] : memref<1x64x64xf32, #tpu.memory_space<vmem>>, vector<1x64x64xf32>
    %c0_3 = arith.constant 0 : index
    %c0_4 = arith.constant 0 : index
    %c0_5 = arith.constant 0 : index
    %c0_6 = arith.constant 0 : index
    %4 = vector.load %arg6[%c0_3, %c0_4, %c0_5, %c0_6] : memref<1x1x6x64xf32, #tpu.memory_space<vmem>>, vector<1x1x6x64xf32>
    %5 = vector.shape_cast %4 : vector<1x1x6x64xf32> to vector<1x6x64xf32>
    %6 = vector.extract_strided_slice %5 {offsets = [0, 0, 0], sizes = [1, 1, 64], strides = [1, 1, 1]} : vector<1x6x64xf32> to vector<1x1x64xf32>
    %7 = vector.extract_strided_slice %5 {offsets = [0, 1, 0], sizes = [1, 1, 64], strides = [1, 1, 1]} : vector<1x6x64xf32> to vector<1x1x64xf32>
    %8 = vector.extract_strided_slice %5 {offsets = [0, 2, 0], sizes = [1, 1, 64], strides = [1, 1, 1]} : vector<1x6x64xf32> to vector<1x1x64xf32>
    %9 = vector.extract_strided_slice %5 {offsets = [0, 3, 0], sizes = [1, 1, 64], strides = [1, 1, 1]} : vector<1x6x64xf32> to vector<1x1x64xf32>
    %10 = vector.extract_strided_slice %5 {offsets = [0, 4, 0], sizes = [1, 1, 64], strides = [1, 1, 1]} : vector<1x6x64xf32> to vector<1x1x64xf32>
    %11 = vector.extract_strided_slice %5 {offsets = [0, 5, 0], sizes = [1, 1, 64], strides = [1, 1, 1]} : vector<1x6x64xf32> to vector<1x1x64xf32>
    %cst = arith.constant dense<0.000000e+00> : vector<1x64xf32>
    %12 = vector.multi_reduction <add>, %3, %cst [2] : vector<1x64x64xf32> to vector<1x64xf32>
    %13 = vector.shape_cast %12 : vector<1x64xf32> to vector<1x64x1xf32>
    %cst_7 = arith.constant 6.400000e+01 : f32
    %14 = vector.broadcast %cst_7 : f32 to vector<1x64x1xf32>
    %15 = arith.divf %13, %14 : vector<1x64x1xf32>
    %16 = vector.broadcast %15 : vector<1x64x1xf32> to vector<1x64x64xf32>
    %17 = arith.subf %3, %16 : vector<1x64x64xf32>
    %18 = arith.mulf %17, %17 : vector<1x64x64xf32>
    %cst_8 = arith.constant dense<0.000000e+00> : vector<1x64xf32>
    %19 = vector.multi_reduction <add>, %18, %cst_8 [2] : vector<1x64x64xf32> to vector<1x64xf32>
    %20 = vector.shape_cast %19 : vector<1x64xf32> to vector<1x64x1xf32>
    %cst_9 = arith.constant 6.400000e+01 : f32
    %21 = vector.broadcast %cst_9 : f32 to vector<1x64x1xf32>
    %22 = arith.divf %20, %21 : vector<1x64x1xf32>
    %23 = vector.broadcast %15 : vector<1x64x1xf32> to vector<1x64x64xf32>
    %24 = arith.subf %3, %23 : vector<1x64x64xf32>
    %cst_10 = arith.constant 9.99999997E-7 : f32
    %25 = vector.broadcast %cst_10 : f32 to vector<1x64x1xf32>
    %26 = arith.addf %22, %25 : vector<1x64x1xf32>
    %27 = math.rsqrt %26 : vector<1x64x1xf32>
    %28 = vector.broadcast %27 : vector<1x64x1xf32> to vector<1x64x64xf32>
    %29 = arith.mulf %24, %28 : vector<1x64x64xf32>
    %cst_11 = arith.constant 1.000000e+00 : f32
    %30 = vector.broadcast %cst_11 : f32 to vector<1x1x64xf32>
    %31 = arith.addf %30, %7 : vector<1x1x64xf32>
    %32 = vector.broadcast %31 : vector<1x1x64xf32> to vector<1x64x64xf32>
    %33 = arith.mulf %29, %32 : vector<1x64x64xf32>
    %34 = vector.broadcast %6 : vector<1x1x64xf32> to vector<1x64x64xf32>
    %35 = arith.addf %33, %34 : vector<1x64x64xf32>
    %36 = vector.shape_cast %35 : vector<1x64x64xf32> to vector<64x64xf32>
    %37 = arith.truncf %36 : vector<64x64xf32> to vector<64x64xbf16>
    %c0_12 = arith.constant 0 : index
    %c0_13 = arith.constant 0 : index
    %c0_14 = arith.constant 0 : index
    %38 = vector.load %arg7[%c0_12, %c0_13, %c0_14] : memref<1x64x192xbf16, #tpu.memory_space<vmem>>, vector<1x64x192xbf16>
    %39 = vector.shape_cast %38 : vector<1x64x192xbf16> to vector<64x192xbf16>
    %cst_15 = arith.constant dense<0.000000e+00> : vector<64x192xf32>
    %40 = tpu.matmul %37, %39, %cst_15 {dimension_numbers = #tpu.dot_dimension_numbers<[1], [0], [0], [1], [0, 0, 1, 1], [], []>} : vector<64x64xbf16>, vector<64x192xbf16>, vector<64x192xf32> -> vector<64x192xf32>
    %c0_16 = arith.constant 0 : index
    %c0_17 = arith.constant 0 : index
    %c0_18 = arith.constant 0 : index
    %41 = vector.load %arg8[%c0_16, %c0_17, %c0_18] : memref<1x1x192xf32, #tpu.memory_space<vmem>>, vector<1x1x192xf32>
    %42 = vector.shape_cast %41 : vector<1x1x192xf32> to vector<1x192xf32>
    %43 = vector.broadcast %42 : vector<1x192xf32> to vector<64x192xf32>
    %44 = arith.addf %40, %43 : vector<64x192xf32>
    %45 = arith.truncf %44 : vector<64x192xf32> to vector<64x192xbf16>
    %46 = vector.shape_cast %45 : vector<64x192xbf16> to vector<1x64x192xbf16>
    %47 = vector.extract_strided_slice %46 {offsets = [0, 0, 0], sizes = [1, 64, 16], strides = [1, 1, 1]} : vector<1x64x192xbf16> to vector<1x64x16xbf16>
    %48 = vector.extract_strided_slice %46 {offsets = [0, 0, 64], sizes = [1, 64, 16], strides = [1, 1, 1]} : vector<1x64x192xbf16> to vector<1x64x16xbf16>
    %49 = vector.extract_strided_slice %46 {offsets = [0, 0, 128], sizes = [1, 64, 16], strides = [1, 1, 1]} : vector<1x64x192xbf16> to vector<1x64x16xbf16>
    "tpu.trace_start"() <{level = 10 : i32, message = "bqd,bkd->bqk"}> : () -> ()
    %cst_19 = arith.constant dense<0.000000e+00> : vector<1x64x64xf32>
    %50 = tpu.matmul %47, %48, %cst_19 {dimension_numbers = #tpu.dot_dimension_numbers<[2], [2], [1], [1], [0, 0, 0, 1, 1, 1], [0], [0]>} : vector<1x64x16xbf16>, vector<1x64x16xbf16>, vector<1x64x64xf32> -> vector<1x64x64xf32>
    "tpu.trace_stop"() : () -> ()
    %cst_20 = arith.constant 2.500000e-01 : f32
    %51 = vector.broadcast %cst_20 : f32 to vector<1x64x64xf32>
    %52 = arith.mulf %50, %51 : vector<1x64x64xf32>
    %cst_21 = arith.constant dense<0xFF800000> : vector<1x64xf32>
    %53 = vector.multi_reduction <maximumf>, %52, %cst_21 [2] : vector<1x64x64xf32> to vector<1x64xf32>
    %54 = vector.shape_cast %53 : vector<1x64xf32> to vector<1x64x1xf32>
    %55 = vector.broadcast %54 : vector<1x64x1xf32> to vector<1x64x64xf32>
    %56 = arith.subf %52, %55 : vector<1x64x64xf32>
    %57 = math.exp %56 : vector<1x64x64xf32>
    %cst_22 = arith.constant dense<0.000000e+00> : vector<1x64xf32>
    %58 = vector.multi_reduction <add>, %57, %cst_22 [2] : vector<1x64x64xf32> to vector<1x64xf32>
    %59 = vector.shape_cast %58 : vector<1x64xf32> to vector<1x64x1xf32>
    %60 = tpu.reciprocal %59 {approx = true} : vector<1x64x1xf32> -> vector<1x64x1xf32>
    %61 = vector.broadcast %60 : vector<1x64x1xf32> to vector<1x64x64xf32>
    %62 = arith.mulf %57, %61 : vector<1x64x64xf32>
    %63 = arith.truncf %62 : vector<1x64x64xf32> to vector<1x64x64xbf16>
    "tpu.trace_start"() <{level = 10 : i32, message = "bqk,bkd->bqd"}> : () -> ()
    %cst_23 = arith.constant dense<0.000000e+00> : vector<1x64x16xf32>
    %64 = tpu.matmul %63, %49, %cst_23 {dimension_numbers = #tpu.dot_dimension_numbers<[2], [1], [1], [2], [0, 0, 0, 1, 1, 2], [0], [0]>} : vector<1x64x64xbf16>, vector<1x64x16xbf16>, vector<1x64x16xf32> -> vector<1x64x16xf32>
    "tpu.trace_stop"() : () -> ()
    %65 = vector.extract_strided_slice %46 {offsets = [0, 0, 16], sizes = [1, 64, 16], strides = [1, 1, 1]} : vector<1x64x192xbf16> to vector<1x64x16xbf16>
    %66 = vector.extract_strided_slice %46 {offsets = [0, 0, 80], sizes = [1, 64, 16], strides = [1, 1, 1]} : vector<1x64x192xbf16> to vector<1x64x16xbf16>
    %67 = vector.extract_strided_slice %46 {offsets = [0, 0, 144], sizes = [1, 64, 16], strides = [1, 1, 1]} : vector<1x64x192xbf16> to vector<1x64x16xbf16>
    "tpu.trace_start"() <{level = 10 : i32, message = "bqd,bkd->bqk"}> : () -> ()
    %cst_24 = arith.constant dense<0.000000e+00> : vector<1x64x64xf32>
    %68 = tpu.matmul %65, %66, %cst_24 {dimension_numbers = #tpu.dot_dimension_numbers<[2], [2], [1], [1], [0, 0, 0, 1, 1, 1], [0], [0]>} : vector<1x64x16xbf16>, vector<1x64x16xbf16>, vector<1x64x64xf32> -> vector<1x64x64xf32>
    "tpu.trace_stop"() : () -> ()
    %cst_25 = arith.constant 2.500000e-01 : f32
    %69 = vector.broadcast %cst_25 : f32 to vector<1x64x64xf32>
    %70 = arith.mulf %68, %69 : vector<1x64x64xf32>
    %cst_26 = arith.constant dense<0xFF800000> : vector<1x64xf32>
    %71 = vector.multi_reduction <maximumf>, %70, %cst_26 [2] : vector<1x64x64xf32> to vector<1x64xf32>
    %72 = vector.shape_cast %71 : vector<1x64xf32> to vector<1x64x1xf32>
    %73 = vector.broadcast %72 : vector<1x64x1xf32> to vector<1x64x64xf32>
    %74 = arith.subf %70, %73 : vector<1x64x64xf32>
    %75 = math.exp %74 : vector<1x64x64xf32>
    %cst_27 = arith.constant dense<0.000000e+00> : vector<1x64xf32>
    %76 = vector.multi_reduction <add>, %75, %cst_27 [2] : vector<1x64x64xf32> to vector<1x64xf32>
    %77 = vector.shape_cast %76 : vector<1x64xf32> to vector<1x64x1xf32>
    %78 = tpu.reciprocal %77 {approx = true} : vector<1x64x1xf32> -> vector<1x64x1xf32>
    %79 = vector.broadcast %78 : vector<1x64x1xf32> to vector<1x64x64xf32>
    %80 = arith.mulf %75, %79 : vector<1x64x64xf32>
    %81 = arith.truncf %80 : vector<1x64x64xf32> to vector<1x64x64xbf16>
    "tpu.trace_start"() <{level = 10 : i32, message = "bqk,bkd->bqd"}> : () -> ()
    %cst_28 = arith.constant dense<0.000000e+00> : vector<1x64x16xf32>
    %82 = tpu.matmul %81, %67, %cst_28 {dimension_numbers = #tpu.dot_dimension_numbers<[2], [1], [1], [2], [0, 0, 0, 1, 1, 2], [0], [0]>} : vector<1x64x64xbf16>, vector<1x64x16xbf16>, vector<1x64x16xf32> -> vector<1x64x16xf32>
    "tpu.trace_stop"() : () -> ()
    %83 = vector.extract_strided_slice %46 {offsets = [0, 0, 32], sizes = [1, 64, 16], strides = [1, 1, 1]} : vector<1x64x192xbf16> to vector<1x64x16xbf16>
    %84 = vector.extract_strided_slice %46 {offsets = [0, 0, 96], sizes = [1, 64, 16], strides = [1, 1, 1]} : vector<1x64x192xbf16> to vector<1x64x16xbf16>
    %85 = vector.extract_strided_slice %46 {offsets = [0, 0, 160], sizes = [1, 64, 16], strides = [1, 1, 1]} : vector<1x64x192xbf16> to vector<1x64x16xbf16>
    "tpu.trace_start"() <{level = 10 : i32, message = "bqd,bkd->bqk"}> : () -> ()
    %cst_29 = arith.constant dense<0.000000e+00> : vector<1x64x64xf32>
    %86 = tpu.matmul %83, %84, %cst_29 {dimension_numbers = #tpu.dot_dimension_numbers<[2], [2], [1], [1], [0, 0, 0, 1, 1, 1], [0], [0]>} : vector<1x64x16xbf16>, vector<1x64x16xbf16>, vector<1x64x64xf32> -> vector<1x64x64xf32>
    "tpu.trace_stop"() : () -> ()
    %cst_30 = arith.constant 2.500000e-01 : f32
    %87 = vector.broadcast %cst_30 : f32 to vector<1x64x64xf32>
    %88 = arith.mulf %86, %87 : vector<1x64x64xf32>
    %cst_31 = arith.constant dense<0xFF800000> : vector<1x64xf32>
    %89 = vector.multi_reduction <maximumf>, %88, %cst_31 [2] : vector<1x64x64xf32> to vector<1x64xf32>
    %90 = vector.shape_cast %89 : vector<1x64xf32> to vector<1x64x1xf32>
    %91 = vector.broadcast %90 : vector<1x64x1xf32> to vector<1x64x64xf32>
    %92 = arith.subf %88, %91 : vector<1x64x64xf32>
    %93 = math.exp %92 : vector<1x64x64xf32>
    %cst_32 = arith.constant dense<0.000000e+00> : vector<1x64xf32>
    %94 = vector.multi_reduction <add>, %93, %cst_32 [2] : vector<1x64x64xf32> to vector<1x64xf32>
    %95 = vector.shape_cast %94 : vector<1x64xf32> to vector<1x64x1xf32>
    %96 = tpu.reciprocal %95 {approx = true} : vector<1x64x1xf32> -> vector<1x64x1xf32>
    %97 = vector.broadcast %96 : vector<1x64x1xf32> to vector<1x64x64xf32>
    %98 = arith.mulf %93, %97 : vector<1x64x64xf32>
    %99 = arith.truncf %98 : vector<1x64x64xf32> to vector<1x64x64xbf16>
    "tpu.trace_start"() <{level = 10 : i32, message = "bqk,bkd->bqd"}> : () -> ()
    %cst_33 = arith.constant dense<0.000000e+00> : vector<1x64x16xf32>
    %100 = tpu.matmul %99, %85, %cst_33 {dimension_numbers = #tpu.dot_dimension_numbers<[2], [1], [1], [2], [0, 0, 0, 1, 1, 2], [0], [0]>} : vector<1x64x64xbf16>, vector<1x64x16xbf16>, vector<1x64x16xf32> -> vector<1x64x16xf32>
    "tpu.trace_stop"() : () -> ()
    %101 = vector.extract_strided_slice %46 {offsets = [0, 0, 48], sizes = [1, 64, 16], strides = [1, 1, 1]} : vector<1x64x192xbf16> to vector<1x64x16xbf16>
    %102 = vector.extract_strided_slice %46 {offsets = [0, 0, 112], sizes = [1, 64, 16], strides = [1, 1, 1]} : vector<1x64x192xbf16> to vector<1x64x16xbf16>
    %103 = vector.extract_strided_slice %46 {offsets = [0, 0, 176], sizes = [1, 64, 16], strides = [1, 1, 1]} : vector<1x64x192xbf16> to vector<1x64x16xbf16>
    "tpu.trace_start"() <{level = 10 : i32, message = "bqd,bkd->bqk"}> : () -> ()
    %cst_34 = arith.constant dense<0.000000e+00> : vector<1x64x64xf32>
    %104 = tpu.matmul %101, %102, %cst_34 {dimension_numbers = #tpu.dot_dimension_numbers<[2], [2], [1], [1], [0, 0, 0, 1, 1, 1], [0], [0]>} : vector<1x64x16xbf16>, vector<1x64x16xbf16>, vector<1x64x64xf32> -> vector<1x64x64xf32>
    "tpu.trace_stop"() : () -> ()
    %cst_35 = arith.constant 2.500000e-01 : f32
    %105 = vector.broadcast %cst_35 : f32 to vector<1x64x64xf32>
    %106 = arith.mulf %104, %105 : vector<1x64x64xf32>
    %cst_36 = arith.constant dense<0xFF800000> : vector<1x64xf32>
    %107 = vector.multi_reduction <maximumf>, %106, %cst_36 [2] : vector<1x64x64xf32> to vector<1x64xf32>
    %108 = vector.shape_cast %107 : vector<1x64xf32> to vector<1x64x1xf32>
    %109 = vector.broadcast %108 : vector<1x64x1xf32> to vector<1x64x64xf32>
    %110 = arith.subf %106, %109 : vector<1x64x64xf32>
    %111 = math.exp %110 : vector<1x64x64xf32>
    %cst_37 = arith.constant dense<0.000000e+00> : vector<1x64xf32>
    %112 = vector.multi_reduction <add>, %111, %cst_37 [2] : vector<1x64x64xf32> to vector<1x64xf32>
    %113 = vector.shape_cast %112 : vector<1x64xf32> to vector<1x64x1xf32>
    %114 = tpu.reciprocal %113 {approx = true} : vector<1x64x1xf32> -> vector<1x64x1xf32>
    %115 = vector.broadcast %114 : vector<1x64x1xf32> to vector<1x64x64xf32>
    %116 = arith.mulf %111, %115 : vector<1x64x64xf32>
    %117 = arith.truncf %116 : vector<1x64x64xf32> to vector<1x64x64xbf16>
    "tpu.trace_start"() <{level = 10 : i32, message = "bqk,bkd->bqd"}> : () -> ()
    %cst_38 = arith.constant dense<0.000000e+00> : vector<1x64x16xf32>
    %118 = tpu.matmul %117, %103, %cst_38 {dimension_numbers = #tpu.dot_dimension_numbers<[2], [1], [1], [2], [0, 0, 0, 1, 1, 2], [0], [0]>} : vector<1x64x64xbf16>, vector<1x64x16xbf16>, vector<1x64x16xf32> -> vector<1x64x16xf32>
    "tpu.trace_stop"() : () -> ()
    %119 = tpu.concatenate %64, %82, %100, %118 in 2 : vector<1x64x16xf32>, vector<1x64x16xf32>, vector<1x64x16xf32>, vector<1x64x16xf32> -> vector<1x64x64xf32>
    %120 = vector.shape_cast %119 : vector<1x64x64xf32> to vector<64x64xf32>
    %121 = arith.truncf %120 : vector<64x64xf32> to vector<64x64xbf16>
    %c0_39 = arith.constant 0 : index
    %c0_40 = arith.constant 0 : index
    %c0_41 = arith.constant 0 : index
    %122 = vector.load %arg9[%c0_39, %c0_40, %c0_41] : memref<1x64x64xbf16, #tpu.memory_space<vmem>>, vector<1x64x64xbf16>
    %123 = vector.shape_cast %122 : vector<1x64x64xbf16> to vector<64x64xbf16>
    %cst_42 = arith.constant dense<0.000000e+00> : vector<64x64xf32>
    %124 = tpu.matmul %121, %123, %cst_42 {dimension_numbers = #tpu.dot_dimension_numbers<[1], [0], [0], [1], [0, 0, 1, 1], [], []>} : vector<64x64xbf16>, vector<64x64xbf16>, vector<64x64xf32> -> vector<64x64xf32>
    %c0_43 = arith.constant 0 : index
    %c0_44 = arith.constant 0 : index
    %c0_45 = arith.constant 0 : index
    %125 = vector.load %arg10[%c0_43, %c0_44, %c0_45] : memref<1x1x64xf32, #tpu.memory_space<vmem>>, vector<1x1x64xf32>
    %126 = vector.shape_cast %125 : vector<1x1x64xf32> to vector<1x64xf32>
    %127 = vector.broadcast %126 : vector<1x64xf32> to vector<64x64xf32>
    %128 = arith.addf %124, %127 : vector<64x64xf32>
    %129 = vector.shape_cast %128 : vector<64x64xf32> to vector<1x64x64xf32>
    %130 = vector.broadcast %8 : vector<1x1x64xf32> to vector<1x64x64xf32>
    %131 = arith.mulf %130, %129 : vector<1x64x64xf32>
    %132 = arith.addf %3, %131 : vector<1x64x64xf32>
    %cst_46 = arith.constant dense<0.000000e+00> : vector<1x64xf32>
    %133 = vector.multi_reduction <add>, %132, %cst_46 [2] : vector<1x64x64xf32> to vector<1x64xf32>
    %134 = vector.shape_cast %133 : vector<1x64xf32> to vector<1x64x1xf32>
    %cst_47 = arith.constant 6.400000e+01 : f32
    %135 = vector.broadcast %cst_47 : f32 to vector<1x64x1xf32>
    %136 = arith.divf %134, %135 : vector<1x64x1xf32>
    %137 = vector.broadcast %136 : vector<1x64x1xf32> to vector<1x64x64xf32>
    %138 = arith.subf %132, %137 : vector<1x64x64xf32>
    %139 = arith.mulf %138, %138 : vector<1x64x64xf32>
    %cst_48 = arith.constant dense<0.000000e+00> : vector<1x64xf32>
    %140 = vector.multi_reduction <add>, %139, %cst_48 [2] : vector<1x64x64xf32> to vector<1x64xf32>
    %141 = vector.shape_cast %140 : vector<1x64xf32> to vector<1x64x1xf32>
    %cst_49 = arith.constant 6.400000e+01 : f32
    %142 = vector.broadcast %cst_49 : f32 to vector<1x64x1xf32>
    %143 = arith.divf %141, %142 : vector<1x64x1xf32>
    %144 = vector.broadcast %136 : vector<1x64x1xf32> to vector<1x64x64xf32>
    %145 = arith.subf %132, %144 : vector<1x64x64xf32>
    %cst_50 = arith.constant 9.99999997E-7 : f32
    %146 = vector.broadcast %cst_50 : f32 to vector<1x64x1xf32>
    %147 = arith.addf %143, %146 : vector<1x64x1xf32>
    %148 = math.rsqrt %147 : vector<1x64x1xf32>
    %149 = vector.broadcast %148 : vector<1x64x1xf32> to vector<1x64x64xf32>
    %150 = arith.mulf %145, %149 : vector<1x64x64xf32>
    %cst_51 = arith.constant 1.000000e+00 : f32
    %151 = vector.broadcast %cst_51 : f32 to vector<1x1x64xf32>
    %152 = arith.addf %151, %10 : vector<1x1x64xf32>
    %153 = vector.broadcast %152 : vector<1x1x64xf32> to vector<1x64x64xf32>
    %154 = arith.mulf %150, %153 : vector<1x64x64xf32>
    %155 = vector.broadcast %9 : vector<1x1x64xf32> to vector<1x64x64xf32>
    %156 = arith.addf %154, %155 : vector<1x64x64xf32>
    %157 = vector.shape_cast %156 : vector<1x64x64xf32> to vector<64x64xf32>
    %158 = arith.truncf %157 : vector<64x64xf32> to vector<64x64xbf16>
    %c0_52 = arith.constant 0 : index
    %c0_53 = arith.constant 0 : index
    %c0_54 = arith.constant 0 : index
    %159 = vector.load %arg11[%c0_52, %c0_53, %c0_54] : memref<1x64x256xbf16, #tpu.memory_space<vmem>>, vector<1x64x256xbf16>
    %160 = vector.shape_cast %159 : vector<1x64x256xbf16> to vector<64x256xbf16>
    %cst_55 = arith.constant dense<0.000000e+00> : vector<64x256xf32>
    %161 = tpu.matmul %158, %160, %cst_55 {dimension_numbers = #tpu.dot_dimension_numbers<[1], [0], [0], [1], [0, 0, 1, 1], [], []>} : vector<64x64xbf16>, vector<64x256xbf16>, vector<64x256xf32> -> vector<64x256xf32>
    %c0_56 = arith.constant 0 : index
    %c0_57 = arith.constant 0 : index
    %c0_58 = arith.constant 0 : index
    %162 = vector.load %arg12[%c0_56, %c0_57, %c0_58] : memref<1x1x256xf32, #tpu.memory_space<vmem>>, vector<1x1x256xf32>
    %163 = vector.shape_cast %162 : vector<1x1x256xf32> to vector<1x256xf32>
    %164 = vector.broadcast %163 : vector<1x256xf32> to vector<64x256xf32>
    %165 = arith.addf %161, %164 : vector<64x256xf32>
    %cst_59 = arith.constant 5.000000e-01 : f32
    %166 = vector.broadcast %cst_59 : f32 to vector<64x256xf32>
    %167 = arith.mulf %166, %165 : vector<64x256xf32>
    %168 = arith.mulf %165, %165 : vector<64x256xf32>
    %169 = arith.mulf %165, %168 : vector<64x256xf32>
    %cst_60 = arith.constant 4.471500e-02 : f32
    %170 = vector.broadcast %cst_60 : f32 to vector<64x256xf32>
    %171 = arith.mulf %170, %169 : vector<64x256xf32>
    %172 = arith.addf %165, %171 : vector<64x256xf32>
    %cst_61 = arith.constant 0.797884583 : f32
    %173 = vector.broadcast %cst_61 : f32 to vector<64x256xf32>
    %174 = arith.mulf %173, %172 : vector<64x256xf32>
    %175 = math.tanh %174 : vector<64x256xf32>
    %cst_62 = arith.constant 1.000000e+00 : f32
    %176 = vector.broadcast %cst_62 : f32 to vector<64x256xf32>
    %177 = arith.addf %176, %175 : vector<64x256xf32>
    %178 = arith.mulf %167, %177 : vector<64x256xf32>
    %179 = arith.truncf %178 : vector<64x256xf32> to vector<64x256xbf16>
    %c0_63 = arith.constant 0 : index
    %c0_64 = arith.constant 0 : index
    %c0_65 = arith.constant 0 : index
    %180 = vector.load %arg13[%c0_63, %c0_64, %c0_65] : memref<1x256x64xbf16, #tpu.memory_space<vmem>>, vector<1x256x64xbf16>
    %181 = vector.shape_cast %180 : vector<1x256x64xbf16> to vector<256x64xbf16>
    %cst_66 = arith.constant dense<0.000000e+00> : vector<64x64xf32>
    %182 = tpu.matmul %179, %181, %cst_66 {dimension_numbers = #tpu.dot_dimension_numbers<[1], [0], [0], [1], [0, 0, 1, 1], [], []>} : vector<64x256xbf16>, vector<256x64xbf16>, vector<64x64xf32> -> vector<64x64xf32>
    %c0_67 = arith.constant 0 : index
    %c0_68 = arith.constant 0 : index
    %c0_69 = arith.constant 0 : index
    %183 = vector.load %arg14[%c0_67, %c0_68, %c0_69] : memref<1x1x64xf32, #tpu.memory_space<vmem>>, vector<1x1x64xf32>
    %184 = vector.shape_cast %183 : vector<1x1x64xf32> to vector<1x64xf32>
    %185 = vector.broadcast %184 : vector<1x64xf32> to vector<64x64xf32>
    %186 = arith.addf %182, %185 : vector<64x64xf32>
    %187 = vector.shape_cast %186 : vector<64x64xf32> to vector<1x64x64xf32>
    %188 = vector.broadcast %11 : vector<1x1x64xf32> to vector<1x64x64xf32>
    %189 = arith.mulf %188, %187 : vector<1x64x64xf32>
    %190 = arith.addf %132, %189 : vector<1x64x64xf32>
    %c0_70 = arith.constant 0 : index
    %c0_71 = arith.constant 0 : index
    %c0_72 = arith.constant 0 : index
    %191 = vector.load %arg19[%c0_70, %c0_71, %c0_72] : memref<1x64x64xf32, #tpu.memory_space<vmem>>, vector<1x64x64xf32>
    tpu.vector_store %arg19[%c0_70, %c0_71, %c0_72], %190 {strides = array<i32>} : memref<1x64x64xf32, #tpu.memory_space<vmem>>, vector<1x64x64xf32>,
    %c1_i32 = arith.constant 1 : i32
    %192 = arith.cmpi eq, %arg1, %c1_i32 : i32
    %193 = arith.extui %192 : i1 to i32
    %c0_i32_73 = arith.constant 0 : i32
    %194 = arith.cmpi ne, %193, %c0_i32_73 : i32
    scf.if %194 {
      %c0_74 = arith.constant 0 : index
      %c0_75 = arith.constant 0 : index
      %c0_76 = arith.constant 0 : index
      %195 = vector.load %arg15[%c0_74, %c0_75, %c0_76] : memref<1x2x64xf32, #tpu.memory_space<vmem>>, vector<1x2x64xf32>
      %cst_77 = arith.constant dense<0.000000e+00> : vector<1x64xf32>
      %196 = vector.multi_reduction <add>, %190, %cst_77 [2] : vector<1x64x64xf32> to vector<1x64xf32>
      %197 = vector.shape_cast %196 : vector<1x64xf32> to vector<1x64x1xf32>
      %cst_78 = arith.constant 6.400000e+01 : f32
      %198 = vector.broadcast %cst_78 : f32 to vector<1x64x1xf32>
      %199 = arith.divf %197, %198 : vector<1x64x1xf32>
      %200 = vector.broadcast %199 : vector<1x64x1xf32> to vector<1x64x64xf32>
      %201 = arith.subf %190, %200 : vector<1x64x64xf32>
      %202 = arith.mulf %201, %201 : vector<1x64x64xf32>
      %cst_79 = arith.constant dense<0.000000e+00> : vector<1x64xf32>
      %203 = vector.multi_reduction <add>, %202, %cst_79 [2] : vector<1x64x64xf32> to vector<1x64xf32>
      %204 = vector.shape_cast %203 : vector<1x64xf32> to vector<1x64x1xf32>
      %cst_80 = arith.constant 6.400000e+01 : f32
      %205 = vector.broadcast %cst_80 : f32 to vector<1x64x1xf32>
      %206 = arith.divf %204, %205 : vector<1x64x1xf32>
      %207 = vector.broadcast %199 : vector<1x64x1xf32> to vector<1x64x64xf32>
      %208 = arith.subf %190, %207 : vector<1x64x64xf32>
      %cst_81 = arith.constant 9.99999997E-7 : f32
      %209 = vector.broadcast %cst_81 : f32 to vector<1x64x1xf32>
      %210 = arith.addf %206, %209 : vector<1x64x1xf32>
      %211 = math.rsqrt %210 : vector<1x64x1xf32>
      %212 = vector.broadcast %211 : vector<1x64x1xf32> to vector<1x64x64xf32>
      %213 = arith.mulf %208, %212 : vector<1x64x64xf32>
      %214 = vector.extract_strided_slice %195 {offsets = [0, 1, 0], sizes = [1, 1, 64], strides = [1, 1, 1]} : vector<1x2x64xf32> to vector<1x1x64xf32>
      %cst_82 = arith.constant 1.000000e+00 : f32
      %215 = vector.broadcast %cst_82 : f32 to vector<1x1x64xf32>
      %216 = arith.addf %215, %214 : vector<1x1x64xf32>
      %217 = vector.broadcast %216 : vector<1x1x64xf32> to vector<1x64x64xf32>
      %218 = arith.mulf %213, %217 : vector<1x64x64xf32>
      %219 = vector.extract_strided_slice %195 {offsets = [0, 0, 0], sizes = [1, 1, 64], strides = [1, 1, 1]} : vector<1x2x64xf32> to vector<1x1x64xf32>
      %220 = vector.broadcast %219 : vector<1x1x64xf32> to vector<1x64x64xf32>
      %221 = arith.addf %218, %220 : vector<1x64x64xf32>
      %222 = vector.shape_cast %221 : vector<1x64x64xf32> to vector<64x64xf32>
      %223 = arith.truncf %222 : vector<64x64xf32> to vector<64x64xbf16>
      %c0_83 = arith.constant 0 : index
      %c0_84 = arith.constant 0 : index
      %224 = vector.load %arg16[%c0_83, %c0_84] : memref<64x128xbf16, #tpu.memory_space<vmem>>, vector<64x128xbf16>
      %cst_85 = arith.constant dense<0.000000e+00> : vector<64x128xf32>
      %225 = tpu.matmul %223, %224, %cst_85 {dimension_numbers = #tpu.dot_dimension_numbers<[1], [0], [0], [1], [0, 0, 1, 1], [], []>} : vector<64x64xbf16>, vector<64x128xbf16>, vector<64x128xf32> -> vector<64x128xf32>
      %c0_86 = arith.constant 0 : index
      %c0_87 = arith.constant 0 : index
      %226 = vector.load %arg17[%c0_86, %c0_87] : memref<1x128xf32, #tpu.memory_space<vmem>>, vector<1x128xf32>
      %227 = vector.broadcast %226 : vector<1x128xf32> to vector<64x128xf32>
      %228 = arith.addf %225, %227 : vector<64x128xf32>
      %229 = vector.shape_cast %228 : vector<64x128xf32> to vector<1x64x128xf32>
      %c0_88 = arith.constant 0 : index
      %c0_89 = arith.constant 0 : index
      %c0_90 = arith.constant 0 : index
      %230 = vector.load %arg18[%c0_88, %c0_89, %c0_90] : memref<1x64x128xf32, #tpu.memory_space<vmem>>, vector<1x64x128xf32>
      tpu.vector_store %arg18[%c0_88, %c0_89, %c0_90], %229 {strides = array<i32>} : memref<1x64x128xf32, #tpu.memory_space<vmem>>, vector<1x64x128xf32>,
    } else {
    }
    return
  }
  func.func @transform_0(%arg0: i32, %arg1: i32) -> (i32, i32, i32) {
    %c0_i32 = arith.constant 0 : i32
    %c0_i32_0 = arith.constant 0 : i32
    %c0_i32_1 = arith.constant 0 : i32
    return %arg0, %c0_i32, %c0_i32_0 : i32, i32, i32
  }
  func.func @transform_1(%arg0: i32, %arg1: i32) -> (i32, i32) {
    %c0_i32 = arith.constant 0 : i32
    %c0_i32_0 = arith.constant 0 : i32
    %c0_i32_1 = arith.constant 0 : i32
    return %c0_i32, %c0_i32_0 : i32, i32
  }
  func.func @transform_2(%arg0: i32, %arg1: i32) -> (i32, i32) {
    %c0_i32 = arith.constant 0 : i32
    %c0_i32_0 = arith.constant 0 : i32
    %c0_i32_1 = arith.constant 0 : i32
    return %c0_i32, %c0_i32_0 : i32, i32
  }
  func.func @transform_3(%arg0: i32, %arg1: i32) -> (i32, i32) {
    %c0_i32 = arith.constant 0 : i32
    %c0_i32_0 = arith.constant 0 : i32
    %c0_i32_1 = arith.constant 0 : i32
    return %c0_i32, %c0_i32_0 : i32, i32
  }
  func.func @transform_4(%arg0: i32, %arg1: i32) -> (i32, i32, i32, i32) {
    %c0_i32 = arith.constant 0 : i32
    %c0_i32_0 = arith.constant 0 : i32
    %c0_i32_1 = arith.constant 0 : i32
    return %arg0, %arg1, %c0_i32, %c0_i32_0 : i32, i32, i32, i32
  }
  func.func @transform_5(%arg0: i32, %arg1: i32) -> (i32, i32, i32) {
    %c0_i32 = arith.constant 0 : i32
    %c0_i32_0 = arith.constant 0 : i32
    %c0_i32_1 = arith.constant 0 : i32
    return %arg1, %c0_i32, %c0_i32_0 : i32, i32, i32
  }
  func.func @transform_6(%arg0: i32, %arg1: i32) -> (i32, i32, i32) {
    %c0_i32 = arith.constant 0 : i32
    %c0_i32_0 = arith.constant 0 : i32
    %c0_i32_1 = arith.constant 0 : i32
    return %arg1, %c0_i32, %c0_i32_0 : i32, i32, i32
  }
  func.func @transform_7(%arg0: i32, %arg1: i32) -> (i32, i32, i32) {
    %c0_i32 = arith.constant 0 : i32
    %c0_i32_0 = arith.constant 0 : i32
    %c0_i32_1 = arith.constant 0 : i32
    return %arg1, %c0_i32, %c0_i32_0 : i32, i32, i32
  }
  func.func @transform_8(%arg0: i32, %arg1: i32) -> (i32, i32, i32) {
    %c0_i32 = arith.constant 0 : i32
    %c0_i32_0 = arith.constant 0 : i32
    %c0_i32_1 = arith.constant 0 : i32
    return %arg1, %c0_i32, %c0_i32_0 : i32, i32, i32
  }
  func.func @transform_9(%arg0: i32, %arg1: i32) -> (i32, i32, i32) {
    %c0_i32 = arith.constant 0 : i32
    %c0_i32_0 = arith.constant 0 : i32
    %c0_i32_1 = arith.constant 0 : i32
    return %arg1, %c0_i32, %c0_i32_0 : i32, i32, i32
  }
  func.func @transform_10(%arg0: i32, %arg1: i32) -> (i32, i32, i32) {
    %c0_i32 = arith.constant 0 : i32
    %c0_i32_0 = arith.constant 0 : i32
    %c0_i32_1 = arith.constant 0 : i32
    return %arg1, %c0_i32, %c0_i32_0 : i32, i32, i32
  }
  func.func @transform_11(%arg0: i32, %arg1: i32) -> (i32, i32, i32) {
    %c0_i32 = arith.constant 0 : i32
    %c0_i32_0 = arith.constant 0 : i32
    %c0_i32_1 = arith.constant 0 : i32
    return %arg1, %c0_i32, %c0_i32_0 : i32, i32, i32
  }
  func.func @transform_12(%arg0: i32, %arg1: i32) -> (i32, i32, i32) {
    %c0_i32 = arith.constant 0 : i32
    %c0_i32_0 = arith.constant 0 : i32
    %c0_i32_1 = arith.constant 0 : i32
    return %arg1, %c0_i32, %c0_i32_0 : i32, i32, i32
  }
  func.func @transform_13(%arg0: i32, %arg1: i32) -> (i32, i32, i32) {
    %c0_i32 = arith.constant 0 : i32
    %c0_i32_0 = arith.constant 0 : i32
    %c0_i32_1 = arith.constant 0 : i32
    return %arg0, %c0_i32, %c0_i32_0 : i32, i32, i32
  }
  func.func @transform_14(%arg0: i32, %arg1: i32) -> (i32, i32) {
    %c0_i32 = arith.constant 0 : i32
    %c0_i32_0 = arith.constant 0 : i32
    %c0_i32_1 = arith.constant 0 : i32
    return %c0_i32, %c0_i32_0 : i32, i32
  }
  func.func @transform_15(%arg0: i32, %arg1: i32) -> (i32, i32) {
    %c0_i32 = arith.constant 0 : i32
    %c0_i32_0 = arith.constant 0 : i32
    %c0_i32_1 = arith.constant 0 : i32
    return %c0_i32, %c0_i32_0 : i32, i32
  }
  func.func @transform_16(%arg0: i32, %arg1: i32) -> (i32, i32, i32) {
    %c0_i32 = arith.constant 0 : i32
    %c0_i32_0 = arith.constant 0 : i32
    %c0_i32_1 = arith.constant 0 : i32
    return %arg0, %c0_i32, %c0_i32_0 : i32, i32, i32
  }
}

</mosaic_0001>

<llo_original>
// kernel: _lambda_.2
$region0: #{_lambda_.2}
  #allocation0 [shape = 'u32[]', space=smem, size = 0x4, offset = 0x4, fixed_abs, tag = 'smem constant byte address 0x4 - core index']
  #allocation1 [shape = 'u32[144,128]{1,0:T(1,128)}', space=vmem, size = 0x12000, scoped, tag = 'internal scratch']
  %s0 = inlined_call_operand.vmem [shape: f32[2,256], index: 0, kind: input, shape index: {}]
  %s1 = inlined_call_operand.vmem [shape: f32[2,64], index: 1, kind: input, shape index: {}]
  %s2 = inlined_call_operand.hbm [shape: f32[256,64], index: 2, kind: input, shape index: {}]
  %s3 = inlined_call_operand.vmem [shape: f32[1,64], index: 3, kind: input, shape index: {}]
  %s4 = inlined_call_operand.vmem [shape: f32[64,64], index: 4, kind: input, shape index: {}]
  %s5 = inlined_call_operand.vmem [shape: f32[1,64], index: 5, kind: input, shape index: {}]
  %s6 = inlined_call_operand.hbm [shape: f32[64,896], index: 6, kind: input, shape index: {}]
  %s7 = inlined_call_operand.vmem [shape: f32[1,896], index: 7, kind: input, shape index: {}]
  %s8 = inlined_call_operand.vmem [shape: f32[2,896], index: 8, kind: output, shape index: {}]
  %s9 = sld [smem:[#allocation0]]
  $region50: #{_lambda_.2} parent=0
    _
  %s11 = ssub.s32 1, %s9
  %s12 = scalar_select 0, %s11, %s9
  $region1: #{_lambda_.2} parent=0
    #allocation2 [shape = 'u8[131072]{0}', space=vmem, size = 0x20000, scoped, tag = 'input window, operand 2, single buffered']
    #allocation3 [shape = 's32[1]{0}', space=sflag, size = 0x4, scoped, tag = 'scoped memory for _lambda_.2']
    #allocation4 [shape = 'u8[229376]{0}', space=vmem, size = 0x38000, scoped, tag = 'input window, operand 6, single buffered']
    #allocation5 [shape = 's32[1]{0}', space=sflag, size = 0x4, scoped, tag = 'scoped memory for _lambda_.2']
    %13 = vsyncpa [#allocation3], 0
    %14 = vsyncpa [#allocation5], 0
    // Predicated region
    $region2: #{_lambda_.2} parent=1 // pred_check
      _
    $region3: #{_lambda_.2} parent=1 // pred_check_branch
      %16 = sbr.rel (0) target = $region5
    $region4: #{_lambda_.2} parent=1 // pred_region
      _
    $region5: #{_lambda_.2} parent=1 // pred_fallthru
      _
    // Predicated region
    $region6: #{_lambda_.2} parent=1 // pred_check
      _
    $region7: #{_lambda_.2} parent=1 // pred_check_branch
      %18 = sbr.rel (0) target = $region9
    $region8: #{_lambda_.2} parent=1 // pred_region
      _
    $region9: #{_lambda_.2} parent=1 // pred_fallthru
      _
    // Predicated region
    $region10: #{_lambda_.2} parent=1 // pred_check
      _
    $region11: #{_lambda_.2} parent=1 // pred_check_branch
      %20 = sbr.rel (0) target = $region13
    $region12: #{_lambda_.2} parent=1 // pred_region
      %s22 = ssub.s32 4096, 4096
      %23 = vsyncadd [#allocation3], %s22
      %s24 = sshll.u32 [#allocation2], 4
      %s25 = int_to_ptr.vmem [resolvable:$true] %s24
      %30 = dma.hbm_to_vmem [thread:$0]  %s2, 4096, %s25, [#allocation3], 128, 128, 8
    $region13: #{_lambda_.2} parent=1 // pred_fallthru
      _
    // Predicated region
    $region14: #{_lambda_.2} parent=1 // pred_check
      _
    $region15: #{_lambda_.2} parent=1 // pred_check_branch
      %32 = sbr.rel (0) target = $region17
    $region16: #{_lambda_.2} parent=1 // pred_region
      _
    $region17: #{_lambda_.2} parent=1 // pred_fallthru
      _
    // Predicated region
    $region18: #{_lambda_.2} parent=1 // pred_check
      _
    $region19: #{_lambda_.2} parent=1 // pred_check_branch
      %34 = sbr.rel (0) target = $region21
    $region20: #{_lambda_.2} parent=1 // pred_region
      _
    $region21: #{_lambda_.2} parent=1 // pred_fallthru
      _
    // Predicated region
    $region22: #{_lambda_.2} parent=1 // pred_check
      _
    $region23: #{_lambda_.2} parent=1 // pred_check_branch
      %36 = sbr.rel (0) target = $region25
    $region24: #{_lambda_.2} parent=1 // pred_region
      _
    $region25: #{_lambda_.2} parent=1 // pred_fallthru
      _
    // Predicated region
    $region26: #{_lambda_.2} parent=1 // pred_check
      _
    $region27: #{_lambda_.2} parent=1 // pred_check_branch
      %38 = sbr.rel (0) target = $region29
    $region28: #{_lambda_.2} parent=1 // pred_region
      %s40 = ssub.s32 7168, 7168
      %41 = vsyncadd [#allocation5], %s40
      %s42 = sshll.u32 [#allocation4], 4
      %s43 = int_to_ptr.vmem [resolvable:$true] %s42
      %48 = dma.hbm_to_vmem [thread:$0]  %s6, 7168, %s43, [#allocation5], 896, 896, 56
    $region29: #{_lambda_.2} parent=1 // pred_fallthru
      _
    // Predicated region
    $region30: #{_lambda_.2} parent=1 // pred_check
      _
    $region31: #{_lambda_.2} parent=1 // pred_check_branch
      %50 = sbr.rel (0) target = $region33
    $region32: #{_lambda_.2} parent=1 // pred_region
      _
    $region33: #{_lambda_.2} parent=1 // pred_fallthru
      _
    // Predicated region
    $region34: #{_lambda_.2} parent=1 // pred_check
      _
    $region35: #{_lambda_.2} parent=1 // pred_check_branch
      %52 = sbr.rel (0) target = $region37
    $region36: #{_lambda_.2} parent=1 // pred_region
      %53 = dma.done [#allocation3], 4096
    $region37: #{_lambda_.2} parent=1 // pred_fallthru
      _
    // Predicated region
    $region38: #{_lambda_.2} parent=1 // pred_check
      _
    $region39: #{_lambda_.2} parent=1 // pred_check_branch
      %55 = sbr.rel (0) target = $region41
    $region40: #{_lambda_.2} parent=1 // pred_region
      %56 = dma.done [#allocation5], 7168
    $region41: #{_lambda_.2} parent=1 // pred_fallthru
      _
    %v57 = vld [vmem:[%s0] sm:$0xf]
    %v58 = vld [vmem:[#allocation2] sm:$0xff]
    %v59 = vld [vmem:[#allocation2 + $0x8] sm:$0xff]
    %v60 = vld [vmem:[#allocation2 + $0x10] sm:$0xff]
    %v61 = vld [vmem:[#allocation2 + $0x18] sm:$0xff]
    %v62 = vld [vmem:[#allocation2 + $0x20] sm:$0xff]
    %v63 = vld [vmem:[#allocation2 + $0x28] sm:$0xff]
    %v64 = vld [vmem:[#allocation2 + $0x30] sm:$0xff]
    %v65 = vld [vmem:[#allocation2 + $0x38] sm:$0xff]
    %v66 = vld [vmem:[#allocation2 + $0x40] sm:$0xff]
    %v67 = vld [vmem:[#allocation2 + $0x48] sm:$0xff]
    %v68 = vld [vmem:[#allocation2 + $0x50] sm:$0xff]
    %v69 = vld [vmem:[#allocation2 + $0x58] sm:$0xff]
    %v70 = vld [vmem:[#allocation2 + $0x60] sm:$0xff]
    %v71 = vld [vmem:[#allocation2 + $0x68] sm:$0xff]
    %v72 = vld [vmem:[#allocation2 + $0x70] sm:$0xff]
    %v73 = vld [vmem:[#allocation2 + $0x78] sm:$0xff]
    %v74 = vld [vmem:[#allocation2 + $0x80] sm:$0xff]
    %v75 = vld [vmem:[#allocation2 + $0x88] sm:$0xff]
    %v76 = vld [vmem:[#allocation2 + $0x90] sm:$0xff]
    %v77 = vld [vmem:[#allocation2 + $0x98] sm:$0xff]
    %v78 = vld [vmem:[#allocation2 + $0xa0] sm:$0xff]
    %v79 = vld [vmem:[#allocation2 + $0xa8] sm:$0xff]
    %v80 = vld [vmem:[#allocation2 + $0xb0] sm:$0xff]
    %v81 = vld [vmem:[#allocation2 + $0xb8] sm:$0xff]
    %v82 = vld [vmem:[#allocation2 + $0xc0] sm:$0xff]
    %v83 = vld [vmem:[#allocation2 + $0xc8] sm:$0xff]
    %v84 = vld [vmem:[#allocation2 + $0xd0] sm:$0xff]
    %v85 = vld [vmem:[#allocation2 + $0xd8] sm:$0xff]
    %v86 = vld [vmem:[#allocation2 + $0xe0] sm:$0xff]
    %v87 = vld [vmem:[#allocation2 + $0xe8] sm:$0xff]
    %v88 = vld [vmem:[#allocation2 + $0xf0] sm:$0xff]
    %v89 = vld [vmem:[#allocation2 + $0xf8] sm:$0xff]
    %v90 = vld [vmem:[%s3] sm:$0x1]
    %v92 = vlaneseq
    %v93 = vshrl.u32 %v92, 7
    %v94 = vsub.s32 0, %v93
    %v95 = vrot.slane %v90, %v94
    %v99 = vunpack.c.l.s4 1983009808
    %v100 = vunpack.c.0.s8 %v99
    %v101 = vlaneseq
    %v102 = vshrl.u32 %v101, 7
    %v103 = vsub.s32 %v100, %v102
    %v104 = vrot.slane %v57, %v103
    %v105 = vcombine.high %v104, %v104
    %108 = vmatprep.subr.mxu0 0.0
    %109 = vmatpush1.msra.mxu0 %v58
    %110 = vmatprep.subr.mxu0 0.0
    %111 = vmatpush1.msra.mxu0 %v59
    %112 = vmatprep.subr.mxu0 0.0
    %113 = vmatpush1.msra.mxu0 %v60
    %114 = vmatprep.subr.mxu0 0.0
    %115 = vmatpush1.msra.mxu0 %v61
    %116 = vmatprep.subr.mxu0 0.0
    %117 = vmatpush1.msra.mxu0 %v62
    %118 = vmatprep.subr.mxu0 0.0
    %119 = vmatpush1.msra.mxu0 %v63
    %120 = vmatprep.subr.mxu0 0.0
    %121 = vmatpush1.msra.mxu0 %v64
    %122 = vmatprep.subr.mxu0 0.0
    %123 = vmatpush1.msra.mxu0 %v65
    %124 = vmatprep.subr.mxu0 0.0
    %125 = vmatpush1.msra.mxu0 %v66
    %126 = vmatprep.subr.mxu0 0.0
    %127 = vmatpush1.msra.mxu0 %v67
    %128 = vmatprep.subr.mxu0 0.0
    %129 = vmatpush1.msra.mxu0 %v68
    %130 = vmatprep.subr.mxu0 0.0
    %131 = vmatpush1.msra.mxu0 %v69
    %132 = vmatprep.subr.mxu0 0.0
    %133 = vmatpush1.msra.mxu0 %v70
    %134 = vmatprep.subr.mxu0 0.0
    %135 = vmatpush1.msra.mxu0 %v71
    %136 = vmatprep.subr.mxu0 0.0
    %137 = vmatpush1.msra.mxu0 %v72
    %138 = vmatprep.subr.mxu0 0.0
    %139 = vmatpush1.msra.mxu0 %v73
    %140 = vmatprep.subr.mxu0 0.0
    %141 = vmatpush1.msra.mxu0 %v74
    %142 = vmatprep.subr.mxu0 0.0
    %143 = vmatpush1.msra.mxu0 %v75
    %144 = vmatprep.subr.mxu0 0.0
    %145 = vmatpush1.msra.mxu0 %v76
    %146 = vmatprep.subr.mxu0 0.0
    %147 = vmatpush1.msra.mxu0 %v77
    %148 = vmatprep.subr.mxu0 0.0
    %149 = vmatpush1.msra.mxu0 %v78
    %150 = vmatprep.subr.mxu0 0.0
    %151 = vmatpush1.msra.mxu0 %v79
    %152 = vmatprep.subr.mxu0 0.0
    %153 = vmatpush1.msra.mxu0 %v80
    %154 = vmatprep.subr.mxu0 0.0
    %155 = vmatpush1.msra.mxu0 %v81
    %156 = vmatprep.subr.mxu0 0.0
    %157 = vmatpush1.msra.mxu0 %v82
    %158 = vmatprep.subr.mxu0 0.0
    %159 = vmatpush1.msra.mxu0 %v83
    %160 = vmatprep.subr.mxu0 0.0
    %161 = vmatpush1.msra.mxu0 %v84
    %162 = vmatprep.subr.mxu0 0.0
    %163 = vmatpush1.msra.mxu0 %v85
    %164 = vmatprep.subr.mxu0 0.0
    %165 = vmatpush1.msra.mxu0 %v86
    %166 = vmatprep.subr.mxu0 0.0
    %167 = vmatpush1.msra.mxu0 %v87
    %168 = vmatprep.subr.mxu0 0.0
    %169 = vmatpush1.msra.mxu0 %v88
    %170 = vmatprep.subr.mxu0 0.0
    %171 = vmatpush1.msra.mxu0 %v89
    %172 = vmatprep.mubr.f32.mxu0 %v105
    %173 = vmatmul.mubr.f32.gmra.mrb[0].mxu0 %v104
    %v174 = vpop.f32.mrb[0].mxu0
    %v175 = vadd.f32 %v95, %v174
    %v176 = vpop.f32.mrb[0].mxu0
    %177 = vdwg.mxu0
    %v178 = vxor.u32 %v175, 2147483648
    %v179 = vmul.f32 %v178, 1.442695
    %v180 = vpow.pop %v179
    %v181 = vadd.f32 %v180, 1.0
    %v182 = vrcp.pop %v181
    %v183 = vmul.f32 1.0, %v182
    %v184 = vmul.f32 %v175, %v183
    %v185 = vld [vmem:[%s4] sm:$0xff]
    %v186 = vld [vmem:[%s4 + $0x8] sm:$0xff]
    %v187 = vld [vmem:[%s4 + $0x10] sm:$0xff]
    %v188 = vld [vmem:[%s4 + $0x18] sm:$0xff]
    %v189 = vld [vmem:[%s4 + $0x20] sm:$0xff]
    %v190 = vld [vmem:[%s4 + $0x28] sm:$0xff]
    %v191 = vld [vmem:[%s4 + $0x30] sm:$0xff]
    %v192 = vld [vmem:[%s4 + $0x38] sm:$0xff]
    %v193 = vld [vmem:[%s5] sm:$0x1]
    %v195 = vlaneseq
    %v196 = vshrl.u32 %v195, 7
    %v197 = vsub.s32 0, %v196
    %v198 = vrot.slane %v193, %v197
    %vm200 = vcmask 523264
    %v202 = vsel %vm200, %v184, 0
    %204 = vmatprep.subr.mxu0 0.0
    %205 = vmatpush1.msra.mxu0 %v185
    %206 = vmatprep.subr.mxu0 0.0
    %207 = vmatpush1.msra.mxu0 %v186
    %208 = vmatprep.subr.mxu0 0.0
    %209 = vmatpush1.msra.mxu0 %v187
    %210 = vmatprep.subr.mxu0 0.0
    %211 = vmatpush1.msra.mxu0 %v188
    %212 = vmatprep.subr.mxu0 0.0
    %213 = vmatpush1.msra.mxu0 %v189
    %214 = vmatprep.subr.mxu0 0.0
    %215 = vmatpush1.msra.mxu0 %v190
    %216 = vmatprep.subr.mxu0 0.0
    %217 = vmatpush1.msra.mxu0 %v191
    %218 = vmatprep.subr.mxu0 0.0
    %219 = vmatpush1.msra.mxu0 %v192
    %220 = vmatprep.subr.mxu0 0.0
    %221 = vmatpush1.msra.mxu0 0.0
    %222 = vmatprep.subr.mxu0 0.0
    %223 = vmatpush1.msra.mxu0 0.0
    %224 = vmatprep.subr.mxu0 0.0
    %225 = vmatpush1.msra.mxu0 0.0
    %226 = vmatprep.subr.mxu0 0.0
    %227 = vmatpush1.msra.mxu0 0.0
    %228 = vmatprep.subr.mxu0 0.0
    %229 = vmatpush1.msra.mxu0 0.0
    %230 = vmatprep.subr.mxu0 0.0
    %231 = vmatpush1.msra.mxu0 0.0
    %232 = vmatprep.subr.mxu0 0.0
    %233 = vmatpush1.msra.mxu0 0.0
    %234 = vmatprep.subr.mxu0 0.0
    %235 = vmatpush1.msra.mxu0 0.0
    %236 = vmatprep.subr.mxu0 0.0
    %237 = vmatpush1.msra.mxu0 0.0
    %238 = vmatprep.subr.mxu0 0.0
    %239 = vmatpush1.msra.mxu0 0.0
    %240 = vmatprep.subr.mxu0 0.0
    %241 = vmatpush1.msra.mxu0 0.0
    %242 = vmatprep.subr.mxu0 0.0
    %243 = vmatpush1.msra.mxu0 0.0
    %244 = vmatprep.subr.mxu0 0.0
    %245 = vmatpush1.msra.mxu0 0.0
    %246 = vmatprep.subr.mxu0 0.0
    %247 = vmatpush1.msra.mxu0 0.0
    %248 = vmatprep.subr.mxu0 0.0
    %249 = vmatpush1.msra.mxu0 0.0
    %250 = vmatprep.subr.mxu0 0.0
    %251 = vmatpush1.msra.mxu0 0.0
    %252 = vmatprep.subr.mxu0 0.0
    %253 = vmatpush1.msra.mxu0 0.0
    %254 = vmatprep.subr.mxu0 0.0
    %255 = vmatpush1.msra.mxu0 0.0
    %256 = vmatprep.subr.mxu0 0.0
    %257 = vmatpush1.msra.mxu0 0.0
    %258 = vmatprep.subr.mxu0 0.0
    %259 = vmatpush1.msra.mxu0 0.0
    %260 = vmatprep.subr.mxu0 0.0
    %261 = vmatpush1.msra.mxu0 0.0
    %262 = vmatprep.subr.mxu0 0.0
    %263 = vmatpush1.msra.mxu0 0.0
    %264 = vmatprep.subr.mxu0 0.0
    %265 = vmatpush1.msra.mxu0 0.0
    %266 = vmatprep.subr.mxu0 0.0
    %267 = vmatpush1.msra.mxu0 0.0
    %268 = vmatprep.mubr.f32.mxu0 0.0
    %269 = vmatmul.mubr.f32.gmra.mrb[0].mxu0 %v202
    %v270 = vpop.f32.mrb[0].mxu0
    %v271 = vadd.f32 %v198, %v270
    %v272 = vpop.f32.mrb[0].mxu0
    %273 = vdwg.mxu0
    %v274 = vld [vmem:[%s1] sm:$0x3]
    %v275 = vadd.f32 %v271, %v274
    %v276 = vxor.u32 %v275, 2147483648
    %v277 = vmul.f32 %v276, 1.442695
    %v278 = vpow.pop %v277
    %v279 = vadd.f32 %v278, 1.0
    %v280 = vrcp.pop %v279
    %v281 = vmul.f32 1.0, %v280
    %v282 = vmul.f32 %v275, %v281
    %v283 = vld [vmem:[#allocation4] sm:$0xff]
    %v284 = vld [vmem:[#allocation4 + $0x8] sm:$0xff]
    %v285 = vld [vmem:[#allocation4 + $0x10] sm:$0xff]
    %v286 = vld [vmem:[#allocation4 + $0x18] sm:$0xff]
    %v287 = vld [vmem:[#allocation4 + $0x20] sm:$0xff]
    %v288 = vld [vmem:[#allocation4 + $0x28] sm:$0xff]
    %v289 = vld [vmem:[#allocation4 + $0x30] sm:$0xff]
    %v290 = vld [vmem:[#allocation4 + $0x38] sm:$0xff]
    %v291 = vld [vmem:[#allocation4 + $0x40] sm:$0xff]
    %v292 = vld [vmem:[#allocation4 + $0x48] sm:$0xff]
    %v293 = vld [vmem:[#allocation4 + $0x50] sm:$0xff]
    %v294 = vld [vmem:[#allocation4 + $0x58] sm:$0xff]
    %v295 = vld [vmem:[#allocation4 + $0x60] sm:$0xff]
    %v296 = vld [vmem:[#allocation4 + $0x68] sm:$0xff]
    %v297 = vld [vmem:[#allocation4 + $0x70] sm:$0xff]
    %v298 = vld [vmem:[#allocation4 + $0x78] sm:$0xff]
    %v299 = vld [vmem:[#allocation4 + $0x80] sm:$0xff]
    %v300 = vld [vmem:[#allocation4 + $0x88] sm:$0xff]
    %v301 = vld [vmem:[#allocation4 + $0x90] sm:$0xff]
    %v302 = vld [vmem:[#allocation4 + $0x98] sm:$0xff]
    %v303 = vld [vmem:[#allocation4 + $0xa0] sm:$0xff]
    %v304 = vld [vmem:[#allocation4 + $0xa8] sm:$0xff]
    %v305 = vld [vmem:[#allocation4 + $0xb0] sm:$0xff]
    %v306 = vld [vmem:[#allocation4 + $0xb8] sm:$0xff]
    %v307 = vld [vmem:[#allocation4 + $0xc0] sm:$0xff]
    %v308 = vld [vmem:[#allocation4 + $0xc8] sm:$0xff]
    %v309 = vld [vmem:[#allocation4 + $0xd0] sm:$0xff]
    %v310 = vld [vmem:[#allocation4 + $0xd8] sm:$0xff]
    %v311 = vld [vmem:[#allocation4 + $0xe0] sm:$0xff]
    %v312 = vld [vmem:[#allocation4 + $0xe8] sm:$0xff]
    %v313 = vld [vmem:[#allocation4 + $0xf0] sm:$0xff]
    %v314 = vld [vmem:[#allocation4 + $0xf8] sm:$0xff]
    %v315 = vld [vmem:[#allocation4 + $0x100] sm:$0xff]
    %v316 = vld [vmem:[#allocation4 + $0x108] sm:$0xff]
    %v317 = vld [vmem:[#allocation4 + $0x110] sm:$0xff]
    %v318 = vld [vmem:[#allocation4 + $0x118] sm:$0xff]
    %v319 = vld [vmem:[#allocation4 + $0x120] sm:$0xff]
    %v320 = vld [vmem:[#allocation4 + $0x128] sm:$0xff]
    %v321 = vld [vmem:[#allocation4 + $0x130] sm:$0xff]
    %v322 = vld [vmem:[#allocation4 + $0x138] sm:$0xff]
    %v323 = vld [vmem:[#allocation4 + $0x140] sm:$0xff]
    %v324 = vld [vmem:[#allocation4 + $0x148] sm:$0xff]
    %v325 = vld [vmem:[#allocation4 + $0x150] sm:$0xff]
    %v326 = vld [vmem:[#allocation4 + $0x158] sm:$0xff]
    %v327 = vld [vmem:[#allocation4 + $0x160] sm:$0xff]
    %v328 = vld [vmem:[#allocation4 + $0x168] sm:$0xff]
    %v329 = vld [vmem:[#allocation4 + $0x170] sm:$0xff]
    %v330 = vld [vmem:[#allocation4 + $0x178] sm:$0xff]
    %v331 = vld [vmem:[#allocation4 + $0x180] sm:$0xff]
    %v332 = vld [vmem:[#allocation4 + $0x188] sm:$0xff]
    %v333 = vld [vmem:[#allocation4 + $0x190] sm:$0xff]
    %v334 = vld [vmem:[#allocation4 + $0x198] sm:$0xff]
    %v335 = vld [vmem:[#allocation4 + $0x1a0] sm:$0xff]
    %v336 = vld [vmem:[#allocation4 + $0x1a8] sm:$0xff]
    %v337 = vld [vmem:[#allocation4 + $0x1b0] sm:$0xff]
    %v338 = vld [vmem:[#allocation4 + $0x1b8] sm:$0xff]
    %v339 = vld [vmem:[%s7] sm:$0xff]
    %v341 = vlaneseq
    %v342 = vshrl.u32 %v341, 7
    %v343 = vsub.s32 0, %v342
    %v344 = vrot.slane %v339, %v343
    %v345 = vlaneseq
    %v346 = vshrl.u32 %v345, 7
    %v347 = vsub.s32 1, %v346
    %v348 = vrot.slane %v339, %v347
    %v349 = vlaneseq
    %v350 = vshrl.u32 %v349, 7
    %v351 = vsub.s32 2, %v350
    %v352 = vrot.slane %v339, %v351
    %v353 = vlaneseq
    %v354 = vshrl.u32 %v353, 7
    %v355 = vsub.s32 3, %v354
    %v356 = vrot.slane %v339, %v355
    %v357 = vlaneseq
    %v358 = vshrl.u32 %v357, 7
    %v359 = vsub.s32 4, %v358
    %v360 = vrot.slane %v339, %v359
    %v361 = vlaneseq
    %v362 = vshrl.u32 %v361, 7
    %v363 = vsub.s32 5, %v362
    %v364 = vrot.slane %v339, %v363
    %v365 = vlaneseq
    %v366 = vshrl.u32 %v365, 7
    %v367 = vsub.s32 6, %v366
    %v368 = vrot.slane %v339, %v367
    %v377 = vsel %vm200, %v282, 0
    %379 = vmatprep.subr.mxu0 %v284
    %380 = vmatpush1.msra.mxu0 %v283
    %381 = vmatprep.subr.mxu0 %v291
    %382 = vmatpush1.msra.mxu0 %v290
    %383 = vmatprep.subr.mxu0 %v298
    %384 = vmatpush1.msra.mxu0 %v297
    %385 = vmatprep.subr.mxu0 %v305
    %386 = vmatpush1.msra.mxu0 %v304
    %387 = vmatprep.subr.mxu0 %v312
    %388 = vmatpush1.msra.mxu0 %v311
    %389 = vmatprep.subr.mxu0 %v319
    %390 = vmatpush1.msra.mxu0 %v318
    %391 = vmatprep.subr.mxu0 %v326
    %392 = vmatpush1.msra.mxu0 %v325
    %393 = vmatprep.subr.mxu0 %v333
    %394 = vmatpush1.msra.mxu0 %v332
    %395 = vmatprep.subr.mxu0 0.0
    %396 = vmatpush1.msra.mxu0 0.0
    %397 = vmatprep.subr.mxu0 0.0
    %398 = vmatpush1.msra.mxu0 0.0
    %399 = vmatprep.subr.mxu0 0.0
    %400 = vmatpush1.msra.mxu0 0.0
    %401 = vmatprep.subr.mxu0 0.0
    %402 = vmatpush1.msra.mxu0 0.0
    %403 = vmatprep.subr.mxu0 0.0
    %404 = vmatpush1.msra.mxu0 0.0
    %405 = vmatprep.subr.mxu0 0.0
    %406 = vmatpush1.msra.mxu0 0.0
    %407 = vmatprep.subr.mxu0 0.0
    %408 = vmatpush1.msra.mxu0 0.0
    %409 = vmatprep.subr.mxu0 0.0
    %410 = vmatpush1.msra.mxu0 0.0
    %411 = vmatprep.subr.mxu0 0.0
    %412 = vmatpush1.msra.mxu0 0.0
    %413 = vmatprep.subr.mxu0 0.0
    %414 = vmatpush1.msra.mxu0 0.0
    %415 = vmatprep.subr.mxu0 0.0
    %416 = vmatpush1.msra.mxu0 0.0
    %417 = vmatprep.subr.mxu0 0.0
    %418 = vmatpush1.msra.mxu0 0.0
    %419 = vmatprep.subr.mxu0 0.0
    %420 = vmatpush1.msra.mxu0 0.0
    %421 = vmatprep.subr.mxu0 0.0
    %422 = vmatpush1.msra.mxu0 0.0
    %423 = vmatprep.subr.mxu0 0.0
    %424 = vmatpush1.msra.mxu0 0.0
    %425 = vmatprep.subr.mxu0 0.0
    %426 = vmatpush1.msra.mxu0 0.0
    %427 = vmatprep.subr.mxu0 0.0
    %428 = vmatpush1.msra.mxu0 0.0
    %429 = vmatprep.subr.mxu0 0.0
    %430 = vmatpush1.msra.mxu0 0.0
    %431 = vmatprep.subr.mxu0 0.0
    %432 = vmatpush1.msra.mxu0 0.0
    %433 = vmatprep.subr.mxu0 0.0
    %434 = vmatpush1.msra.mxu0 0.0
    %435 = vmatprep.subr.mxu0 0.0
    %436 = vmatpush1.msra.mxu0 0.0
    %437 = vmatprep.subr.mxu0 0.0
    %438 = vmatpush1.msra.mxu0 0.0
    %439 = vmatprep.subr.mxu0 0.0
    %440 = vmatpush1.msra.mxu0 0.0
    %441 = vmatprep.subr.mxu0 0.0
    %442 = vmatpush1.msra.mxu0 0.0
    %443 = vmatprep.mubr.f32.mxu0 0.0
    %444 = vmatmul.mubr.f32.gmra.mrb[0].mxu0 %v377
    %v445 = vpop.f32.mrb[0].mxu0
    %v446 = vadd.f32 %v344, %v445
    %v447 = vpop.f32.mrb[0].mxu0
    %v448 = vadd.f32 %v348, %v447
    %449 = vdwg.mxu0
    %450 = vmatprep.subr.mxu0 %v286
    %451 = vmatpush1.msra.mxu0 %v285
    %452 = vmatprep.subr.mxu0 %v293
    %453 = vmatpush1.msra.mxu0 %v292
    %454 = vmatprep.subr.mxu0 %v300
    %455 = vmatpush1.msra.mxu0 %v299
    %456 = vmatprep.subr.mxu0 %v307
    %457 = vmatpush1.msra.mxu0 %v306
    %458 = vmatprep.subr.mxu0 %v314
    %459 = vmatpush1.msra.mxu0 %v313
    %460 = vmatprep.subr.mxu0 %v321
    %461 = vmatpush1.msra.mxu0 %v320
    %462 = vmatprep.subr.mxu0 %v328
    %463 = vmatpush1.msra.mxu0 %v327
    %464 = vmatprep.subr.mxu0 %v335
    %465 = vmatpush1.msra.mxu0 %v334
    %466 = vmatprep.subr.mxu0 0.0
    %467 = vmatpush1.msra.mxu0 0.0
    %468 = vmatprep.subr.mxu0 0.0
    %469 = vmatpush1.msra.mxu0 0.0
    %470 = vmatprep.subr.mxu0 0.0
    %471 = vmatpush1.msra.mxu0 0.0
    %472 = vmatprep.subr.mxu0 0.0
    %473 = vmatpush1.msra.mxu0 0.0
    %474 = vmatprep.subr.mxu0 0.0
    %475 = vmatpush1.msra.mxu0 0.0
    %476 = vmatprep.subr.mxu0 0.0
    %477 = vmatpush1.msra.mxu0 0.0
    %478 = vmatprep.subr.mxu0 0.0
    %479 = vmatpush1.msra.mxu0 0.0
    %480 = vmatprep.subr.mxu0 0.0
    %481 = vmatpush1.msra.mxu0 0.0
    %482 = vmatprep.subr.mxu0 0.0
    %483 = vmatpush1.msra.mxu0 0.0
    %484 = vmatprep.subr.mxu0 0.0
    %485 = vmatpush1.msra.mxu0 0.0
    %486 = vmatprep.subr.mxu0 0.0
    %487 = vmatpush1.msra.mxu0 0.0
    %488 = vmatprep.subr.mxu0 0.0
    %489 = vmatpush1.msra.mxu0 0.0
    %490 = vmatprep.subr.mxu0 0.0
    %491 = vmatpush1.msra.mxu0 0.0
    %492 = vmatprep.subr.mxu0 0.0
    %493 = vmatpush1.msra.mxu0 0.0
    %494 = vmatprep.subr.mxu0 0.0
    %495 = vmatpush1.msra.mxu0 0.0
    %496 = vmatprep.subr.mxu0 0.0
    %497 = vmatpush1.msra.mxu0 0.0
    %498 = vmatprep.subr.mxu0 0.0
    %499 = vmatpush1.msra.mxu0 0.0
    %500 = vmatprep.subr.mxu0 0.0
    %501 = vmatpush1.msra.mxu0 0.0
    %502 = vmatprep.subr.mxu0 0.0
    %503 = vmatpush1.msra.mxu0 0.0
    %504 = vmatprep.subr.mxu0 0.0
    %505 = vmatpush1.msra.mxu0 0.0
    %506 = vmatprep.subr.mxu0 0.0
    %507 = vmatpush1.msra.mxu0 0.0
    %508 = vmatprep.subr.mxu0 0.0
    %509 = vmatpush1.msra.mxu0 0.0
    %510 = vmatprep.subr.mxu0 0.0
    %511 = vmatpush1.msra.mxu0 0.0
    %512 = vmatprep.subr.mxu0 0.0
    %513 = vmatpush1.msra.mxu0 0.0
    %514 = vmatprep.mubr.f32.mxu0 0.0
    %515 = vmatmul.mubr.f32.gmra.mrb[0].mxu0 %v377
    %v516 = vpop.f32.mrb[0].mxu0
    %v517 = vadd.f32 %v352, %v516
    %v518 = vpop.f32.mrb[0].mxu0
    %v519 = vadd.f32 %v356, %v518
    %520 = vdwg.mxu0
    %521 = vmatprep.subr.mxu0 %v288
    %522 = vmatpush1.msra.mxu0 %v287
    %523 = vmatprep.subr.mxu0 %v295
    %524 = vmatpush1.msra.mxu0 %v294
    %525 = vmatprep.subr.mxu0 %v302
    %526 = vmatpush1.msra.mxu0 %v301
    %527 = vmatprep.subr.mxu0 %v309
    %528 = vmatpush1.msra.mxu0 %v308
    %529 = vmatprep.subr.mxu0 %v316
    %530 = vmatpush1.msra.mxu0 %v315
    %531 = vmatprep.subr.mxu0 %v323
    %532 = vmatpush1.msra.mxu0 %v322
    %533 = vmatprep.subr.mxu0 %v330
    %534 = vmatpush1.msra.mxu0 %v329
    %535 = vmatprep.subr.mxu0 %v337
    %536 = vmatpush1.msra.mxu0 %v336
    %537 = vmatprep.subr.mxu0 0.0
    %538 = vmatpush1.msra.mxu0 0.0
    %539 = vmatprep.subr.mxu0 0.0
    %540 = vmatpush1.msra.mxu0 0.0
    %541 = vmatprep.subr.mxu0 0.0
    %542 = vmatpush1.msra.mxu0 0.0
    %543 = vmatprep.subr.mxu0 0.0
    %544 = vmatpush1.msra.mxu0 0.0
    %545 = vmatprep.subr.mxu0 0.0
    %546 = vmatpush1.msra.mxu0 0.0
    %547 = vmatprep.subr.mxu0 0.0
    %548 = vmatpush1.msra.mxu0 0.0
    %549 = vmatprep.subr.mxu0 0.0
    %550 = vmatpush1.msra.mxu0 0.0
    %551 = vmatprep.subr.mxu0 0.0
    %552 = vmatpush1.msra.mxu0 0.0
    %553 = vmatprep.subr.mxu0 0.0
    %554 = vmatpush1.msra.mxu0 0.0
    %555 = vmatprep.subr.mxu0 0.0
    %556 = vmatpush1.msra.mxu0 0.0
    %557 = vmatprep.subr.mxu0 0.0
    %558 = vmatpush1.msra.mxu0 0.0
    %559 = vmatprep.subr.mxu0 0.0
    %560 = vmatpush1.msra.mxu0 0.0
    %561 = vmatprep.subr.mxu0 0.0
    %562 = vmatpush1.msra.mxu0 0.0
    %563 = vmatprep.subr.mxu0 0.0
    %564 = vmatpush1.msra.mxu0 0.0
    %565 = vmatprep.subr.mxu0 0.0
    %566 = vmatpush1.msra.mxu0 0.0
    %567 = vmatprep.subr.mxu0 0.0
    %568 = vmatpush1.msra.mxu0 0.0
    %569 = vmatprep.subr.mxu0 0.0
    %570 = vmatpush1.msra.mxu0 0.0
    %571 = vmatprep.subr.mxu0 0.0
    %572 = vmatpush1.msra.mxu0 0.0
    %573 = vmatprep.subr.mxu0 0.0
    %574 = vmatpush1.msra.mxu0 0.0
    %575 = vmatprep.subr.mxu0 0.0
    %576 = vmatpush1.msra.mxu0 0.0
    %577 = vmatprep.subr.mxu0 0.0
    %578 = vmatpush1.msra.mxu0 0.0
    %579 = vmatprep.subr.mxu0 0.0
    %580 = vmatpush1.msra.mxu0 0.0
    %581 = vmatprep.subr.mxu0 0.0
    %582 = vmatpush1.msra.mxu0 0.0
    %583 = vmatprep.subr.mxu0 0.0
    %584 = vmatpush1.msra.mxu0 0.0
    %585 = vmatprep.mubr.f32.mxu0 0.0
    %586 = vmatmul.mubr.f32.gmra.mrb[0].mxu0 %v377
    %v587 = vpop.f32.mrb[0].mxu0
    %v588 = vadd.f32 %v360, %v587
    %v589 = vpop.f32.mrb[0].mxu0
    %v590 = vadd.f32 %v364, %v589
    %591 = vdwg.mxu0
    %592 = vmatprep.subr.mxu0 0.0
    %593 = vmatpush1.msra.mxu0 %v289
    %594 = vmatprep.subr.mxu0 0.0
    %595 = vmatpush1.msra.mxu0 %v296
    %596 = vmatprep.subr.mxu0 0.0
    %597 = vmatpush1.msra.mxu0 %v303
    %598 = vmatprep.subr.mxu0 0.0
    %599 = vmatpush1.msra.mxu0 %v310
    %600 = vmatprep.subr.mxu0 0.0
    %601 = vmatpush1.msra.mxu0 %v317
    %602 = vmatprep.subr.mxu0 0.0
    %603 = vmatpush1.msra.mxu0 %v324
    %604 = vmatprep.subr.mxu0 0.0
    %605 = vmatpush1.msra.mxu0 %v331
    %606 = vmatprep.subr.mxu0 0.0
    %607 = vmatpush1.msra.mxu0 %v338
    %608 = vmatprep.subr.mxu0 0.0
    %609 = vmatpush1.msra.mxu0 0.0
    %610 = vmatprep.subr.mxu0 0.0
    %611 = vmatpush1.msra.mxu0 0.0
    %612 = vmatprep.subr.mxu0 0.0
    %613 = vmatpush1.msra.mxu0 0.0
    %614 = vmatprep.subr.mxu0 0.0
    %615 = vmatpush1.msra.mxu0 0.0
    %616 = vmatprep.subr.mxu0 0.0
    %617 = vmatpush1.msra.mxu0 0.0
    %618 = vmatprep.subr.mxu0 0.0
    %619 = vmatpush1.msra.mxu0 0.0
    %620 = vmatprep.subr.mxu0 0.0
    %621 = vmatpush1.msra.mxu0 0.0
    %622 = vmatprep.subr.mxu0 0.0
    %623 = vmatpush1.msra.mxu0 0.0
    %624 = vmatprep.subr.mxu0 0.0
    %625 = vmatpush1.msra.mxu0 0.0
    %626 = vmatprep.subr.mxu0 0.0
    %627 = vmatpush1.msra.mxu0 0.0
    %628 = vmatprep.subr.mxu0 0.0
    %629 = vmatpush1.msra.mxu0 0.0
    %630 = vmatprep.subr.mxu0 0.0
    %631 = vmatpush1.msra.mxu0 0.0
    %632 = vmatprep.subr.mxu0 0.0
    %633 = vmatpush1.msra.mxu0 0.0
    %634 = vmatprep.subr.mxu0 0.0
    %635 = vmatpush1.msra.mxu0 0.0
    %636 = vmatprep.subr.mxu0 0.0
    %637 = vmatpush1.msra.mxu0 0.0
    %638 = vmatprep.subr.mxu0 0.0
    %639 = vmatpush1.msra.mxu0 0.0
    %640 = vmatprep.subr.mxu0 0.0
    %641 = vmatpush1.msra.mxu0 0.0
    %642 = vmatprep.subr.mxu0 0.0
    %643 = vmatpush1.msra.mxu0 0.0
    %644 = vmatprep.subr.mxu0 0.0
    %645 = vmatpush1.msra.mxu0 0.0
    %646 = vmatprep.subr.mxu0 0.0
    %647 = vmatpush1.msra.mxu0 0.0
    %648 = vmatprep.subr.mxu0 0.0
    %649 = vmatpush1.msra.mxu0 0.0
    %650 = vmatprep.subr.mxu0 0.0
    %651 = vmatpush1.msra.mxu0 0.0
    %652 = vmatprep.subr.mxu0 0.0
    %653 = vmatpush1.msra.mxu0 0.0
    %654 = vmatprep.subr.mxu0 0.0
    %655 = vmatpush1.msra.mxu0 0.0
    %656 = vmatprep.mubr.f32.mxu0 0.0
    %657 = vmatmul.mubr.f32.gmra.mrb[0].mxu0 %v377
    %v658 = vpop.f32.mrb[0].mxu0
    %v659 = vadd.f32 %v368, %v658
    %v660 = vpop.f32.mrb[0].mxu0
    %661 = vdwg.mxu0
    %v669 = vcombine.low %v446, %v448
    %v670 = vcombine.low %v517, %v519
    %v672 = vunpack.c.l.s4 1983009808
    %v673 = vunpack.c.0.s8 %v672
    %v674 = vlaneseq
    %v675 = vshrl.u32 %v674, 7
    %v676 = vsub.s32 %v673, %v675
    %v677 = vrot.slane %v669, %v676
    %v679 = vunpack.c.l.s4 1983009808
    %v680 = vunpack.c.0.s8 %v679
    %v681 = vlaneseq
    %v682 = vshrl.u32 %v681, 7
    %v683 = vsub.s32 %v680, %v682
    %v684 = vrot.slane %v670, %v683
    %v685 = vcombine.low %v677, %v684
    %v686 = vcombine.low %v588, %v590
    %v688 = vunpack.c.l.s4 1983009808
    %v689 = vunpack.c.0.s8 %v688
    %v690 = vlaneseq
    %v691 = vshrl.u32 %v690, 7
    %v692 = vsub.s32 %v689, %v691
    %v693 = vrot.slane %v686, %v692
    %v695 = vunpack.c.l.s4 1983009808
    %v696 = vunpack.c.0.s8 %v695
    %v697 = vlaneseq
    %v698 = vshrl.u32 %v697, 7
    %v699 = vsub.s32 %v696, %v698
    %v700 = vrot.slane %v659, %v699
    %v701 = vcombine.low %v693, %v700
    %704 = vst [vmem:[%s8] sm:$0xff] %v685
    %705 = vst [vmem:[%s8 + $0x8] sm:$0x3f] %v701
    // Predicated region
    $region42: #{_lambda_.2} parent=1 // pred_check
      _
    $region43: #{_lambda_.2} parent=1 // pred_check_branch
      %707 = sbr.rel (0) target = $region45
    $region44: #{_lambda_.2} parent=1 // pred_region
      _
    $region45: #{_lambda_.2} parent=1 // pred_fallthru
      _
    // Predicated region
    $region46: #{_lambda_.2} parent=1 // pred_check
      _
    $region47: #{_lambda_.2} parent=1 // pred_check_branch
      %709 = sbr.rel (0) target = $region49
    $region48: #{_lambda_.2} parent=1 // pred_region
      _
    $region49: #{_lambda_.2} parent=1 // pred_fallthru
      _
    %710 = vsyncpa [#allocation3], 1
    %711 = vsyncpa [#allocation5], 1

// kernel: _lambda_.3
$region0: #{_lambda_.3}
  #allocation0 [shape = 'u32[]', space=smem, size = 0x4, offset = 0x4, fixed_abs, tag = 'smem constant byte address 0x4 - core index']
  #allocation1 [shape = 'u32[144,128]{1,0:T(1,128)}', space=vmem, size = 0x12000, scoped, tag = 'internal scratch']
  #allocation2 [shape = 'f32[1,64,64]{2,1,0:T(8,128)}', space=vmem, size = 0x8000, scoped, tag = 'scratch operand']
  %s0 = inlined_call_operand.vmem [shape: f32[2,64,16], index: 0, kind: input, shape index: {}]
  %s1 = inlined_call_operand.vmem [shape: f32[64,64], index: 1, kind: input, shape index: {}]
  %s2 = inlined_call_operand.vmem [shape: bf16[16,64], index: 2, kind: input, shape index: {}]
  %s3 = inlined_call_operand.vmem [shape: f32[1,64], index: 3, kind: input, shape index: {}]
  %s4 = inlined_call_operand.vmem [shape: f32[2,2,6,64], index: 4, kind: input, shape index: {}]
  %s5 = inlined_call_operand.vmem [shape: bf16[2,64,192], index: 5, kind: input, shape index: {}]
  %s6 = inlined_call_operand.vmem [shape: f32[2,1,192], index: 6, kind: input, shape index: {}]
  %s7 = inlined_call_operand.vmem [shape: bf16[2,64,64], index: 7, kind: input, shape index: {}]
  %s8 = inlined_call_operand.vmem [shape: f32[2,1,64], index: 8, kind: input, shape index: {}]
  %s9 = inlined_call_operand.vmem [shape: bf16[2,64,256], index: 9, kind: input, shape index: {}]
  %s10 = inlined_call_operand.vmem [shape: f32[2,1,256], index: 10, kind: input, shape index: {}]
  %s11 = inlined_call_operand.vmem [shape: bf16[2,256,64], index: 11, kind: input, shape index: {}]
  %s12 = inlined_call_operand.vmem [shape: f32[2,1,64], index: 12, kind: input, shape index: {}]
  %s13 = inlined_call_operand.vmem [shape: f32[2,2,64], index: 13, kind: input, shape index: {}]
  %s14 = inlined_call_operand.vmem [shape: bf16[64,128], index: 14, kind: input, shape index: {}]
  %s15 = inlined_call_operand.vmem [shape: f32[1,128], index: 15, kind: input, shape index: {}]
  %s16 = inlined_call_operand.vmem [shape: f32[2,64,128], index: 16, kind: output, shape index: {}]
  %s17 = sld [smem:[#allocation0]]
  $region105: #{_lambda_.3} parent=0
    _
  %s19 = ssub.s32 1, %s17
  %s20 = scalar_select 0, %s19, %s17
  loop: start=0, step=1, limit=6
  $region2: #{_lambda_.3} parent=0 // loop_pre_header
    _
  $region3: #{_lambda_.3} parent=0 // loop_header
    %s22 = sphi 0, %s26
    %p23 = scmp.ge.s32.totalorder %s22, 6
    %s29 = sphi 0, %s41
    %s30 = sphi 0, %s37
    %s31 = sphi 0, %s29
    %s32 = sphi 0, %s30
    %s33 = sphi 0, %s31
    %s34 = sphi 0, %s32
    %s44 = sphi 0, %s46
    %s47 = sphi 0, %s44
    %s48 = sphi 0, %s47
    %s64 = sphi 0, %s48
    %s68 = sphi 0, %s68
    %s70 = sphi 0, %s68
    %s71 = sphi 0, %s70
    %s85 = sphi 0, %s71
    %s89 = sphi 0, %s89
    %s91 = sphi 0, %s89
    %s92 = sphi 0, %s91
    %s106 = sphi 0, %s92
    %s110 = sphi 0, %s110
    %s112 = sphi 0, %s110
    %s113 = sphi 0, %s112
    %s127 = sphi 0, %s113
    %s135 = sphi 0, %s137
    %s138 = sphi 0, %s135
    %s139 = sphi 0, %s138
    %s155 = sphi 0, %s139
    %s161 = sphi 0, %s163
    %s164 = sphi 0, %s161
    %s165 = sphi 0, %s164
    %s181 = sphi 0, %s165
    %s187 = sphi 0, %s189
    %s190 = sphi 0, %s187
    %s191 = sphi 0, %s190
    %s207 = sphi 0, %s191
    %s213 = sphi 0, %s215
    %s216 = sphi 0, %s213
    %s217 = sphi 0, %s216
    %s233 = sphi 0, %s217
    %s239 = sphi 0, %s241
    %s242 = sphi 0, %s239
    %s243 = sphi 0, %s242
    %s259 = sphi 0, %s243
    %s265 = sphi 0, %s267
    %s268 = sphi 0, %s265
    %s269 = sphi 0, %s268
    %s285 = sphi 0, %s269
    %s291 = sphi 0, %s293
    %s294 = sphi 0, %s291
    %s295 = sphi 0, %s294
    %s311 = sphi 0, %s295
    %s317 = sphi 0, %s319
    %s320 = sphi 0, %s317
    %s321 = sphi 0, %s320
    %s337 = sphi 0, %s321
    %s343 = sphi 0, %s345
    %s346 = sphi 0, %s343
    %s347 = sphi 0, %s346
    %s363 = sphi 0, %s347
    %s369 = sphi 0, %s371
    %s372 = sphi 0, %s369
    %s373 = sphi 0, %s372
    %s389 = sphi 0, %s373
    %s393 = sphi 0, %s393
    %s395 = sphi 0, %s393
    %s396 = sphi 0, %s395
    %s410 = sphi 0, %s396
    %s414 = sphi 0, %s414
    %s416 = sphi 0, %s414
    %s417 = sphi 0, %s416
    %s431 = sphi 0, %s417
    %s437 = sphi 0, %s439
    %s440 = sphi 0, %s437
    %s441 = sphi 0, %s440
    %s457 = sphi 0, %s441
  $region4: #{_lambda_.3} parent=0 // loop_header_branch
    %25 = sbr.rel (%p23) target = $region8
  $region5: #{_lambda_.3} parent=0 // loop_body
    %s27 = ssub.s32 %s22, 1
    %s28 = ssub.s32 %s22, 2
    %s35 = sadd.s32 1, %s30
    %p36 = scmp.ge.s32.totalorder %s35, 2
    %s37 = scalar_select %p36, 0, %s35
    %s38 = sadd.s32 1, %s29
    %s39 = scalar_select %p36, %s38, %s29
    %p40 = scmp.ge.s32.totalorder %s39, 2
    %s41 = scalar_select %p40, 0, %s39
    %s42 = ssub.s32 %s29, %s41
    %p43 = scmp.eq.s32.totalorder %s42, 0
    %s45 = sadd.s32 %s44, 1
    %s46 = scalar_select %p43, %s44, %s45
    %p49 = pneg %p43
    %p50 = scmp.eq.s32.totalorder %s22, 3
    %p51 = por %p49, %p50
    %p52 = scmp.ne.s32.totalorder %s44, %s47
    %p53 = scmp.eq.s32.totalorder %s22, 0
    %p54 = por %p52, %p53
    %p55 = scmp.ne.s32.totalorder %s44, %s47
    %p56 = scmp.eq.s32.totalorder %s27, 3
    %p57 = por %p55, %p56
    %p58 = scmp.ne.s32.totalorder %s47, %s48
    %p59 = scmp.eq.s32.totalorder %s27, 0
    %p60 = por %p58, %p59
    %p61 = scmp.ne.s32.totalorder %s47, %s48
    %p62 = scmp.eq.s32.totalorder %s28, 3
    %p63 = por %p61, %p62
    %p65 = scmp.ne.s32.totalorder %s48, %s64
    %p66 = scmp.eq.s32.totalorder %s28, 0
    %p67 = por %p65, %p66
    %s69 = sadd.s32 %s68, 1
    %p72 = scmp.eq.s32.totalorder %s22, 3
    %p73 = scmp.ne.s32.totalorder %s68, %s70
    %p74 = scmp.eq.s32.totalorder %s22, 0
    %p75 = por %p73, %p74
    %p76 = scmp.ne.s32.totalorder %s68, %s70
    %p77 = scmp.eq.s32.totalorder %s27, 3
    %p78 = por %p76, %p77
    %p79 = scmp.ne.s32.totalorder %s70, %s71
    %p80 = scmp.eq.s32.totalorder %s27, 0
    %p81 = por %p79, %p80
    %p82 = scmp.ne.s32.totalorder %s70, %s71
    %p83 = scmp.eq.s32.totalorder %s28, 3
    %p84 = por %p82, %p83
    %p86 = scmp.ne.s32.totalorder %s71, %s85
    %p87 = scmp.eq.s32.totalorder %s28, 0
    %p88 = por %p86, %p87
    %s90 = sadd.s32 %s89, 1
    %p93 = scmp.eq.s32.totalorder %s22, 3
    %p94 = scmp.ne.s32.totalorder %s89, %s91
    %p95 = scmp.eq.s32.totalorder %s22, 0
    %p96 = por %p94, %p95
    %p97 = scmp.ne.s32.totalorder %s89, %s91
    %p98 = scmp.eq.s32.totalorder %s27, 3
    %p99 = por %p97, %p98
    %p100 = scmp.ne.s32.totalorder %s91, %s92
    %p101 = scmp.eq.s32.totalorder %s27, 0
    %p102 = por %p100, %p101
    %p103 = scmp.ne.s32.totalorder %s91, %s92
    %p104 = scmp.eq.s32.totalorder %s28, 3
    %p105 = por %p103, %p104
    %p107 = scmp.ne.s32.totalorder %s92, %s106
    %p108 = scmp.eq.s32.totalorder %s28, 0
    %p109 = por %p107, %p108
    %s111 = sadd.s32 %s110, 1
    %p114 = scmp.eq.s32.totalorder %s22, 3
    %p115 = scmp.ne.s32.totalorder %s110, %s112
    %p116 = scmp.eq.s32.totalorder %s22, 0
    %p117 = por %p115, %p116
    %p118 = scmp.ne.s32.totalorder %s110, %s112
    %p119 = scmp.eq.s32.totalorder %s27, 3
    %p120 = por %p118, %p119
    %p121 = scmp.ne.s32.totalorder %s112, %s113
    %p122 = scmp.eq.s32.totalorder %s27, 0
    %p123 = por %p121, %p122
    %p124 = scmp.ne.s32.totalorder %s112, %s113
    %p125 = scmp.eq.s32.totalorder %s28, 3
    %p126 = por %p124, %p125
    %p128 = scmp.ne.s32.totalorder %s113, %s127
    %p129 = scmp.eq.s32.totalorder %s28, 0
    %p130 = por %p128, %p129
    %s131 = ssub.s32 %s29, %s41
    %s132 = ssub.s32 %s30, %s37
    %s133 = sor.u32 %s131, %s132
    %p134 = scmp.eq.s32.totalorder %s133, 0
    %s136 = sadd.s32 %s135, 1
    %s137 = scalar_select %p134, %s135, %s136
    %p140 = pneg %p134
    %p141 = scmp.eq.s32.totalorder %s22, 3
    %p142 = por %p140, %p141
    %p143 = scmp.ne.s32.totalorder %s135, %s138
    %p144 = scmp.eq.s32.totalorder %s22, 0
    %p145 = por %p143, %p144
    %p146 = scmp.ne.s32.totalorder %s135, %s138
    %p147 = scmp.eq.s32.totalorder %s27, 3
    %p148 = por %p146, %p147
    %p149 = scmp.ne.s32.totalorder %s138, %s139
    %p150 = scmp.eq.s32.totalorder %s27, 0
    %p151 = por %p149, %p150
    %p152 = scmp.ne.s32.totalorder %s138, %s139
    %p153 = scmp.eq.s32.totalorder %s28, 3
    %p154 = por %p152, %p153
    %p156 = scmp.ne.s32.totalorder %s139, %s155
    %p157 = scmp.eq.s32.totalorder %s28, 0
    %p158 = por %p156, %p157
    %s159 = ssub.s32 %s30, %s37
    %p160 = scmp.eq.s32.totalorder %s159, 0
    %s162 = sadd.s32 %s161, 1
    %s163 = scalar_select %p160, %s161, %s162
    %p166 = pneg %p160
    %p167 = scmp.eq.s32.totalorder %s22, 3
    %p168 = por %p166, %p167
    %p169 = scmp.ne.s32.totalorder %s161, %s164
    %p170 = scmp.eq.s32.totalorder %s22, 0
    %p171 = por %p169, %p170
    %p172 = scmp.ne.s32.totalorder %s161, %s164
    %p173 = scmp.eq.s32.totalorder %s27, 3
    %p174 = por %p172, %p173
    %p175 = scmp.ne.s32.totalorder %s164, %s165
    %p176 = scmp.eq.s32.totalorder %s27, 0
    %p177 = por %p175, %p176
    %p178 = scmp.ne.s32.totalorder %s164, %s165
    %p179 = scmp.eq.s32.totalorder %s28, 3
    %p180 = por %p178, %p179
    %p182 = scmp.ne.s32.totalorder %s165, %s181
    %p183 = scmp.eq.s32.totalorder %s28, 0
    %p184 = por %p182, %p183
    %s185 = ssub.s32 %s30, %s37
    %p186 = scmp.eq.s32.totalorder %s185, 0
    %s188 = sadd.s32 %s187, 1
    %s189 = scalar_select %p186, %s187, %s188
    %p192 = pneg %p186
    %p193 = scmp.eq.s32.totalorder %s22, 3
    %p194 = por %p192, %p193
    %p195 = scmp.ne.s32.totalorder %s187, %s190
    %p196 = scmp.eq.s32.totalorder %s22, 0
    %p197 = por %p195, %p196
    %p198 = scmp.ne.s32.totalorder %s187, %s190
    %p199 = scmp.eq.s32.totalorder %s27, 3
    %p200 = por %p198, %p199
    %p201 = scmp.ne.s32.totalorder %s190, %s191
    %p202 = scmp.eq.s32.totalorder %s27, 0
    %p203 = por %p201, %p202
    %p204 = scmp.ne.s32.totalorder %s190, %s191
    %p205 = scmp.eq.s32.totalorder %s28, 3
    %p206 = por %p204, %p205
    %p208 = scmp.ne.s32.totalorder %s191, %s207
    %p209 = scmp.eq.s32.totalorder %s28, 0
    %p210 = por %p208, %p209
    %s211 = ssub.s32 %s30, %s37
    %p212 = scmp.eq.s32.totalorder %s211, 0
    %s214 = sadd.s32 %s213, 1
    %s215 = scalar_select %p212, %s213, %s214
    %p218 = pneg %p212
    %p219 = scmp.eq.s32.totalorder %s22, 3
    %p220 = por %p218, %p219
    %p221 = scmp.ne.s32.totalorder %s213, %s216
    %p222 = scmp.eq.s32.totalorder %s22, 0
    %p223 = por %p221, %p222
    %p224 = scmp.ne.s32.totalorder %s213, %s216
    %p225 = scmp.eq.s32.totalorder %s27, 3
    %p226 = por %p224, %p225
    %p227 = scmp.ne.s32.totalorder %s216, %s217
    %p228 = scmp.eq.s32.totalorder %s27, 0
    %p229 = por %p227, %p228
    %p230 = scmp.ne.s32.totalorder %s216, %s217
    %p231 = scmp.eq.s32.totalorder %s28, 3
    %p232 = por %p230, %p231
    %p234 = scmp.ne.s32.totalorder %s217, %s233
    %p235 = scmp.eq.s32.totalorder %s28, 0
    %p236 = por %p234, %p235
    %s237 = ssub.s32 %s30, %s37
    %p238 = scmp.eq.s32.totalorder %s237, 0
    %s240 = sadd.s32 %s239, 1
    %s241 = scalar_select %p238, %s239, %s240
    %p244 = pneg %p238
    %p245 = scmp.eq.s32.totalorder %s22, 3
    %p246 = por %p244, %p245
    %p247 = scmp.ne.s32.totalorder %s239, %s242
    %p248 = scmp.eq.s32.totalorder %s22, 0
    %p249 = por %p247, %p248
    %p250 = scmp.ne.s32.totalorder %s239, %s242
    %p251 = scmp.eq.s32.totalorder %s27, 3
    %p252 = por %p250, %p251
    %p253 = scmp.ne.s32.totalorder %s242, %s243
    %p254 = scmp.eq.s32.totalorder %s27, 0
    %p255 = por %p253, %p254
    %p256 = scmp.ne.s32.totalorder %s242, %s243
    %p257 = scmp.eq.s32.totalorder %s28, 3
    %p258 = por %p256, %p257
    %p260 = scmp.ne.s32.totalorder %s243, %s259
    %p261 = scmp.eq.s32.totalorder %s28, 0
    %p262 = por %p260, %p261
    %s263 = ssub.s32 %s30, %s37
    %p264 = scmp.eq.s32.totalorder %s263, 0
    %s266 = sadd.s32 %s265, 1
    %s267 = scalar_select %p264, %s265, %s266
    %p270 = pneg %p264
    %p271 = scmp.eq.s32.totalorder %s22, 3
    %p272 = por %p270, %p271
    %p273 = scmp.ne.s32.totalorder %s265, %s268
    %p274 = scmp.eq.s32.totalorder %s22, 0
    %p275 = por %p273, %p274
    %p276 = scmp.ne.s32.totalorder %s265, %s268
    %p277 = scmp.eq.s32.totalorder %s27, 3
    %p278 = por %p276, %p277
    %p279 = scmp.ne.s32.totalorder %s268, %s269
    %p280 = scmp.eq.s32.totalorder %s27, 0
    %p281 = por %p279, %p280
    %p282 = scmp.ne.s32.totalorder %s268, %s269
    %p283 = scmp.eq.s32.totalorder %s28, 3
    %p284 = por %p282, %p283
    %p286 = scmp.ne.s32.totalorder %s269, %s285
    %p287 = scmp.eq.s32.totalorder %s28, 0
    %p288 = por %p286, %p287
    %s289 = ssub.s32 %s30, %s37
    %p290 = scmp.eq.s32.totalorder %s289, 0
    %s292 = sadd.s32 %s291, 1
    %s293 = scalar_select %p290, %s291, %s292
    %p296 = pneg %p290
    %p297 = scmp.eq.s32.totalorder %s22, 3
    %p298 = por %p296, %p297
    %p299 = scmp.ne.s32.totalorder %s291, %s294
    %p300 = scmp.eq.s32.totalorder %s22, 0
    %p301 = por %p299, %p300
    %p302 = scmp.ne.s32.totalorder %s291, %s294
    %p303 = scmp.eq.s32.totalorder %s27, 3
    %p304 = por %p302, %p303
    %p305 = scmp.ne.s32.totalorder %s294, %s295
    %p306 = scmp.eq.s32.totalorder %s27, 0
    %p307 = por %p305, %p306
    %p308 = scmp.ne.s32.totalorder %s294, %s295
    %p309 = scmp.eq.s32.totalorder %s28, 3
    %p310 = por %p308, %p309
    %p312 = scmp.ne.s32.totalorder %s295, %s311
    %p313 = scmp.eq.s32.totalorder %s28, 0
    %p314 = por %p312, %p313
    %s315 = ssub.s32 %s30, %s37
    %p316 = scmp.eq.s32.totalorder %s315, 0
    %s318 = sadd.s32 %s317, 1
    %s319 = scalar_select %p316, %s317, %s318
    %p322 = pneg %p316
    %p323 = scmp.eq.s32.totalorder %s22, 3
    %p324 = por %p322, %p323
    %p325 = scmp.ne.s32.totalorder %s317, %s320
    %p326 = scmp.eq.s32.totalorder %s22, 0
    %p327 = por %p325, %p326
    %p328 = scmp.ne.s32.totalorder %s317, %s320
    %p329 = scmp.eq.s32.totalorder %s27, 3
    %p330 = por %p328, %p329
    %p331 = scmp.ne.s32.totalorder %s320, %s321
    %p332 = scmp.eq.s32.totalorder %s27, 0
    %p333 = por %p331, %p332
    %p334 = scmp.ne.s32.totalorder %s320, %s321
    %p335 = scmp.eq.s32.totalorder %s28, 3
    %p336 = por %p334, %p335
    %p338 = scmp.ne.s32.totalorder %s321, %s337
    %p339 = scmp.eq.s32.totalorder %s28, 0
    %p340 = por %p338, %p339
    %s341 = ssub.s32 %s30, %s37
    %p342 = scmp.eq.s32.totalorder %s341, 0
    %s344 = sadd.s32 %s343, 1
    %s345 = scalar_select %p342, %s343, %s344
    %p348 = pneg %p342
    %p349 = scmp.eq.s32.totalorder %s22, 3
    %p350 = por %p348, %p349
    %p351 = scmp.ne.s32.totalorder %s343, %s346
    %p352 = scmp.eq.s32.totalorder %s22, 0
    %p353 = por %p351, %p352
    %p354 = scmp.ne.s32.totalorder %s343, %s346
    %p355 = scmp.eq.s32.totalorder %s27, 3
    %p356 = por %p354, %p355
    %p357 = scmp.ne.s32.totalorder %s346, %s347
    %p358 = scmp.eq.s32.totalorder %s27, 0
    %p359 = por %p357, %p358
    %p360 = scmp.ne.s32.totalorder %s346, %s347
    %p361 = scmp.eq.s32.totalorder %s28, 3
    %p362 = por %p360, %p361
    %p364 = scmp.ne.s32.totalorder %s347, %s363
    %p365 = scmp.eq.s32.totalorder %s28, 0
    %p366 = por %p364, %p365
    %s367 = ssub.s32 %s29, %s41
    %p368 = scmp.eq.s32.totalorder %s367, 0
    %s370 = sadd.s32 %s369, 1
    %s371 = scalar_select %p368, %s369, %s370
    %p374 = pneg %p368
    %p375 = scmp.eq.s32.totalorder %s22, 3
    %p376 = por %p374, %p375
    %p377 = scmp.ne.s32.totalorder %s369, %s372
    %p378 = scmp.eq.s32.totalorder %s22, 0
    %p379 = por %p377, %p378
    %p380 = scmp.ne.s32.totalorder %s369, %s372
    %p381 = scmp.eq.s32.totalorder %s27, 3
    %p382 = por %p380, %p381
    %p383 = scmp.ne.s32.totalorder %s372, %s373
    %p384 = scmp.eq.s32.totalorder %s27, 0
    %p385 = por %p383, %p384
    %p386 = scmp.ne.s32.totalorder %s372, %s373
    %p387 = scmp.eq.s32.totalorder %s28, 3
    %p388 = por %p386, %p387
    %p390 = scmp.ne.s32.totalorder %s373, %s389
    %p391 = scmp.eq.s32.totalorder %s28, 0
    %p392 = por %p390, %p391
    %s394 = sadd.s32 %s393, 1
    %p397 = scmp.eq.s32.totalorder %s22, 3
    %p398 = scmp.ne.s32.totalorder %s393, %s395
    %p399 = scmp.eq.s32.totalorder %s22, 0
    %p400 = por %p398, %p399
    %p401 = scmp.ne.s32.totalorder %s393, %s395
    %p402 = scmp.eq.s32.totalorder %s27, 3
    %p403 = por %p401, %p402
    %p404 = scmp.ne.s32.totalorder %s395, %s396
    %p405 = scmp.eq.s32.totalorder %s27, 0
    %p406 = por %p404, %p405
    %p407 = scmp.ne.s32.totalorder %s395, %s396
    %p408 = scmp.eq.s32.totalorder %s28, 3
    %p409 = por %p407, %p408
    %p411 = scmp.ne.s32.totalorder %s396, %s410
    %p412 = scmp.eq.s32.totalorder %s28, 0
    %p413 = por %p411, %p412
    %s415 = sadd.s32 %s414, 1
    %p418 = scmp.eq.s32.totalorder %s22, 3
    %p419 = scmp.ne.s32.totalorder %s414, %s416
    %p420 = scmp.eq.s32.totalorder %s22, 0
    %p421 = por %p419, %p420
    %p422 = scmp.ne.s32.totalorder %s414, %s416
    %p423 = scmp.eq.s32.totalorder %s27, 3
    %p424 = por %p422, %p423
    %p425 = scmp.ne.s32.totalorder %s416, %s417
    %p426 = scmp.eq.s32.totalorder %s27, 0
    %p427 = por %p425, %p426
    %p428 = scmp.ne.s32.totalorder %s416, %s417
    %p429 = scmp.eq.s32.totalorder %s28, 3
    %p430 = por %p428, %p429
    %p432 = scmp.ne.s32.totalorder %s417, %s431
    %p433 = scmp.eq.s32.totalorder %s28, 0
    %p434 = por %p432, %p433
    %s435 = ssub.s32 %s29, %s41
    %p436 = scmp.eq.s32.totalorder %s435, 0
    %s438 = sadd.s32 %s437, 1
    %s439 = scalar_select %p436, %s437, %s438
    %p442 = pneg %p436
    %p443 = scmp.eq.s32.totalorder %s22, 3
    %p444 = por %p442, %p443
    %p445 = scmp.ne.s32.totalorder %s437, %s440
    %p446 = scmp.eq.s32.totalorder %s22, 0
    %p447 = por %p445, %p446
    %p448 = scmp.ne.s32.totalorder %s437, %s440
    %p449 = scmp.eq.s32.totalorder %s27, 3
    %p450 = por %p448, %p449
    %p451 = scmp.ne.s32.totalorder %s440, %s441
    %p452 = scmp.eq.s32.totalorder %s27, 0
    %p453 = por %p451, %p452
    %p454 = scmp.ne.s32.totalorder %s440, %s441
    %p455 = scmp.eq.s32.totalorder %s28, 3
    %p456 = por %p454, %p455
    %p458 = scmp.ne.s32.totalorder %s441, %s457
    %p459 = scmp.eq.s32.totalorder %s28, 0
    %p460 = por %p458, %p459
    %p461 = scmp.le.s32.totalorder 1, %s22
    %p462 = scmp.lt.s32.totalorder %s22, 5
    %p463 = pnand %p461, %p462
    %p464 = pneg %p463
    // Predicated region
    $region9: #{_lambda_.3} parent=5 // pred_check
      _
    $region10: #{_lambda_.3} parent=5 // pred_check_branch
      %466 = sbr.rel (%p463) target = $region12
    $region11: #{_lambda_.3} parent=5 // pred_region
      %s467 = ssub.s32 %s22, 1
      // Predicated region
      $region13: #{_lambda_.3} parent=11 // pred_check
        %p468 = pneg %p81
      $region14: #{_lambda_.3} parent=11 // pred_check_branch
        %470 = sbr.rel (%p468) target = $region16
      $region15: #{_lambda_.3} parent=11 // pred_region
        _
      $region16: #{_lambda_.3} parent=11 // pred_fallthru
        _
      // Predicated region
      $region17: #{_lambda_.3} parent=11 // pred_check
        %p471 = pneg %p102
      $region18: #{_lambda_.3} parent=11 // pred_check_branch
        %473 = sbr.rel (%p471) target = $region20
      $region19: #{_lambda_.3} parent=11 // pred_region
        _
      $region20: #{_lambda_.3} parent=11 // pred_fallthru
        _
      // Predicated region
      $region21: #{_lambda_.3} parent=11 // pred_check
        %p474 = pneg %p123
      $region22: #{_lambda_.3} parent=11 // pred_check_branch
        %476 = sbr.rel (%p474) target = $region24
      $region23: #{_lambda_.3} parent=11 // pred_region
        _
      $region24: #{_lambda_.3} parent=11 // pred_fallthru
        _
      // Predicated region
      $region25: #{_lambda_.3} parent=11 // pred_check
        %p477 = pneg %p406
      $region26: #{_lambda_.3} parent=11 // pred_check_branch
        %479 = sbr.rel (%p477) target = $region28
      $region27: #{_lambda_.3} parent=11 // pred_region
        _
      $region28: #{_lambda_.3} parent=11 // pred_fallthru
        _
      // Predicated region
      $region29: #{_lambda_.3} parent=11 // pred_check
        %p480 = pneg %p427
      $region30: #{_lambda_.3} parent=11 // pred_check_branch
        %482 = sbr.rel (%p480) target = $region32
      $region31: #{_lambda_.3} parent=11 // pred_region
        _
      $region32: #{_lambda_.3} parent=11 // pred_fallthru
        _
    $region12: #{_lambda_.3} parent=5 // pred_fallthru
      _
    %p483 = scmp.lt.s32.totalorder %s22, 4
    // Predicated region
    $region33: #{_lambda_.3} parent=5 // pred_check
      %p484 = pneg %p483
    $region34: #{_lambda_.3} parent=5 // pred_check_branch
      %486 = sbr.rel (%p484) target = $region36
    $region35: #{_lambda_.3} parent=5 // pred_region
      // Predicated region
      $region37: #{_lambda_.3} parent=35 // pred_check
        %p487 = pneg %p54
      $region38: #{_lambda_.3} parent=35 // pred_check_branch
        %489 = sbr.rel (%p487) target = $region40
      $region39: #{_lambda_.3} parent=35 // pred_region
        %p490 = scmp.lt.s32.totalorder %s29, 1
        %s491 = scalar_select %p490, %s29, 1
        %s492 = smul.addr %s491, 8
        %s493 = smul.addr %s492, 8
        %s494 = scalar_lea.vmem %s0, %s493
      $region40: #{_lambda_.3} parent=35 // pred_fallthru
        _
      // Predicated region
      $region41: #{_lambda_.3} parent=35 // pred_check
        %p495 = pneg %p145
      $region42: #{_lambda_.3} parent=35 // pred_check_branch
        %497 = sbr.rel (%p495) target = $region44
      $region43: #{_lambda_.3} parent=35 // pred_region
        %p498 = scmp.lt.s32.totalorder %s29, 1
        %s499 = scalar_select %p498, %s29, 1
        %p500 = scmp.lt.s32.totalorder %s30, 1
        %s501 = scalar_select %p500, %s30, 1
        %s502 = smul.addr %s499, 2
        %s503 = sadd.s32 %s501, %s502
        %s504 = smul.addr %s503, 8
        %s505 = scalar_lea.vmem %s4, %s504
      $region44: #{_lambda_.3} parent=35 // pred_fallthru
        _
      // Predicated region
      $region45: #{_lambda_.3} parent=35 // pred_check
        %p506 = pneg %p171
      $region46: #{_lambda_.3} parent=35 // pred_check_branch
        %508 = sbr.rel (%p506) target = $region48
      $region47: #{_lambda_.3} parent=35 // pred_region
        %p509 = scmp.lt.s32.totalorder %s30, 1
        %s510 = scalar_select %p509, %s30, 1
        %s511 = smul.addr %s510, 16
        %s512 = smul.addr %s511, 4
        %s513 = scalar_lea.vmem %s5, %s512
      $region48: #{_lambda_.3} parent=35 // pred_fallthru
        _
      // Predicated region
      $region49: #{_lambda_.3} parent=35 // pred_check
        %p514 = pneg %p197
      $region50: #{_lambda_.3} parent=35 // pred_check_branch
        %516 = sbr.rel (%p514) target = $region52
      $region51: #{_lambda_.3} parent=35 // pred_region
        %p517 = scmp.lt.s32.totalorder %s30, 1
        %s518 = scalar_select %p517, %s30, 1
        %s519 = smul.addr %s518, 2
        %s520 = scalar_lea.vmem %s6, %s519
      $region52: #{_lambda_.3} parent=35 // pred_fallthru
        _
      // Predicated region
      $region53: #{_lambda_.3} parent=35 // pred_check
        %p521 = pneg %p223
      $region54: #{_lambda_.3} parent=35 // pred_check_branch
        %523 = sbr.rel (%p521) target = $region56
      $region55: #{_lambda_.3} parent=35 // pred_region
        %p524 = scmp.lt.s32.totalorder %s30, 1
        %s525 = scalar_select %p524, %s30, 1
        %s526 = smul.addr %s525, 8
        %s527 = smul.addr %s526, 4
        %s528 = scalar_lea.vmem %s7, %s527
      $region56: #{_lambda_.3} parent=35 // pred_fallthru
        _
      // Predicated region
      $region57: #{_lambda_.3} parent=35 // pred_check
        %p529 = pneg %p249
      $region58: #{_lambda_.3} parent=35 // pred_check_branch
        %531 = sbr.rel (%p529) target = $region60
      $region59: #{_lambda_.3} parent=35 // pred_region
        %p532 = scmp.lt.s32.totalorder %s30, 1
        %s533 = scalar_select %p532, %s30, 1
        %s534 = scalar_lea.vmem %s8, %s533
      $region60: #{_lambda_.3} parent=35 // pred_fallthru
        _
      // Predicated region
      $region61: #{_lambda_.3} parent=35 // pred_check
        %p535 = pneg %p275
      $region62: #{_lambda_.3} parent=35 // pred_check_branch
        %537 = sbr.rel (%p535) target = $region64
      $region63: #{_lambda_.3} parent=35 // pred_region
        %p538 = scmp.lt.s32.totalorder %s30, 1
        %s539 = scalar_select %p538, %s30, 1
        %s540 = smul.addr %s539, 16
        %s541 = smul.addr %s540, 4
        %s542 = scalar_lea.vmem %s9, %s541
      $region64: #{_lambda_.3} parent=35 // pred_fallthru
        _
      // Predicated region
      $region65: #{_lambda_.3} parent=35 // pred_check
        %p543 = pneg %p301
      $region66: #{_lambda_.3} parent=35 // pred_check_branch
        %545 = sbr.rel (%p543) target = $region68
      $region67: #{_lambda_.3} parent=35 // pred_region
        %p546 = scmp.lt.s32.totalorder %s30, 1
        %s547 = scalar_select %p546, %s30, 1
        %s548 = smul.addr %s547, 2
        %s549 = scalar_lea.vmem %s10, %s548
      $region68: #{_lambda_.3} parent=35 // pred_fallthru
        _
      // Predicated region
      $region69: #{_lambda_.3} parent=35 // pred_check
        %p550 = pneg %p327
      $region70: #{_lambda_.3} parent=35 // pred_check_branch
        %552 = sbr.rel (%p550) target = $region72
      $region71: #{_lambda_.3} parent=35 // pred_region
        %p553 = scmp.lt.s32.totalorder %s30, 1
        %s554 = scalar_select %p553, %s30, 1
        %s555 = smul.addr %s554, 32
        %s556 = smul.addr %s555, 4
        %s557 = scalar_lea.vmem %s11, %s556
      $region72: #{_lambda_.3} parent=35 // pred_fallthru
        _
      // Predicated region
      $region73: #{_lambda_.3} parent=35 // pred_check
        %p558 = pneg %p353
      $region74: #{_lambda_.3} parent=35 // pred_check_branch
        %560 = sbr.rel (%p558) target = $region76
      $region75: #{_lambda_.3} parent=35 // pred_region
        %p561 = scmp.lt.s32.totalorder %s30, 1
        %s562 = scalar_select %p561, %s30, 1
        %s563 = scalar_lea.vmem %s12, %s562
      $region76: #{_lambda_.3} parent=35 // pred_fallthru
        _
      // Predicated region
      $region77: #{_lambda_.3} parent=35 // pred_check
        %p564 = pneg %p379
      $region78: #{_lambda_.3} parent=35 // pred_check_branch
        %566 = sbr.rel (%p564) target = $region80
      $region79: #{_lambda_.3} parent=35 // pred_region
        %p567 = scmp.lt.s32.totalorder %s29, 1
        %s568 = scalar_select %p567, %s29, 1
        %s569 = smul.addr %s568, 2
        %s570 = scalar_lea.vmem %s13, %s569
      $region80: #{_lambda_.3} parent=35 // pred_fallthru
        _
    $region36: #{_lambda_.3} parent=5 // pred_fallthru
      _
    %p571 = scmp.le.s32.totalorder 1, %s22
    %p572 = scmp.lt.s32.totalorder %s22, 5
    %p573 = pnand %p571, %p572
    %p574 = pneg %p573
    // Predicated region
    $region81: #{_lambda_.3} parent=5 // pred_check
      _
    $region82: #{_lambda_.3} parent=5 // pred_check_branch
      %576 = sbr.rel (%p573) target = $region84
    $region83: #{_lambda_.3} parent=5 // pred_region
      %s577 = ssub.s32 %s22, 1
      %p578 = scmp.lt.s32.totalorder %s31, 1
      %s579 = scalar_select %p578, %s31, 1
      %s580 = smul.addr %s579, 8
      %s581 = smul.addr %s580, 8
      %s582 = scalar_lea.vmem %s0, %s581
      %p583 = pneg %p60
      %p584 = pneg %p57
      %p585 = pneg %p81
      %p586 = pneg %p78
      %p587 = pneg %p102
      %p588 = pneg %p99
      %p589 = pneg %p123
      %p590 = pneg %p120
      %p591 = scmp.lt.s32.totalorder %s31, 1
      %s592 = scalar_select %p591, %s31, 1
      %p593 = scmp.lt.s32.totalorder %s32, 1
      %s594 = scalar_select %p593, %s32, 1
      %s595 = smul.addr %s592, 2
      %s596 = sadd.s32 %s594, %s595
      %s597 = smul.addr %s596, 8
      %s598 = scalar_lea.vmem %s4, %s597
      %p599 = pneg %p151
      %p600 = pneg %p148
      %p601 = scmp.lt.s32.totalorder %s32, 1
      %s602 = scalar_select %p601, %s32, 1
      %s603 = smul.addr %s602, 16
      %s604 = smul.addr %s603, 4
      %s605 = scalar_lea.vmem %s5, %s604
      %p606 = pneg %p177
      %p607 = pneg %p174
      %p608 = scmp.lt.s32.totalorder %s32, 1
      %s609 = scalar_select %p608, %s32, 1
      %s610 = smul.addr %s609, 2
      %s611 = scalar_lea.vmem %s6, %s610
      %p612 = pneg %p203
      %p613 = pneg %p200
      %p614 = scmp.lt.s32.totalorder %s32, 1
      %s615 = scalar_select %p614, %s32, 1
      %s616 = smul.addr %s615, 8
      %s617 = smul.addr %s616, 4
      %s618 = scalar_lea.vmem %s7, %s617
      %p619 = pneg %p229
      %p620 = pneg %p226
      %p621 = scmp.lt.s32.totalorder %s32, 1
      %s622 = scalar_select %p621, %s32, 1
      %s623 = scalar_lea.vmem %s8, %s622
      %p624 = pneg %p255
      %p625 = pneg %p252
      %p626 = scmp.lt.s32.totalorder %s32, 1
      %s627 = scalar_select %p626, %s32, 1
      %s628 = smul.addr %s627, 16
      %s629 = smul.addr %s628, 4
      %s630 = scalar_lea.vmem %s9, %s629
      %p631 = pneg %p281
      %p632 = pneg %p278
      %p633 = scmp.lt.s32.totalorder %s32, 1
      %s634 = scalar_select %p633, %s32, 1
      %s635 = smul.addr %s634, 2
      %s636 = scalar_lea.vmem %s10, %s635
      %p637 = pneg %p307
      %p638 = pneg %p304
      %p639 = scmp.lt.s32.totalorder %s32, 1
      %s640 = scalar_select %p639, %s32, 1
      %s641 = smul.addr %s640, 32
      %s642 = smul.addr %s641, 4
      %s643 = scalar_lea.vmem %s11, %s642
      %p644 = pneg %p333
      %p645 = pneg %p330
      %p646 = scmp.lt.s32.totalorder %s32, 1
      %s647 = scalar_select %p646, %s32, 1
      %s648 = scalar_lea.vmem %s12, %s647
      %p649 = pneg %p359
      %p650 = pneg %p356
      %p651 = scmp.lt.s32.totalorder %s31, 1
      %s652 = scalar_select %p651, %s31, 1
      %s653 = smul.addr %s652, 2
      %s654 = scalar_lea.vmem %s13, %s653
      %p655 = pneg %p385
      %p656 = pneg %p382
      %p657 = pneg %p406
      %p658 = pneg %p403
      %p659 = pneg %p427
      %p660 = pneg %p424
      %p661 = pneg %p453
      %p662 = pneg %p450
      %p663 = scmp.lt.s32.totalorder %s31, 1
      %s664 = scalar_select %p663, %s31, 1
      %s665 = smul.addr %s664, 8
      %s666 = smul.addr %s665, 8
      %s667 = scalar_lea.vmem %s16, %s666
      %p668 = scmp.lt.s32.totalorder %s31, 1
      %s669 = scalar_select %p668, %s31, 1
      %s670 = smul.addr %s669, 8
      %s671 = smul.addr %s670, 8
      %s672 = scalar_lea.vmem %s0, %s671
      %p673 = scmp.lt.s32.totalorder %s31, 1
      %s674 = scalar_select %p673, %s31, 1
      %p675 = scmp.lt.s32.totalorder %s32, 1
      %s676 = scalar_select %p675, %s32, 1
      %s677 = smul.addr %s674, 2
      %s678 = sadd.s32 %s676, %s677
      %s679 = smul.addr %s678, 8
      %s680 = scalar_lea.vmem %s4, %s679
      %p681 = scmp.lt.s32.totalorder %s32, 1
      %s682 = scalar_select %p681, %s32, 1
      %s683 = smul.addr %s682, 16
      %s684 = smul.addr %s683, 4
      %s685 = scalar_lea.vmem %s5, %s684
      %p686 = scmp.lt.s32.totalorder %s32, 1
      %s687 = scalar_select %p686, %s32, 1
      %s688 = smul.addr %s687, 2
      %s689 = scalar_lea.vmem %s6, %s688
      %p690 = scmp.lt.s32.totalorder %s32, 1
      %s691 = scalar_select %p690, %s32, 1
      %s692 = smul.addr %s691, 8
      %s693 = smul.addr %s692, 4
      %s694 = scalar_lea.vmem %s7, %s693
      %p695 = scmp.lt.s32.totalorder %s32, 1
      %s696 = scalar_select %p695, %s32, 1
      %s697 = scalar_lea.vmem %s8, %s696
      %p698 = scmp.lt.s32.totalorder %s32, 1
      %s699 = scalar_select %p698, %s32, 1
      %s700 = smul.addr %s699, 16
      %s701 = smul.addr %s700, 4
      %s702 = scalar_lea.vmem %s9, %s701
      %p703 = scmp.lt.s32.totalorder %s32, 1
      %s704 = scalar_select %p703, %s32, 1
      %s705 = smul.addr %s704, 2
      %s706 = scalar_lea.vmem %s10, %s705
      %p707 = scmp.lt.s32.totalorder %s32, 1
      %s708 = scalar_select %p707, %s32, 1
      %s709 = smul.addr %s708, 32
      %s710 = smul.addr %s709, 4
      %s711 = scalar_lea.vmem %s11, %s710
      %p712 = scmp.lt.s32.totalorder %s32, 1
      %s713 = scalar_select %p712, %s32, 1
      %s714 = scalar_lea.vmem %s12, %s713
      %p715 = scmp.lt.s32.totalorder %s31, 1
      %s716 = scalar_select %p715, %s31, 1
      %s717 = smul.addr %s716, 2
      %s718 = scalar_lea.vmem %s13, %s717
      %p719 = scmp.lt.s32.totalorder %s31, 1
      %s720 = scalar_select %p719, %s31, 1
      %s721 = smul.addr %s720, 8
      %s722 = smul.addr %s721, 8
      %s723 = scalar_lea.vmem %s16, %s722
      %p725 = scmp.eq.s32.totalorder %s32, 0
      // Predicated region
      $region85: #{_lambda_.3} parent=83 // pred_check
        %p726 = pneg %p725
      $region86: #{_lambda_.3} parent=83 // pred_check_branch
        %728 = sbr.rel (%p726) target = $region88
      $region87: #{_lambda_.3} parent=83 // pred_region
        %v729 = vld [vmem:[%s672] sm:$0xff]
        %v730 = vld [vmem:[%s672 + $0x8] sm:$0xff]
        %v731 = vld [vmem:[%s672 + $0x10] sm:$0xff]
        %v732 = vld [vmem:[%s672 + $0x18] sm:$0xff]
        %v733 = vld [vmem:[%s672 + $0x20] sm:$0xff]
        %v734 = vld [vmem:[%s672 + $0x28] sm:$0xff]
        %v735 = vld [vmem:[%s672 + $0x30] sm:$0xff]
        %v736 = vld [vmem:[%s672 + $0x38] sm:$0xff]
        %v737 = vpack.c.bf16 %v730, %v729
        %v738 = vpack.c.bf16 %v732, %v731
        %v739 = vpack.c.bf16 %v734, %v733
        %v740 = vpack.c.bf16 %v736, %v735
        %v741 = vld [vmem:[%s2] sm:$0xf]
        %v742 = vld [vmem:[%s2 + $0x4] sm:$0xf]
        %v743 = vld [vmem:[%s3] sm:$0x1]
        %v745 = vlaneseq
        %v746 = vshrl.u32 %v745, 7
        %v747 = vsub.s32 0, %v746
        %v748 = vrot.slane %v743, %v747
        %v752 = vunpack.c.l.b16 %v741
        %v753 = vunpack.c.l.b16 %v742
        %v754 = vpack.c.b16 %v753, %v752
        %vm756 = vcmask 130048
        %v758 = vsel %vm756, %v737, 0
        %v761 = vsel %vm756, %v738, 0
        %v764 = vsel %vm756, %v739, 0
        %v767 = vsel %vm756, %v740, 0
        %769 = vmatprep.subr.bf16.mxu0 0
        %770 = vmatpush1.bf16.msra.mxu0 %v754
        %771 = vmatprep.subr.bf16.mxu0 0
        %772 = vmatpush1.bf16.msra.mxu0 0
        %773 = vmatprep.subr.bf16.mxu0 0
        %774 = vmatpush1.bf16.msra.mxu0 0
        %775 = vmatprep.subr.bf16.mxu0 0
        %776 = vmatpush1.bf16.msra.mxu0 0
        %777 = vmatprep.subr.bf16.mxu0 0
        %778 = vmatpush1.bf16.msra.mxu0 0
        %779 = vmatprep.subr.bf16.mxu0 0
        %780 = vmatpush1.bf16.msra.mxu0 0
        %781 = vmatprep.subr.bf16.mxu0 0
        %782 = vmatpush1.bf16.msra.mxu0 0
        %783 = vmatprep.subr.bf16.mxu0 0
        %784 = vmatpush1.bf16.msra.mxu0 0
        %785 = vmatprep.subr.bf16.mxu0 0
        %786 = vmatpush1.bf16.msra.mxu0 0
        %787 = vmatprep.subr.bf16.mxu0 0
        %788 = vmatpush1.bf16.msra.mxu0 0
        %789 = vmatprep.subr.bf16.mxu0 0
        %790 = vmatpush1.bf16.msra.mxu0 0
        %791 = vmatprep.subr.bf16.mxu0 0
        %792 = vmatpush1.bf16.msra.mxu0 0
        %793 = vmatprep.subr.bf16.mxu0 0
        %794 = vmatpush1.bf16.msra.mxu0 0
        %795 = vmatprep.subr.bf16.mxu0 0
        %796 = vmatpush1.bf16.msra.mxu0 0
        %797 = vmatprep.subr.bf16.mxu0 0
        %798 = vmatpush1.bf16.msra.mxu0 0
        %799 = vmatprep.subr.bf16.mxu0 0
        %800 = vmatpush1.bf16.msra.mxu0 0
        %801 = vmatprep.mubr.bf16.mxu0 0
        %802 = vmatmul.mubr.bf16.gmra.mrb[0].mxu0 %v758
        %v803 = vpop.f32.mrb[0].mxu0
        %v804 = vadd.f32 %v748, %v803
        %v805 = vpop.f32.mrb[0].mxu0
        %v806 = vpop.f32.mrb[0].mxu0
        %v807 = vadd.f32 %v748, %v806
        %v808 = vpop.f32.mrb[0].mxu0
        %809 = vmatprep.mubr.bf16.mxu0 0
        %810 = vmatmul.mubr.bf16.gmra.mrb[0].mxu0 %v761
        %v811 = vpop.f32.mrb[0].mxu0
        %v812 = vadd.f32 %v748, %v811
        %v813 = vpop.f32.mrb[0].mxu0
        %v814 = vpop.f32.mrb[0].mxu0
        %v815 = vadd.f32 %v748, %v814
        %v816 = vpop.f32.mrb[0].mxu0
        %817 = vmatprep.mubr.bf16.mxu0 0
        %818 = vmatmul.mubr.bf16.gmra.mrb[0].mxu0 %v764
        %v819 = vpop.f32.mrb[0].mxu0
        %v820 = vadd.f32 %v748, %v819
        %v821 = vpop.f32.mrb[0].mxu0
        %v822 = vpop.f32.mrb[0].mxu0
        %v823 = vadd.f32 %v748, %v822
        %v824 = vpop.f32.mrb[0].mxu0
        %825 = vmatprep.mubr.bf16.mxu0 0
        %826 = vmatmul.mubr.bf16.gmra.mrb[0].mxu0 %v767
        %v827 = vpop.f32.mrb[0].mxu0
        %v828 = vadd.f32 %v748, %v827
        %v829 = vpop.f32.mrb[0].mxu0
        %v830 = vpop.f32.mrb[0].mxu0
        %v831 = vadd.f32 %v748, %v830
        %v832 = vpop.f32.mrb[0].mxu0
        %833 = vdwg.mxu0
        %v834 = vld [vmem:[%s1] sm:$0xff]
        %v835 = vld [vmem:[%s1 + $0x8] sm:$0xff]
        %v836 = vld [vmem:[%s1 + $0x10] sm:$0xff]
        %v837 = vld [vmem:[%s1 + $0x18] sm:$0xff]
        %v838 = vld [vmem:[%s1 + $0x20] sm:$0xff]
        %v839 = vld [vmem:[%s1 + $0x28] sm:$0xff]
        %v840 = vld [vmem:[%s1 + $0x30] sm:$0xff]
        %v841 = vld [vmem:[%s1 + $0x38] sm:$0xff]
        %v842 = vadd.f32 %v804, %v834
        %v843 = vadd.f32 %v807, %v835
        %v844 = vadd.f32 %v812, %v836
        %v845 = vadd.f32 %v815, %v837
        %v846 = vadd.f32 %v820, %v838
        %v847 = vadd.f32 %v823, %v839
        %v848 = vadd.f32 %v828, %v840
        %v849 = vadd.f32 %v831, %v841
        %vm850 = vcmask 523264
        %851 = vst.msk [vmem:[#allocation2] sm:$0xff] %vm850, %v842
        %852 = vst.msk [vmem:[#allocation2 + $0x8] sm:$0xff] %vm850, %v843
        %853 = vst.msk [vmem:[#allocation2 + $0x10] sm:$0xff] %vm850, %v844
        %854 = vst.msk [vmem:[#allocation2 + $0x18] sm:$0xff] %vm850, %v845
        %855 = vst.msk [vmem:[#allocation2 + $0x20] sm:$0xff] %vm850, %v846
        %856 = vst.msk [vmem:[#allocation2 + $0x28] sm:$0xff] %vm850, %v847
        %857 = vst.msk [vmem:[#allocation2 + $0x30] sm:$0xff] %vm850, %v848
        %858 = vst.msk [vmem:[#allocation2 + $0x38] sm:$0xff] %vm850, %v849
      $region88: #{_lambda_.3} parent=83 // pred_fallthru
        _
      %v859 = vld [vmem:[#allocation2] sm:$0xff]
      %v860 = vld [vmem:[#allocation2 + $0x8] sm:$0xff]
      %v861 = vld [vmem:[#allocation2 + $0x10] sm:$0xff]
      %v862 = vld [vmem:[#allocation2 + $0x18] sm:$0xff]
      %v863 = vld [vmem:[#allocation2 + $0x20] sm:$0xff]
      %v864 = vld [vmem:[#allocation2 + $0x28] sm:$0xff]
      %v865 = vld [vmem:[#allocation2 + $0x30] sm:$0xff]
      %v866 = vld [vmem:[#allocation2 + $0x38] sm:$0xff]
      %v867 = vld [vmem:[%s680] sm:$0x3f]
      %vm868 = vcmask 523264
      %v869 = vsel %vm868, %v859, 0.0
      %870 = vadd.xlane.f32.xlu0 %v869
      %v871 = vpop.xlane.xlu0 %870
      %v872 = vsel %vm868, %v860, 0.0
      %873 = vadd.xlane.f32.xlu0 %v872
      %v874 = vpop.xlane.xlu0 %873
      %v875 = vsel %vm868, %v861, 0.0
      %876 = vadd.xlane.f32.xlu0 %v875
      %v877 = vpop.xlane.xlu0 %876
      %v878 = vsel %vm868, %v862, 0.0
      %879 = vadd.xlane.f32.xlu0 %v878
      %v880 = vpop.xlane.xlu0 %879
      %v881 = vsel %vm868, %v863, 0.0
      %882 = vadd.xlane.f32.xlu0 %v881
      %v883 = vpop.xlane.xlu0 %882
      %v884 = vsel %vm868, %v864, 0.0
      %885 = vadd.xlane.f32.xlu0 %v884
      %v886 = vpop.xlane.xlu0 %885
      %v887 = vsel %vm868, %v865, 0.0
      %888 = vadd.xlane.f32.xlu0 %v887
      %v889 = vpop.xlane.xlu0 %888
      %v890 = vsel %vm868, %v866, 0.0
      %891 = vadd.xlane.f32.xlu0 %v890
      %v892 = vpop.xlane.xlu0 %891
      %v893 = vrcp.pop 64.0
      %v894 = vmul.f32 %v871, %v893
      %v895 = vmul.f32 %v874, %v893
      %v896 = vmul.f32 %v877, %v893
      %v897 = vmul.f32 %v880, %v893
      %v898 = vmul.f32 %v883, %v893
      %v899 = vmul.f32 %v886, %v893
      %v900 = vmul.f32 %v889, %v893
      %v901 = vmul.f32 %v892, %v893
      %v902 = vsub.f32 %v859, %v894
      %v903 = vsub.f32 %v860, %v895
      %v904 = vsub.f32 %v861, %v896
      %v905 = vsub.f32 %v862, %v897
      %v906 = vsub.f32 %v863, %v898
      %v907 = vsub.f32 %v864, %v899
      %v908 = vsub.f32 %v865, %v900
      %v909 = vsub.f32 %v866, %v901
      %v910 = vmul.f32 %v902, %v902
      %v911 = vmul.f32 %v903, %v903
      %v912 = vmul.f32 %v904, %v904
      %v913 = vmul.f32 %v905, %v905
      %v914 = vmul.f32 %v906, %v906
      %v915 = vmul.f32 %v907, %v907
      %v916 = vmul.f32 %v908, %v908
      %v917 = vmul.f32 %v909, %v909
      %v918 = vsel %vm868, %v910, 0.0
      %919 = vadd.xlane.f32.xlu0 %v918
      %v920 = vpop.xlane.xlu0 %919
      %v921 = vsel %vm868, %v911, 0.0
      %922 = vadd.xlane.f32.xlu0 %v921
      %v923 = vpop.xlane.xlu0 %922
      %v924 = vsel %vm868, %v912, 0.0
      %925 = vadd.xlane.f32.xlu0 %v924
      %v926 = vpop.xlane.xlu0 %925
      %v927 = vsel %vm868, %v913, 0.0
      %928 = vadd.xlane.f32.xlu0 %v927
      %v929 = vpop.xlane.xlu0 %928
      %v930 = vsel %vm868, %v914, 0.0
      %931 = vadd.xlane.f32.xlu0 %v930
      %v932 = vpop.xlane.xlu0 %931
      %v933 = vsel %vm868, %v915, 0.0
      %934 = vadd.xlane.f32.xlu0 %v933
      %v935 = vpop.xlane.xlu0 %934
      %v936 = vsel %vm868, %v916, 0.0
      %937 = vadd.xlane.f32.xlu0 %v936
      %v938 = vpop.xlane.xlu0 %937
      %v939 = vsel %vm868, %v917, 0.0
      %940 = vadd.xlane.f32.xlu0 %v939
      %v941 = vpop.xlane.xlu0 %940
      %v942 = vmul.f32 %v920, %v893
      %v943 = vmul.f32 %v923, %v893
      %v944 = vmul.f32 %v926, %v893
      %v945 = vmul.f32 %v929, %v893
      %v946 = vmul.f32 %v932, %v893
      %v947 = vmul.f32 %v935, %v893
      %v948 = vmul.f32 %v938, %v893
      %v949 = vmul.f32 %v941, %v893
      %v950 = vadd.f32 %v942, 1e-06
      %v951 = vadd.f32 %v943, 1e-06
      %v952 = vadd.f32 %v944, 1e-06
      %v953 = vadd.f32 %v945, 1e-06
      %v954 = vadd.f32 %v946, 1e-06
      %v955 = vadd.f32 %v947, 1e-06
      %v956 = vadd.f32 %v948, 1e-06
      %v957 = vadd.f32 %v949, 1e-06
      %v958 = vrsqrt.pop %v950
      %v959 = vrsqrt.pop %v951
      %v960 = vrsqrt.pop %v952
      %v961 = vrsqrt.pop %v953
      %v962 = vrsqrt.pop %v954
      %v963 = vrsqrt.pop %v955
      %v964 = vrsqrt.pop %v956
      %v965 = vrsqrt.pop %v957
      %v966 = vmul.f32 %v902, %v958
      %v967 = vmul.f32 %v903, %v959
      %v968 = vmul.f32 %v904, %v960
      %v969 = vmul.f32 %v905, %v961
      %v970 = vmul.f32 %v906, %v962
      %v971 = vmul.f32 %v907, %v963
      %v972 = vmul.f32 %v908, %v964
      %v973 = vmul.f32 %v909, %v965
      %v974 = vadd.f32 %v867, 1.0
      %v975 = vlaneseq
      %v976 = vshrl.u32 %v975, 7
      %v977 = vsub.s32 1, %v976
      %v978 = vrot.slane %v974, %v977
      %v979 = vmul.f32 %v966, %v978
      %v980 = vmul.f32 %v967, %v978
      %v981 = vmul.f32 %v968, %v978
      %v982 = vmul.f32 %v969, %v978
      %v983 = vmul.f32 %v970, %v978
      %v984 = vmul.f32 %v971, %v978
      %v985 = vmul.f32 %v972, %v978
      %v986 = vmul.f32 %v973, %v978
      %v987 = vlaneseq
      %v988 = vshrl.u32 %v987, 7
      %v989 = vsub.s32 0, %v988
      %v990 = vrot.slane %v867, %v989
      %v991 = vadd.f32 %v979, %v990
      %v992 = vadd.f32 %v980, %v990
      %v993 = vadd.f32 %v981, %v990
      %v994 = vadd.f32 %v982, %v990
      %v995 = vadd.f32 %v983, %v990
      %v996 = vadd.f32 %v984, %v990
      %v997 = vadd.f32 %v985, %v990
      %v998 = vadd.f32 %v986, %v990
      %v999 = vpack.c.bf16 %v992, %v991
      %v1000 = vpack.c.bf16 %v994, %v993
      %v1001 = vpack.c.bf16 %v996, %v995
      %v1002 = vpack.c.bf16 %v998, %v997
      %v1003 = vld [vmem:[%s685] sm:$0xff]
      %v1004 = vld [vmem:[%s685 + $0x8] sm:$0xff]
      %v1005 = vld [vmem:[%s685 + $0x10] sm:$0xff]
      %v1006 = vld [vmem:[%s685 + $0x18] sm:$0xff]
      %v1007 = vld [vmem:[%s685 + $0x20] sm:$0xff]
      %v1008 = vld [vmem:[%s685 + $0x28] sm:$0xff]
      %v1009 = vld [vmem:[%s685 + $0x30] sm:$0xff]
      %v1010 = vld [vmem:[%s685 + $0x38] sm:$0xff]
      %v1011 = vld [vmem:[%s689] sm:$0x3]
      %v1013 = vlaneseq
      %v1014 = vshrl.u32 %v1013, 7
      %v1015 = vsub.s32 0, %v1014
      %v1016 = vrot.slane %v1011, %v1015
      %v1017 = vlaneseq
      %v1018 = vshrl.u32 %v1017, 7
      %v1019 = vsub.s32 1, %v1018
      %v1020 = vrot.slane %v1011, %v1019
      %v1031 = vunpack.c.l.b16 %v1003
      %v1032 = vunpack.c.h.b16 %v1003
      %v1033 = vunpack.c.l.b16 %v1004
      %v1034 = vunpack.c.h.b16 %v1004
      %v1035 = vunpack.c.l.b16 %v1005
      %v1036 = vunpack.c.h.b16 %v1005
      %v1037 = vunpack.c.l.b16 %v1006
      %v1038 = vunpack.c.h.b16 %v1006
      %v1039 = vunpack.c.l.b16 %v1007
      %v1040 = vunpack.c.h.b16 %v1007
      %v1041 = vunpack.c.l.b16 %v1008
      %v1042 = vunpack.c.h.b16 %v1008
      %v1043 = vunpack.c.l.b16 %v1009
      %v1044 = vunpack.c.h.b16 %v1009
      %v1045 = vunpack.c.l.b16 %v1010
      %v1046 = vunpack.c.h.b16 %v1010
      %v1047 = vpack.c.b16 %v1033, %v1031
      %v1048 = vpack.c.b16 %v1034, %v1032
      %v1049 = vpack.c.b16 %v1037, %v1035
      %v1050 = vpack.c.b16 %v1038, %v1036
      %v1051 = vpack.c.b16 %v1041, %v1039
      %v1052 = vpack.c.b16 %v1042, %v1040
      %v1053 = vpack.c.b16 %v1045, %v1043
      %v1054 = vpack.c.b16 %v1046, %v1044
      %v1064 = vsel %vm868, %v999, 0
      %v1067 = vsel %vm868, %v1000, 0
      %v1070 = vsel %vm868, %v1001, 0
      %v1073 = vsel %vm868, %v1002, 0
      %1075 = vmatprep.subr.bf16.mxu0 %v1048
      %1076 = vmatpush1.bf16.msra.mxu0 %v1047
      %1077 = vmatprep.subr.bf16.mxu0 %v1050
      %1078 = vmatpush1.bf16.msra.mxu0 %v1049
      %1079 = vmatprep.subr.bf16.mxu0 %v1052
      %1080 = vmatpush1.bf16.msra.mxu0 %v1051
      %1081 = vmatprep.subr.bf16.mxu0 %v1054
      %1082 = vmatpush1.bf16.msra.mxu0 %v1053
      %1083 = vmatprep.subr.bf16.mxu0 0
      %1084 = vmatpush1.bf16.msra.mxu0 0
      %1085 = vmatprep.subr.bf16.mxu0 0
      %1086 = vmatpush1.bf16.msra.mxu0 0
      %1087 = vmatprep.subr.bf16.mxu0 0
      %1088 = vmatpush1.bf16.msra.mxu0 0
      %1089 = vmatprep.subr.bf16.mxu0 0
      %1090 = vmatpush1.bf16.msra.mxu0 0
      %1091 = vmatprep.subr.bf16.mxu0 0
      %1092 = vmatpush1.bf16.msra.mxu0 0
      %1093 = vmatprep.subr.bf16.mxu0 0
      %1094 = vmatpush1.bf16.msra.mxu0 0
      %1095 = vmatprep.subr.bf16.mxu0 0
      %1096 = vmatpush1.bf16.msra.mxu0 0
      %1097 = vmatprep.subr.bf16.mxu0 0
      %1098 = vmatpush1.bf16.msra.mxu0 0
      %1099 = vmatprep.subr.bf16.mxu0 0
      %1100 = vmatpush1.bf16.msra.mxu0 0
      %1101 = vmatprep.subr.bf16.mxu0 0
      %1102 = vmatpush1.bf16.msra.mxu0 0
      %1103 = vmatprep.subr.bf16.mxu0 0
      %1104 = vmatpush1.bf16.msra.mxu0 0
      %1105 = vmatprep.subr.bf16.mxu0 0
      %1106 = vmatpush1.bf16.msra.mxu0 0
      %1107 = vmatprep.mubr.bf16.mxu0 0
      %1108 = vmatmul.mubr.bf16.gmra.mrb[0].mxu0 %v1064
      %v1109 = vpop.f32.mrb[0].mxu0
      %v1110 = vadd.f32 %v1016, %v1109
      %v1111 = vpop.f32.mrb[0].mxu0
      %v1112 = vadd.f32 %v1020, %v1111
      %v1113 = vpop.f32.mrb[0].mxu0
      %v1114 = vadd.f32 %v1016, %v1113
      %v1115 = vpop.f32.mrb[0].mxu0
      %v1116 = vadd.f32 %v1020, %v1115
      %1117 = vmatprep.mubr.bf16.mxu0 0
      %1118 = vmatmul.mubr.bf16.gmra.mrb[0].mxu0 %v1067
      %v1119 = vpop.f32.mrb[0].mxu0
      %v1120 = vadd.f32 %v1016, %v1119
      %v1121 = vpop.f32.mrb[0].mxu0
      %v1122 = vadd.f32 %v1020, %v1121
      %v1123 = vpop.f32.mrb[0].mxu0
      %v1124 = vadd.f32 %v1016, %v1123
      %v1125 = vpop.f32.mrb[0].mxu0
      %v1126 = vadd.f32 %v1020, %v1125
      %1127 = vmatprep.mubr.bf16.mxu0 0
      %1128 = vmatmul.mubr.bf16.gmra.mrb[0].mxu0 %v1070
      %v1129 = vpop.f32.mrb[0].mxu0
      %v1130 = vadd.f32 %v1016, %v1129
      %v1131 = vpop.f32.mrb[0].mxu0
      %v1132 = vadd.f32 %v1020, %v1131
      %v1133 = vpop.f32.mrb[0].mxu0
      %v1134 = vadd.f32 %v1016, %v1133
      %v1135 = vpop.f32.mrb[0].mxu0
      %v1136 = vadd.f32 %v1020, %v1135
      %1137 = vmatprep.mubr.bf16.mxu0 0
      %1138 = vmatmul.mubr.bf16.gmra.mrb[0].mxu0 %v1073
      %v1139 = vpop.f32.mrb[0].mxu0
      %v1140 = vadd.f32 %v1016, %v1139
      %v1141 = vpop.f32.mrb[0].mxu0
      %v1142 = vadd.f32 %v1020, %v1141
      %v1143 = vpop.f32.mrb[0].mxu0
      %v1144 = vadd.f32 %v1016, %v1143
      %v1145 = vpop.f32.mrb[0].mxu0
      %v1146 = vadd.f32 %v1020, %v1145
      %1147 = vdwg.mxu0
      %v1148 = vpack.c.bf16 %v1114, %v1110
      %v1149 = vpack.c.bf16 %v1116, %v1112
      %v1150 = vpack.c.bf16 %v1124, %v1120
      %v1151 = vpack.c.bf16 %v1126, %v1122
      %v1152 = vpack.c.bf16 %v1134, %v1130
      %v1153 = vpack.c.bf16 %v1136, %v1132
      %v1154 = vpack.c.bf16 %v1144, %v1140
      %v1155 = vpack.c.bf16 %v1146, %v1142
      %1160 = vrot.lane.b32.xlu0 %v1148, 64
      %v1161 = vpop.permute.xlu0 %1160
      %1162 = vrot.lane.b32.xlu0 %v1150, 64
      %v1163 = vpop.permute.xlu0 %1162
      %1164 = vrot.lane.b32.xlu0 %v1152, 64
      %v1165 = vpop.permute.xlu0 %1164
      %1166 = vrot.lane.b32.xlu0 %v1154, 64
      %v1167 = vpop.permute.xlu0 %1166
      %vm1168 = vcmask 130048
      %v1170 = vsel %vm1168, %v1148, 0
      %v1173 = vsel %vm1168, %v1150, 0
      %v1176 = vsel %vm1168, %v1152, 0
      %v1179 = vsel %vm1168, %v1154, 0
      %v1182 = vsel %vm1168, %v1161, 0
      %v1185 = vsel %vm1168, %v1163, 0
      %v1188 = vsel %vm1168, %v1165, 0
      %v1191 = vsel %vm1168, %v1167, 0
      %1193 = vmatprep.subr.bf16.mxu0 0
      %1194 = vmatpush1.bf16.xpose.msra.mxu0 %v1182
      %1195 = vmatprep.subr.bf16.mxu0 0
      %1196 = vmatpush1.bf16.xpose.msra.mxu0 %v1185
      %1197 = vmatprep.subr.bf16.mxu0 0
      %1198 = vmatpush1.bf16.xpose.msra.mxu0 %v1188
      %1199 = vmatprep.subr.bf16.mxu0 0
      %1200 = vmatpush1.bf16.xpose.msra.mxu0 %v1191
      %1201 = vmatprep.subr.bf16.mxu0 0
      %1202 = vmatpush1.bf16.xpose.msra.mxu0 0
      %1203 = vmatprep.subr.bf16.mxu0 0
      %1204 = vmatpush1.bf16.xpose.msra.mxu0 0
      %1205 = vmatprep.subr.bf16.mxu0 0
      %1206 = vmatpush1.bf16.xpose.msra.mxu0 0
      %1207 = vmatprep.subr.bf16.mxu0 0
      %1208 = vmatpush1.bf16.xpose.msra.mxu0 0
      %1209 = vmatprep.subr.bf16.mxu0 0
      %1210 = vmatpush1.bf16.xpose.msra.mxu0 0
      %1211 = vmatprep.subr.bf16.mxu0 0
      %1212 = vmatpush1.bf16.xpose.msra.mxu0 0
      %1213 = vmatprep.subr.bf16.mxu0 0
      %1214 = vmatpush1.bf16.xpose.msra.mxu0 0
      %1215 = vmatprep.subr.bf16.mxu0 0
      %1216 = vmatpush1.bf16.xpose.msra.mxu0 0
      %1217 = vmatprep.subr.bf16.mxu0 0
      %1218 = vmatpush1.bf16.xpose.msra.mxu0 0
      %1219 = vmatprep.subr.bf16.mxu0 0
      %1220 = vmatpush1.bf16.xpose.msra.mxu0 0
      %1221 = vmatprep.subr.bf16.mxu0 0
      %1222 = vmatpush1.bf16.xpose.msra.mxu0 0
      %1223 = vmatprep.subr.bf16.mxu0 0
      %1224 = vmatpush1.bf16.xpose.msra.mxu0 0
      %1225 = vmatprep.mubr.bf16.mxu0 0
      %1226 = vmatmul.mubr.bf16.gmra.mrb[0].mxu0 %v1170
      %v1227 = vpop.f32.mrb[0].mxu0
      %v1228 = vadd.f32 0.0, %v1227
      %v1229 = vpop.f32.mrb[0].mxu0
      %v1230 = vpop.f32.mrb[0].mxu0
      %v1231 = vadd.f32 0.0, %v1230
      %v1232 = vpop.f32.mrb[0].mxu0
      %1233 = vmatprep.mubr.bf16.mxu0 0
      %1234 = vmatmul.mubr.bf16.gmra.mrb[0].mxu0 %v1173
      %v1235 = vpop.f32.mrb[0].mxu0
      %v1236 = vadd.f32 0.0, %v1235
      %v1237 = vpop.f32.mrb[0].mxu0
      %v1238 = vpop.f32.mrb[0].mxu0
      %v1239 = vadd.f32 0.0, %v1238
      %v1240 = vpop.f32.mrb[0].mxu0
      %1241 = vmatprep.mubr.bf16.mxu0 0
      %1242 = vmatmul.mubr.bf16.gmra.mrb[0].mxu0 %v1176
      %v1243 = vpop.f32.mrb[0].mxu0
      %v1244 = vadd.f32 0.0, %v1243
      %v1245 = vpop.f32.mrb[0].mxu0
      %v1246 = vpop.f32.mrb[0].mxu0
      %v1247 = vadd.f32 0.0, %v1246
      %v1248 = vpop.f32.mrb[0].mxu0
      %1249 = vmatprep.mubr.bf16.mxu0 0
      %1250 = vmatmul.mubr.bf16.gmra.mrb[0].mxu0 %v1179
      %v1251 = vpop.f32.mrb[0].mxu0
      %v1252 = vadd.f32 0.0, %v1251
      %v1253 = vpop.f32.mrb[0].mxu0
      %v1254 = vpop.f32.mrb[0].mxu0
      %v1255 = vadd.f32 0.0, %v1254
      %v1256 = vpop.f32.mrb[0].mxu0
      %1257 = vdwg.mxu0
      %v1258 = vmul.f32 %v1228, 0.25
      %v1259 = vmul.f32 %v1231, 0.25
      %v1260 = vmul.f32 %v1236, 0.25
      %v1261 = vmul.f32 %v1239, 0.25
      %v1262 = vmul.f32 %v1244, 0.25
      %v1263 = vmul.f32 %v1247, 0.25
      %v1264 = vmul.f32 %v1252, 0.25
      %v1265 = vmul.f32 %v1255, 0.25
      %v1266 = vsel %vm868, %v1258, -inf
      %1267 = vmax.xlane.f32.xlu0 %v1266
      %v1268 = vpop.xlane.xlu0 %1267
      %v1269 = vsel %vm868, %v1259, -inf
      %1270 = vmax.xlane.f32.xlu0 %v1269
      %v1271 = vpop.xlane.xlu0 %1270
      %v1272 = vsel %vm868, %v1260, -inf
      %1273 = vmax.xlane.f32.xlu0 %v1272
      %v1274 = vpop.xlane.xlu0 %1273
      %v1275 = vsel %vm868, %v1261, -inf
      %1276 = vmax.xlane.f32.xlu0 %v1275
      %v1277 = vpop.xlane.xlu0 %1276
      %v1278 = vsel %vm868, %v1262, -inf
      %1279 = vmax.xlane.f32.xlu0 %v1278
      %v1280 = vpop.xlane.xlu0 %1279
      %v1281 = vsel %vm868, %v1263, -inf
      %1282 = vmax.xlane.f32.xlu0 %v1281
      %v1283 = vpop.xlane.xlu0 %1282
      %v1284 = vsel %vm868, %v1264, -inf
      %1285 = vmax.xlane.f32.xlu0 %v1284
      %v1286 = vpop.xlane.xlu0 %1285
      %v1287 = vsel %vm868, %v1265, -inf
      %1288 = vmax.xlane.f32.xlu0 %v1287
      %v1289 = vpop.xlane.xlu0 %1288
      %v1290 = vsub.f32 %v1258, %v1268
      %v1291 = vsub.f32 %v1259, %v1271
      %v1292 = vsub.f32 %v1260, %v1274
      %v1293 = vsub.f32 %v1261, %v1277
      %v1294 = vsub.f32 %v1262, %v1280
      %v1295 = vsub.f32 %v1263, %v1283
      %v1296 = vsub.f32 %v1264, %v1286
      %v1297 = vsub.f32 %v1265, %v1289
      %v1298 = vmul.f32 %v1290, 1.442695
      %v1299 = vpow.pop %v1298
      %v1300 = vmul.f32 %v1291, 1.442695
      %v1301 = vpow.pop %v1300
      %v1302 = vmul.f32 %v1292, 1.442695
      %v1303 = vpow.pop %v1302
      %v1304 = vmul.f32 %v1293, 1.442695
      %v1305 = vpow.pop %v1304
      %v1306 = vmul.f32 %v1294, 1.442695
      %v1307 = vpow.pop %v1306
      %v1308 = vmul.f32 %v1295, 1.442695
      %v1309 = vpow.pop %v1308
      %v1310 = vmul.f32 %v1296, 1.442695
      %v1311 = vpow.pop %v1310
      %v1312 = vmul.f32 %v1297, 1.442695
      %v1313 = vpow.pop %v1312
      %v1314 = vsel %vm868, %v1299, 0.0
      %1315 = vadd.xlane.f32.xlu0 %v1314
      %v1316 = vpop.xlane.xlu0 %1315
      %v1317 = vsel %vm868, %v1301, 0.0
      %1318 = vadd.xlane.f32.xlu0 %v1317
      %v1319 = vpop.xlane.xlu0 %1318
      %v1320 = vsel %vm868, %v1303, 0.0
      %1321 = vadd.xlane.f32.xlu0 %v1320
      %v1322 = vpop.xlane.xlu0 %1321
      %v1323 = vsel %vm868, %v1305, 0.0
      %1324 = vadd.xlane.f32.xlu0 %v1323
      %v1325 = vpop.xlane.xlu0 %1324
      %v1326 = vsel %vm868, %v1307, 0.0
      %1327 = vadd.xlane.f32.xlu0 %v1326
      %v1328 = vpop.xlane.xlu0 %1327
      %v1329 = vsel %vm868, %v1309, 0.0
      %1330 = vadd.xlane.f32.xlu0 %v1329
      %v1331 = vpop.xlane.xlu0 %1330
      %v1332 = vsel %vm868, %v1311, 0.0
      %1333 = vadd.xlane.f32.xlu0 %v1332
      %v1334 = vpop.xlane.xlu0 %1333
      %v1335 = vsel %vm868, %v1313, 0.0
      %1336 = vadd.xlane.f32.xlu0 %v1335
      %v1337 = vpop.xlane.xlu0 %1336
      %v1338 = vrcp.pop %v1316
      %v1339 = vrcp.pop %v1319
      %v1340 = vrcp.pop %v1322
      %v1341 = vrcp.pop %v1325
      %v1342 = vrcp.pop %v1328
      %v1343 = vrcp.pop %v1331
      %v1344 = vrcp.pop %v1334
      %v1345 = vrcp.pop %v1337
      %v1346 = vmul.f32 %v1299, %v1338
      %v1347 = vmul.f32 %v1301, %v1339
      %v1348 = vmul.f32 %v1303, %v1340
      %v1349 = vmul.f32 %v1305, %v1341
      %v1350 = vmul.f32 %v1307, %v1342
      %v1351 = vmul.f32 %v1309, %v1343
      %v1352 = vmul.f32 %v1311, %v1344
      %v1353 = vmul.f32 %v1313, %v1345
      %v1354 = vpack.c.bf16 %v1347, %v1346
      %v1355 = vpack.c.bf16 %v1349, %v1348
      %v1356 = vpack.c.bf16 %v1351, %v1350
      %v1357 = vpack.c.bf16 %v1353, %v1352
      %v1359 = vsel %vm868, %v1354, 0
      %v1362 = vsel %vm868, %v1355, 0
      %v1365 = vsel %vm868, %v1356, 0
      %v1368 = vsel %vm868, %v1357, 0
      %1370 = vmatprep.subr.bf16.mxu0 0
      %1371 = vmatpush1.bf16.msra.mxu0 %v1149
      %1372 = vmatprep.subr.bf16.mxu0 0
      %1373 = vmatpush1.bf16.msra.mxu0 %v1151
      %1374 = vmatprep.subr.bf16.mxu0 0
      %1375 = vmatpush1.bf16.msra.mxu0 %v1153
      %1376 = vmatprep.subr.bf16.mxu0 0
      %1377 = vmatpush1.bf16.msra.mxu0 %v1155
      %1378 = vmatprep.subr.bf16.mxu0 0
      %1379 = vmatpush1.bf16.msra.mxu0 0
      %1380 = vmatprep.subr.bf16.mxu0 0
      %1381 = vmatpush1.bf16.msra.mxu0 0
      %1382 = vmatprep.subr.bf16.mxu0 0
      %1383 = vmatpush1.bf16.msra.mxu0 0
      %1384 = vmatprep.subr.bf16.mxu0 0
      %1385 = vmatpush1.bf16.msra.mxu0 0
      %1386 = vmatprep.subr.bf16.mxu0 0
      %1387 = vmatpush1.bf16.msra.mxu0 0
      %1388 = vmatprep.subr.bf16.mxu0 0
      %1389 = vmatpush1.bf16.msra.mxu0 0
      %1390 = vmatprep.subr.bf16.mxu0 0
      %1391 = vmatpush1.bf16.msra.mxu0 0
      %1392 = vmatprep.subr.bf16.mxu0 0
      %1393 = vmatpush1.bf16.msra.mxu0 0
      %1394 = vmatprep.subr.bf16.mxu0 0
      %1395 = vmatpush1.bf16.msra.mxu0 0
      %1396 = vmatprep.subr.bf16.mxu0 0
      %1397 = vmatpush1.bf16.msra.mxu0 0
      %1398 = vmatprep.subr.bf16.mxu0 0
      %1399 = vmatpush1.bf16.msra.mxu0 0
      %1400 = vmatprep.subr.bf16.mxu0 0
      %1401 = vmatpush1.bf16.msra.mxu0 0
      %1402 = vmatprep.mubr.bf16.mxu0 0
      %1403 = vmatmul.mubr.bf16.gmra.mrb[0].mxu0 %v1359
      %v1404 = vpop.f32.mrb[0].mxu0
      %v1405 = vadd.f32 0.0, %v1404
      %v1406 = vpop.f32.mrb[0].mxu0
      %v1407 = vpop.f32.mrb[0].mxu0
      %v1408 = vadd.f32 0.0, %v1407
      %v1409 = vpop.f32.mrb[0].mxu0
      %1410 = vmatprep.mubr.bf16.mxu0 0
      %1411 = vmatmul.mubr.bf16.gmra.mrb[0].mxu0 %v1362
      %v1412 = vpop.f32.mrb[0].mxu0
      %v1413 = vadd.f32 0.0, %v1412
      %v1414 = vpop.f32.mrb[0].mxu0
      %v1415 = vpop.f32.mrb[0].mxu0
      %v1416 = vadd.f32 0.0, %v1415
      %v1417 = vpop.f32.mrb[0].mxu0
      %1418 = vmatprep.mubr.bf16.mxu0 0
      %1419 = vmatmul.mubr.bf16.gmra.mrb[0].mxu0 %v1365
      %v1420 = vpop.f32.mrb[0].mxu0
      %v1421 = vadd.f32 0.0, %v1420
      %v1422 = vpop.f32.mrb[0].mxu0
      %v1423 = vpop.f32.mrb[0].mxu0
      %v1424 = vadd.f32 0.0, %v1423
      %v1425 = vpop.f32.mrb[0].mxu0
      %1426 = vmatprep.mubr.bf16.mxu0 0
      %1427 = vmatmul.mubr.bf16.gmra.mrb[0].mxu0 %v1368
      %v1428 = vpop.f32.mrb[0].mxu0
      %v1429 = vadd.f32 0.0, %v1428
      %v1430 = vpop.f32.mrb[0].mxu0
      %v1431 = vpop.f32.mrb[0].mxu0
      %v1432 = vadd.f32 0.0, %v1431
      %v1433 = vpop.f32.mrb[0].mxu0
      %1434 = vdwg.mxu0
      %1435 = vrot.lane.b32.xlu0 %v1148, 112
      %v1436 = vpop.permute.xlu0 %1435
      %1437 = vrot.lane.b32.xlu0 %v1150, 112
      %v1438 = vpop.permute.xlu0 %1437
      %1439 = vrot.lane.b32.xlu0 %v1152, 112
      %v1440 = vpop.permute.xlu0 %1439
      %1441 = vrot.lane.b32.xlu0 %v1154, 112
      %v1442 = vpop.permute.xlu0 %1441
      %1443 = vrot.lane.b32.xlu0 %v1148, 48
      %v1444 = vpop.permute.xlu0 %1443
      %1445 = vrot.lane.b32.xlu0 %v1150, 48
      %v1446 = vpop.permute.xlu0 %1445
      %1447 = vrot.lane.b32.xlu0 %v1152, 48
      %v1448 = vpop.permute.xlu0 %1447
      %1449 = vrot.lane.b32.xlu0 %v1154, 48
      %v1450 = vpop.permute.xlu0 %1449
      %v1452 = vsel %vm1168, %v1436, 0
      %v1455 = vsel %vm1168, %v1438, 0
      %v1458 = vsel %vm1168, %v1440, 0
      %v1461 = vsel %vm1168, %v1442, 0
      %v1464 = vsel %vm1168, %v1444, 0
      %v1467 = vsel %vm1168, %v1446, 0
      %v1470 = vsel %vm1168, %v1448, 0
      %v1473 = vsel %vm1168, %v1450, 0
      %1475 = vmatprep.subr.bf16.mxu0 0
      %1476 = vmatpush1.bf16.xpose.msra.mxu0 %v1464
      %1477 = vmatprep.subr.bf16.mxu0 0
      %1478 = vmatpush1.bf16.xpose.msra.mxu0 %v1467
      %1479 = vmatprep.subr.bf16.mxu0 0
      %1480 = vmatpush1.bf16.xpose.msra.mxu0 %v1470
      %1481 = vmatprep.subr.bf16.mxu0 0
      %1482 = vmatpush1.bf16.xpose.msra.mxu0 %v1473
      %1483 = vmatprep.subr.bf16.mxu0 0
      %1484 = vmatpush1.bf16.xpose.msra.mxu0 0
      %1485 = vmatprep.subr.bf16.mxu0 0
      %1486 = vmatpush1.bf16.xpose.msra.mxu0 0
      %1487 = vmatprep.subr.bf16.mxu0 0
      %1488 = vmatpush1.bf16.xpose.msra.mxu0 0
      %1489 = vmatprep.subr.bf16.mxu0 0
      %1490 = vmatpush1.bf16.xpose.msra.mxu0 0
      %1491 = vmatprep.subr.bf16.mxu0 0
      %1492 = vmatpush1.bf16.xpose.msra.mxu0 0
      %1493 = vmatprep.subr.bf16.mxu0 0
      %1494 = vmatpush1.bf16.xpose.msra.mxu0 0
      %1495 = vmatprep.subr.bf16.mxu0 0
      %1496 = vmatpush1.bf16.xpose.msra.mxu0 0
      %1497 = vmatprep.subr.bf16.mxu0 0
      %1498 = vmatpush1.bf16.xpose.msra.mxu0 0
      %1499 = vmatprep.subr.bf16.mxu0 0
      %1500 = vmatpush1.bf16.xpose.msra.mxu0 0
      %1501 = vmatprep.subr.bf16.mxu0 0
      %1502 = vmatpush1.bf16.xpose.msra.mxu0 0
      %1503 = vmatprep.subr.bf16.mxu0 0
      %1504 = vmatpush1.bf16.xpose.msra.mxu0 0
      %1505 = vmatprep.subr.bf16.mxu0 0
      %1506 = vmatpush1.bf16.xpose.msra.mxu0 0
      %1507 = vmatprep.mubr.bf16.mxu0 0
      %1508 = vmatmul.mubr.bf16.gmra.mrb[0].mxu0 %v1452
      %v1509 = vpop.f32.mrb[0].mxu0
      %v1510 = vadd.f32 0.0, %v1509
      %v1511 = vpop.f32.mrb[0].mxu0
      %v1512 = vpop.f32.mrb[0].mxu0
      %v1513 = vadd.f32 0.0, %v1512
      %v1514 = vpop.f32.mrb[0].mxu0
      %1515 = vmatprep.mubr.bf16.mxu0 0
      %1516 = vmatmul.mubr.bf16.gmra.mrb[0].mxu0 %v1455
      %v1517 = vpop.f32.mrb[0].mxu0
      %v1518 = vadd.f32 0.0, %v1517
      %v1519 = vpop.f32.mrb[0].mxu0
      %v1520 = vpop.f32.mrb[0].mxu0
      %v1521 = vadd.f32 0.0, %v1520
      %v1522 = vpop.f32.mrb[0].mxu0
      %1523 = vmatprep.mubr.bf16.mxu0 0
      %1524 = vmatmul.mubr.bf16.gmra.mrb[0].mxu0 %v1458
      %v1525 = vpop.f32.mrb[0].mxu0
      %v1526 = vadd.f32 0.0, %v1525
      %v1527 = vpop.f32.mrb[0].mxu0
      %v1528 = vpop.f32.mrb[0].mxu0
      %v1529 = vadd.f32 0.0, %v1528
      %v1530 = vpop.f32.mrb[0].mxu0
      %1531 = vmatprep.mubr.bf16.mxu0 0
      %1532 = vmatmul.mubr.bf16.gmra.mrb[0].mxu0 %v1461
      %v1533 = vpop.f32.mrb[0].mxu0
      %v1534 = vadd.f32 0.0, %v1533
      %v1535 = vpop.f32.mrb[0].mxu0
      %v1536 = vpop.f32.mrb[0].mxu0
      %v1537 = vadd.f32 0.0, %v1536
      %v1538 = vpop.f32.mrb[0].mxu0
      %1539 = vdwg.mxu0
      %v1540 = vmul.f32 %v1510, 0.25
      %v1541 = vmul.f32 %v1513, 0.25
      %v1542 = vmul.f32 %v1518, 0.25
      %v1543 = vmul.f32 %v1521, 0.25
      %v1544 = vmul.f32 %v1526, 0.25
      %v1545 = vmul.f32 %v1529, 0.25
      %v1546 = vmul.f32 %v1534, 0.25
      %v1547 = vmul.f32 %v1537, 0.25
      %v1548 = vsel %vm868, %v1540, -inf
      %1549 = vmax.xlane.f32.xlu0 %v1548
      %v1550 = vpop.xlane.xlu0 %1549
      %v1551 = vsel %vm868, %v1541, -inf
      %1552 = vmax.xlane.f32.xlu0 %v1551
      %v1553 = vpop.xlane.xlu0 %1552
      %v1554 = vsel %vm868, %v1542, -inf
      %1555 = vmax.xlane.f32.xlu0 %v1554
      %v1556 = vpop.xlane.xlu0 %1555
      %v1557 = vsel %vm868, %v1543, -inf
      %1558 = vmax.xlane.f32.xlu0 %v1557
      %v1559 = vpop.xlane.xlu0 %1558
      %v1560 = vsel %vm868, %v1544, -inf
      %1561 = vmax.xlane.f32.xlu0 %v1560
      %v1562 = vpop.xlane.xlu0 %1561
      %v1563 = vsel %vm868, %v1545, -inf
      %1564 = vmax.xlane.f32.xlu0 %v1563
      %v1565 = vpop.xlane.xlu0 %1564
      %v1566 = vsel %vm868, %v1546, -inf
      %1567 = vmax.xlane.f32.xlu0 %v1566
      %v1568 = vpop.xlane.xlu0 %1567
      %v1569 = vsel %vm868, %v1547, -inf
      %1570 = vmax.xlane.f32.xlu0 %v1569
      %v1571 = vpop.xlane.xlu0 %1570
      %v1572 = vsub.f32 %v1540, %v1550
      %v1573 = vsub.f32 %v1541, %v1553
      %v1574 = vsub.f32 %v1542, %v1556
      %v1575 = vsub.f32 %v1543, %v1559
      %v1576 = vsub.f32 %v1544, %v1562
      %v1577 = vsub.f32 %v1545, %v1565
      %v1578 = vsub.f32 %v1546, %v1568
      %v1579 = vsub.f32 %v1547, %v1571
      %v1580 = vmul.f32 %v1572, 1.442695
      %v1581 = vpow.pop %v1580
      %v1582 = vmul.f32 %v1573, 1.442695
      %v1583 = vpow.pop %v1582
      %v1584 = vmul.f32 %v1574, 1.442695
      %v1585 = vpow.pop %v1584
      %v1586 = vmul.f32 %v1575, 1.442695
      %v1587 = vpow.pop %v1586
      %v1588 = vmul.f32 %v1576, 1.442695
      %v1589 = vpow.pop %v1588
      %v1590 = vmul.f32 %v1577, 1.442695
      %v1591 = vpow.pop %v1590
      %v1592 = vmul.f32 %v1578, 1.442695
      %v1593 = vpow.pop %v1592
      %v1594 = vmul.f32 %v1579, 1.442695
      %v1595 = vpow.pop %v1594
      %v1596 = vsel %vm868, %v1581, 0.0
      %1597 = vadd.xlane.f32.xlu0 %v1596
      %v1598 = vpop.xlane.xlu0 %1597
      %v1599 = vsel %vm868, %v1583, 0.0
      %1600 = vadd.xlane.f32.xlu0 %v1599
      %v1601 = vpop.xlane.xlu0 %1600
      %v1602 = vsel %vm868, %v1585, 0.0
      %1603 = vadd.xlane.f32.xlu0 %v1602
      %v1604 = vpop.xlane.xlu0 %1603
      %v1605 = vsel %vm868, %v1587, 0.0
      %1606 = vadd.xlane.f32.xlu0 %v1605
      %v1607 = vpop.xlane.xlu0 %1606
      %v1608 = vsel %vm868, %v1589, 0.0
      %1609 = vadd.xlane.f32.xlu0 %v1608
      %v1610 = vpop.xlane.xlu0 %1609
      %v1611 = vsel %vm868, %v1591, 0.0
      %1612 = vadd.xlane.f32.xlu0 %v1611
      %v1613 = vpop.xlane.xlu0 %1612
      %v1614 = vsel %vm868, %v1593, 0.0
      %1615 = vadd.xlane.f32.xlu0 %v1614
      %v1616 = vpop.xlane.xlu0 %1615
      %v1617 = vsel %vm868, %v1595, 0.0
      %1618 = vadd.xlane.f32.xlu0 %v1617
      %v1619 = vpop.xlane.xlu0 %1618
      %v1620 = vrcp.pop %v1598
      %v1621 = vrcp.pop %v1601
      %v1622 = vrcp.pop %v1604
      %v1623 = vrcp.pop %v1607
      %v1624 = vrcp.pop %v1610
      %v1625 = vrcp.pop %v1613
      %v1626 = vrcp.pop %v1616
      %v1627 = vrcp.pop %v1619
      %v1628 = vmul.f32 %v1581, %v1620
      %v1629 = vmul.f32 %v1583, %v1621
      %v1630 = vmul.f32 %v1585, %v1622
      %v1631 = vmul.f32 %v1587, %v1623
      %v1632 = vmul.f32 %v1589, %v1624
      %v1633 = vmul.f32 %v1591, %v1625
      %v1634 = vmul.f32 %v1593, %v1626
      %v1635 = vmul.f32 %v1595, %v1627
      %v1636 = vpack.c.bf16 %v1629, %v1628
      %v1637 = vpack.c.bf16 %v1631, %v1630
      %v1638 = vpack.c.bf16 %v1633, %v1632
      %v1639 = vpack.c.bf16 %v1635, %v1634
      %1644 = vrot.lane.b32.xlu0 %v1149, 112
      %v1645 = vpop.permute.xlu0 %1644
      %1646 = vrot.lane.b32.xlu0 %v1151, 112
      %v1647 = vpop.permute.xlu0 %1646
      %1648 = vrot.lane.b32.xlu0 %v1153, 112
      %v1649 = vpop.permute.xlu0 %1648
      %1650 = vrot.lane.b32.xlu0 %v1155, 112
      %v1651 = vpop.permute.xlu0 %1650
      %v1657 = vsel %vm868, %v1636, 0
      %v1660 = vsel %vm868, %v1637, 0
      %v1663 = vsel %vm868, %v1638, 0
      %v1666 = vsel %vm868, %v1639, 0
      %1668 = vmatprep.subr.bf16.mxu0 0
      %1669 = vmatpush1.bf16.msra.mxu0 %v1645
      %1670 = vmatprep.subr.bf16.mxu0 0
      %1671 = vmatpush1.bf16.msra.mxu0 %v1647
      %1672 = vmatprep.subr.bf16.mxu0 0
      %1673 = vmatpush1.bf16.msra.mxu0 %v1649
      %1674 = vmatprep.subr.bf16.mxu0 0
      %1675 = vmatpush1.bf16.msra.mxu0 %v1651
      %1676 = vmatprep.subr.bf16.mxu0 0
      %1677 = vmatpush1.bf16.msra.mxu0 0
      %1678 = vmatprep.subr.bf16.mxu0 0
      %1679 = vmatpush1.bf16.msra.mxu0 0
      %1680 = vmatprep.subr.bf16.mxu0 0
      %1681 = vmatpush1.bf16.msra.mxu0 0
      %1682 = vmatprep.subr.bf16.mxu0 0
      %1683 = vmatpush1.bf16.msra.mxu0 0
      %1684 = vmatprep.subr.bf16.mxu0 0
      %1685 = vmatpush1.bf16.msra.mxu0 0
      %1686 = vmatprep.subr.bf16.mxu0 0
      %1687 = vmatpush1.bf16.msra.mxu0 0
      %1688 = vmatprep.subr.bf16.mxu0 0
      %1689 = vmatpush1.bf16.msra.mxu0 0
      %1690 = vmatprep.subr.bf16.mxu0 0
      %1691 = vmatpush1.bf16.msra.mxu0 0
      %1692 = vmatprep.subr.bf16.mxu0 0
      %1693 = vmatpush1.bf16.msra.mxu0 0
      %1694 = vmatprep.subr.bf16.mxu0 0
      %1695 = vmatpush1.bf16.msra.mxu0 0
      %1696 = vmatprep.subr.bf16.mxu0 0
      %1697 = vmatpush1.bf16.msra.mxu0 0
      %1698 = vmatprep.subr.bf16.mxu0 0
      %1699 = vmatpush1.bf16.msra.mxu0 0
      %1700 = vmatprep.mubr.bf16.mxu0 0
      %1701 = vmatmul.mubr.bf16.gmra.mrb[0].mxu0 %v1657
      %v1702 = vpop.f32.mrb[0].mxu0
      %v1703 = vadd.f32 0.0, %v1702
      %v1704 = vpop.f32.mrb[0].mxu0
      %v1705 = vpop.f32.mrb[0].mxu0
      %v1706 = vadd.f32 0.0, %v1705
      %v1707 = vpop.f32.mrb[0].mxu0
      %1708 = vmatprep.mubr.bf16.mxu0 0
      %1709 = vmatmul.mubr.bf16.gmra.mrb[0].mxu0 %v1660
      %v1710 = vpop.f32.mrb[0].mxu0
      %v1711 = vadd.f32 0.0, %v1710
      %v1712 = vpop.f32.mrb[0].mxu0
      %v1713 = vpop.f32.mrb[0].mxu0
      %v1714 = vadd.f32 0.0, %v1713
      %v1715 = vpop.f32.mrb[0].mxu0
      %1716 = vmatprep.mubr.bf16.mxu0 0
      %1717 = vmatmul.mubr.bf16.gmra.mrb[0].mxu0 %v1663
      %v1718 = vpop.f32.mrb[0].mxu0
      %v1719 = vadd.f32 0.0, %v1718
      %v1720 = vpop.f32.mrb[0].mxu0
      %v1721 = vpop.f32.mrb[0].mxu0
      %v1722 = vadd.f32 0.0, %v1721
      %v1723 = vpop.f32.mrb[0].mxu0
      %1724 = vmatprep.mubr.bf16.mxu0 0
      %1725 = vmatmul.mubr.bf16.gmra.mrb[0].mxu0 %v1666
      %v1726 = vpop.f32.mrb[0].mxu0
      %v1727 = vadd.f32 0.0, %v1726
      %v1728 = vpop.f32.mrb[0].mxu0
      %v1729 = vpop.f32.mrb[0].mxu0
      %v1730 = vadd.f32 0.0, %v1729
      %v1731 = vpop.f32.mrb[0].mxu0
      %1732 = vdwg.mxu0
      %1733 = vrot.lane.b32.xlu0 %v1148, 96
      %v1734 = vpop.permute.xlu0 %1733
      %1735 = vrot.lane.b32.xlu0 %v1150, 96
      %v1736 = vpop.permute.xlu0 %1735
      %1737 = vrot.lane.b32.xlu0 %v1152, 96
      %v1738 = vpop.permute.xlu0 %1737
      %1739 = vrot.lane.b32.xlu0 %v1154, 96
      %v1740 = vpop.permute.xlu0 %1739
      %1741 = vrot.lane.b32.xlu0 %v1148, 32
      %v1742 = vpop.permute.xlu0 %1741
      %1743 = vrot.lane.b32.xlu0 %v1150, 32
      %v1744 = vpop.permute.xlu0 %1743
      %1745 = vrot.lane.b32.xlu0 %v1152, 32
      %v1746 = vpop.permute.xlu0 %1745
      %1747 = vrot.lane.b32.xlu0 %v1154, 32
      %v1748 = vpop.permute.xlu0 %1747
      %v1750 = vsel %vm1168, %v1734, 0
      %v1753 = vsel %vm1168, %v1736, 0
      %v1756 = vsel %vm1168, %v1738, 0
      %v1759 = vsel %vm1168, %v1740, 0
      %v1762 = vsel %vm1168, %v1742, 0
      %v1765 = vsel %vm1168, %v1744, 0
      %v1768 = vsel %vm1168, %v1746, 0
      %v1771 = vsel %vm1168, %v1748, 0
      %1773 = vmatprep.subr.bf16.mxu0 0
      %1774 = vmatpush1.bf16.xpose.msra.mxu0 %v1762
      %1775 = vmatprep.subr.bf16.mxu0 0
      %1776 = vmatpush1.bf16.xpose.msra.mxu0 %v1765
      %1777 = vmatprep.subr.bf16.mxu0 0
      %1778 = vmatpush1.bf16.xpose.msra.mxu0 %v1768
      %1779 = vmatprep.subr.bf16.mxu0 0
      %1780 = vmatpush1.bf16.xpose.msra.mxu0 %v1771
      %1781 = vmatprep.subr.bf16.mxu0 0
      %1782 = vmatpush1.bf16.xpose.msra.mxu0 0
      %1783 = vmatprep.subr.bf16.mxu0 0
      %1784 = vmatpush1.bf16.xpose.msra.mxu0 0
      %1785 = vmatprep.subr.bf16.mxu0 0
      %1786 = vmatpush1.bf16.xpose.msra.mxu0 0
      %1787 = vmatprep.subr.bf16.mxu0 0
      %1788 = vmatpush1.bf16.xpose.msra.mxu0 0
      %1789 = vmatprep.subr.bf16.mxu0 0
      %1790 = vmatpush1.bf16.xpose.msra.mxu0 0
      %1791 = vmatprep.subr.bf16.mxu0 0
      %1792 = vmatpush1.bf16.xpose.msra.mxu0 0
      %1793 = vmatprep.subr.bf16.mxu0 0
      %1794 = vmatpush1.bf16.xpose.msra.mxu0 0
      %1795 = vmatprep.subr.bf16.mxu0 0
      %1796 = vmatpush1.bf16.xpose.msra.mxu0 0
      %1797 = vmatprep.subr.bf16.mxu0 0
      %1798 = vmatpush1.bf16.xpose.msra.mxu0 0
      %1799 = vmatprep.subr.bf16.mxu0 0
      %1800 = vmatpush1.bf16.xpose.msra.mxu0 0
      %1801 = vmatprep.subr.bf16.mxu0 0
      %1802 = vmatpush1.bf16.xpose.msra.mxu0 0
      %1803 = vmatprep.subr.bf16.mxu0 0
      %1804 = vmatpush1.bf16.xpose.msra.mxu0 0
      %1805 = vmatprep.mubr.bf16.mxu0 0
      %1806 = vmatmul.mubr.bf16.gmra.mrb[0].mxu0 %v1750
      %v1807 = vpop.f32.mrb[0].mxu0
      %v1808 = vadd.f32 0.0, %v1807
      %v1809 = vpop.f32.mrb[0].mxu0
      %v1810 = vpop.f32.mrb[0].mxu0
      %v1811 = vadd.f32 0.0, %v1810
      %v1812 = vpop.f32.mrb[0].mxu0
      %1813 = vmatprep.mubr.bf16.mxu0 0
      %1814 = vmatmul.mubr.bf16.gmra.mrb[0].mxu0 %v1753
      %v1815 = vpop.f32.mrb[0].mxu0
      %v1816 = vadd.f32 0.0, %v1815
      %v1817 = vpop.f32.mrb[0].mxu0
      %v1818 = vpop.f32.mrb[0].mxu0
      %v1819 = vadd.f32 0.0, %v1818
      %v1820 = vpop.f32.mrb[0].mxu0
      %1821 = vmatprep.mubr.bf16.mxu0 0
      %1822 = vmatmul.mubr.bf16.gmra.mrb[0].mxu0 %v1756
      %v1823 = vpop.f32.mrb[0].mxu0
      %v1824 = vadd.f32 0.0, %v1823
      %v1825 = vpop.f32.mrb[0].mxu0
      %v1826 = vpop.f32.mrb[0].mxu0
      %v1827 = vadd.f32 0.0, %v1826
      %v1828 = vpop.f32.mrb[0].mxu0
      %1829 = vmatprep.mubr.bf16.mxu0 0
      %1830 = vmatmul.mubr.bf16.gmra.mrb[0].mxu0 %v1759
      %v1831 = vpop.f32.mrb[0].mxu0
      %v1832 = vadd.f32 0.0, %v1831
      %v1833 = vpop.f32.mrb[0].mxu0
      %v1834 = vpop.f32.mrb[0].mxu0
      %v1835 = vadd.f32 0.0, %v1834
      %v1836 = vpop.f32.mrb[0].mxu0
      %1837 = vdwg.mxu0
      %v1838 = vmul.f32 %v1808, 0.25
      %v1839 = vmul.f32 %v1811, 0.25
      %v1840 = vmul.f32 %v1816, 0.25
      %v1841 = vmul.f32 %v1819, 0.25
      %v1842 = vmul.f32 %v1824, 0.25
      %v1843 = vmul.f32 %v1827, 0.25
      %v1844 = vmul.f32 %v1832, 0.25
      %v1845 = vmul.f32 %v1835, 0.25
      %v1846 = vsel %vm868, %v1838, -inf
      %1847 = vmax.xlane.f32.xlu0 %v1846
      %v1848 = vpop.xlane.xlu0 %1847
      %v1849 = vsel %vm868, %v1839, -inf
      %1850 = vmax.xlane.f32.xlu0 %v1849
      %v1851 = vpop.xlane.xlu0 %1850
      %v1852 = vsel %vm868, %v1840, -inf
      %1853 = vmax.xlane.f32.xlu0 %v1852
      %v1854 = vpop.xlane.xlu0 %1853
      %v1855 = vsel %vm868, %v1841, -inf
      %1856 = vmax.xlane.f32.xlu0 %v1855
      %v1857 = vpop.xlane.xlu0 %1856
      %v1858 = vsel %vm868, %v1842, -inf
      %1859 = vmax.xlane.f32.xlu0 %v1858
      %v1860 = vpop.xlane.xlu0 %1859
      %v1861 = vsel %vm868, %v1843, -inf
      %1862 = vmax.xlane.f32.xlu0 %v1861
      %v1863 = vpop.xlane.xlu0 %1862
      %v1864 = vsel %vm868, %v1844, -inf
      %1865 = vmax.xlane.f32.xlu0 %v1864
      %v1866 = vpop.xlane.xlu0 %1865
      %v1867 = vsel %vm868, %v1845, -inf
      %1868 = vmax.xlane.f32.xlu0 %v1867
      %v1869 = vpop.xlane.xlu0 %1868
      %v1870 = vsub.f32 %v1838, %v1848
      %v1871 = vsub.f32 %v1839, %v1851
      %v1872 = vsub.f32 %v1840, %v1854
      %v1873 = vsub.f32 %v1841, %v1857
      %v1874 = vsub.f32 %v1842, %v1860
      %v1875 = vsub.f32 %v1843, %v1863
      %v1876 = vsub.f32 %v1844, %v1866
      %v1877 = vsub.f32 %v1845, %v1869
      %v1878 = vmul.f32 %v1870, 1.442695
      %v1879 = vpow.pop %v1878
      %v1880 = vmul.f32 %v1871, 1.442695
      %v1881 = vpow.pop %v1880
      %v1882 = vmul.f32 %v1872, 1.442695
      %v1883 = vpow.pop %v1882
      %v1884 = vmul.f32 %v1873, 1.442695
      %v1885 = vpow.pop %v1884
      %v1886 = vmul.f32 %v1874, 1.442695
      %v1887 = vpow.pop %v1886
      %v1888 = vmul.f32 %v1875, 1.442695
      %v1889 = vpow.pop %v1888
      %v1890 = vmul.f32 %v1876, 1.442695
      %v1891 = vpow.pop %v1890
      %v1892 = vmul.f32 %v1877, 1.442695
      %v1893 = vpow.pop %v1892
      %v1894 = vsel %vm868, %v1879, 0.0
      %1895 = vadd.xlane.f32.xlu0 %v1894
      %v1896 = vpop.xlane.xlu0 %1895
      %v1897 = vsel %vm868, %v1881, 0.0
      %1898 = vadd.xlane.f32.xlu0 %v1897
      %v1899 = vpop.xlane.xlu0 %1898
      %v1900 = vsel %vm868, %v1883, 0.0
      %1901 = vadd.xlane.f32.xlu0 %v1900
      %v1902 = vpop.xlane.xlu0 %1901
      %v1903 = vsel %vm868, %v1885, 0.0
      %1904 = vadd.xlane.f32.xlu0 %v1903
      %v1905 = vpop.xlane.xlu0 %1904
      %v1906 = vsel %vm868, %v1887, 0.0
      %1907 = vadd.xlane.f32.xlu0 %v1906
      %v1908 = vpop.xlane.xlu0 %1907
      %v1909 = vsel %vm868, %v1889, 0.0
      %1910 = vadd.xlane.f32.xlu0 %v1909
      %v1911 = vpop.xlane.xlu0 %1910
      %v1912 = vsel %vm868, %v1891, 0.0
      %1913 = vadd.xlane.f32.xlu0 %v1912
      %v1914 = vpop.xlane.xlu0 %1913
      %v1915 = vsel %vm868, %v1893, 0.0
      %1916 = vadd.xlane.f32.xlu0 %v1915
      %v1917 = vpop.xlane.xlu0 %1916
      %v1918 = vrcp.pop %v1896
      %v1919 = vrcp.pop %v1899
      %v1920 = vrcp.pop %v1902
      %v1921 = vrcp.pop %v1905
      %v1922 = vrcp.pop %v1908
      %v1923 = vrcp.pop %v1911
      %v1924 = vrcp.pop %v1914
      %v1925 = vrcp.pop %v1917
      %v1926 = vmul.f32 %v1879, %v1918
      %v1927 = vmul.f32 %v1881, %v1919
      %v1928 = vmul.f32 %v1883, %v1920
      %v1929 = vmul.f32 %v1885, %v1921
      %v1930 = vmul.f32 %v1887, %v1922
      %v1931 = vmul.f32 %v1889, %v1923
      %v1932 = vmul.f32 %v1891, %v1924
      %v1933 = vmul.f32 %v1893, %v1925
      %v1934 = vpack.c.bf16 %v1927, %v1926
      %v1935 = vpack.c.bf16 %v1929, %v1928
      %v1936 = vpack.c.bf16 %v1931, %v1930
      %v1937 = vpack.c.bf16 %v1933, %v1932
      %1938 = vrot.lane.b32.xlu0 %v1149, 96
      %v1939 = vpop.permute.xlu0 %1938
      %1940 = vrot.lane.b32.xlu0 %v1151, 96
      %v1941 = vpop.permute.xlu0 %1940
      %1942 = vrot.lane.b32.xlu0 %v1153, 96
      %v1943 = vpop.permute.xlu0 %1942
      %1944 = vrot.lane.b32.xlu0 %v1155, 96
      %v1945 = vpop.permute.xlu0 %1944
      %v1951 = vsel %vm868, %v1934, 0
      %v1954 = vsel %vm868, %v1935, 0
      %v1957 = vsel %vm868, %v1936, 0
      %v1960 = vsel %vm868, %v1937, 0
      %1962 = vmatprep.subr.bf16.mxu0 0
      %1963 = vmatpush1.bf16.msra.mxu0 %v1939
      %1964 = vmatprep.subr.bf16.mxu0 0
      %1965 = vmatpush1.bf16.msra.mxu0 %v1941
      %1966 = vmatprep.subr.bf16.mxu0 0
      %1967 = vmatpush1.bf16.msra.mxu0 %v1943
      %1968 = vmatprep.subr.bf16.mxu0 0
      %1969 = vmatpush1.bf16.msra.mxu0 %v1945
      %1970 = vmatprep.subr.bf16.mxu0 0
      %1971 = vmatpush1.bf16.msra.mxu0 0
      %1972 = vmatprep.subr.bf16.mxu0 0
      %1973 = vmatpush1.bf16.msra.mxu0 0
      %1974 = vmatprep.subr.bf16.mxu0 0
      %1975 = vmatpush1.bf16.msra.mxu0 0
      %1976 = vmatprep.subr.bf16.mxu0 0
      %1977 = vmatpush1.bf16.msra.mxu0 0
      %1978 = vmatprep.subr.bf16.mxu0 0
      %1979 = vmatpush1.bf16.msra.mxu0 0
      %1980 = vmatprep.subr.bf16.mxu0 0
      %1981 = vmatpush1.bf16.msra.mxu0 0
      %1982 = vmatprep.subr.bf16.mxu0 0
      %1983 = vmatpush1.bf16.msra.mxu0 0
      %1984 = vmatprep.subr.bf16.mxu0 0
      %1985 = vmatpush1.bf16.msra.mxu0 0
      %1986 = vmatprep.subr.bf16.mxu0 0
      %1987 = vmatpush1.bf16.msra.mxu0 0
      %1988 = vmatprep.subr.bf16.mxu0 0
      %1989 = vmatpush1.bf16.msra.mxu0 0
      %1990 = vmatprep.subr.bf16.mxu0 0
      %1991 = vmatpush1.bf16.msra.mxu0 0
      %1992 = vmatprep.subr.bf16.mxu0 0
      %1993 = vmatpush1.bf16.msra.mxu0 0
      %1994 = vmatprep.mubr.bf16.mxu0 0
      %1995 = vmatmul.mubr.bf16.gmra.mrb[0].mxu0 %v1951
      %v1996 = vpop.f32.mrb[0].mxu0
      %v1997 = vadd.f32 0.0, %v1996
      %v1998 = vpop.f32.mrb[0].mxu0
      %v1999 = vpop.f32.mrb[0].mxu0
      %v2000 = vadd.f32 0.0, %v1999
      %v2001 = vpop.f32.mrb[0].mxu0
      %2002 = vmatprep.mubr.bf16.mxu0 0
      %2003 = vmatmul.mubr.bf16.gmra.mrb[0].mxu0 %v1954
      %v2004 = vpop.f32.mrb[0].mxu0
      %v2005 = vadd.f32 0.0, %v2004
      %v2006 = vpop.f32.mrb[0].mxu0
      %v2007 = vpop.f32.mrb[0].mxu0
      %v2008 = vadd.f32 0.0, %v2007
      %v2009 = vpop.f32.mrb[0].mxu0
      %2010 = vmatprep.mubr.bf16.mxu0 0
      %2011 = vmatmul.mubr.bf16.gmra.mrb[0].mxu0 %v1957
      %v2012 = vpop.f32.mrb[0].mxu0
      %v2013 = vadd.f32 0.0, %v2012
      %v2014 = vpop.f32.mrb[0].mxu0
      %v2015 = vpop.f32.mrb[0].mxu0
      %v2016 = vadd.f32 0.0, %v2015
      %v2017 = vpop.f32.mrb[0].mxu0
      %2018 = vmatprep.mubr.bf16.mxu0 0
      %2019 = vmatmul.mubr.bf16.gmra.mrb[0].mxu0 %v1960
      %v2020 = vpop.f32.mrb[0].mxu0
      %v2021 = vadd.f32 0.0, %v2020
      %v2022 = vpop.f32.mrb[0].mxu0
      %v2023 = vpop.f32.mrb[0].mxu0
      %v2024 = vadd.f32 0.0, %v2023
      %v2025 = vpop.f32.mrb[0].mxu0
      %2026 = vdwg.mxu0
      %2027 = vrot.lane.b32.xlu0 %v1148, 80
      %v2028 = vpop.permute.xlu0 %2027
      %2029 = vrot.lane.b32.xlu0 %v1150, 80
      %v2030 = vpop.permute.xlu0 %2029
      %2031 = vrot.lane.b32.xlu0 %v1152, 80
      %v2032 = vpop.permute.xlu0 %2031
      %2033 = vrot.lane.b32.xlu0 %v1154, 80
      %v2034 = vpop.permute.xlu0 %2033
      %2035 = vrot.lane.b32.xlu0 %v1148, 16
      %v2036 = vpop.permute.xlu0 %2035
      %2037 = vrot.lane.b32.xlu0 %v1150, 16
      %v2038 = vpop.permute.xlu0 %2037
      %2039 = vrot.lane.b32.xlu0 %v1152, 16
      %v2040 = vpop.permute.xlu0 %2039
      %2041 = vrot.lane.b32.xlu0 %v1154, 16
      %v2042 = vpop.permute.xlu0 %2041
      %v2044 = vsel %vm1168, %v2028, 0
      %v2047 = vsel %vm1168, %v2030, 0
      %v2050 = vsel %vm1168, %v2032, 0
      %v2053 = vsel %vm1168, %v2034, 0
      %v2056 = vsel %vm1168, %v2036, 0
      %v2059 = vsel %vm1168, %v2038, 0
      %v2062 = vsel %vm1168, %v2040, 0
      %v2065 = vsel %vm1168, %v2042, 0
      %2067 = vmatprep.subr.bf16.mxu0 0
      %2068 = vmatpush1.bf16.xpose.msra.mxu0 %v2056
      %2069 = vmatprep.subr.bf16.mxu0 0
      %2070 = vmatpush1.bf16.xpose.msra.mxu0 %v2059
      %2071 = vmatprep.subr.bf16.mxu0 0
      %2072 = vmatpush1.bf16.xpose.msra.mxu0 %v2062
      %2073 = vmatprep.subr.bf16.mxu0 0
      %2074 = vmatpush1.bf16.xpose.msra.mxu0 %v2065
      %2075 = vmatprep.subr.bf16.mxu0 0
      %2076 = vmatpush1.bf16.xpose.msra.mxu0 0
      %2077 = vmatprep.subr.bf16.mxu0 0
      %2078 = vmatpush1.bf16.xpose.msra.mxu0 0
      %2079 = vmatprep.subr.bf16.mxu0 0
      %2080 = vmatpush1.bf16.xpose.msra.mxu0 0
      %2081 = vmatprep.subr.bf16.mxu0 0
      %2082 = vmatpush1.bf16.xpose.msra.mxu0 0
      %2083 = vmatprep.subr.bf16.mxu0 0
      %2084 = vmatpush1.bf16.xpose.msra.mxu0 0
      %2085 = vmatprep.subr.bf16.mxu0 0
      %2086 = vmatpush1.bf16.xpose.msra.mxu0 0
      %2087 = vmatprep.subr.bf16.mxu0 0
      %2088 = vmatpush1.bf16.xpose.msra.mxu0 0
      %2089 = vmatprep.subr.bf16.mxu0 0
      %2090 = vmatpush1.bf16.xpose.msra.mxu0 0
      %2091 = vmatprep.subr.bf16.mxu0 0
      %2092 = vmatpush1.bf16.xpose.msra.mxu0 0
      %2093 = vmatprep.subr.bf16.mxu0 0
      %2094 = vmatpush1.bf16.xpose.msra.mxu0 0
      %2095 = vmatprep.subr.bf16.mxu0 0
      %2096 = vmatpush1.bf16.xpose.msra.mxu0 0
      %2097 = vmatprep.subr.bf16.mxu0 0
      %2098 = vmatpush1.bf16.xpose.msra.mxu0 0
      %2099 = vmatprep.mubr.bf16.mxu0 0
      %2100 = vmatmul.mubr.bf16.gmra.mrb[0].mxu0 %v2044
      %v2101 = vpop.f32.mrb[0].mxu0
      %v2102 = vadd.f32 0.0, %v2101
      %v2103 = vpop.f32.mrb[0].mxu0
      %v2104 = vpop.f32.mrb[0].mxu0
      %v2105 = vadd.f32 0.0, %v2104
      %v2106 = vpop.f32.mrb[0].mxu0
      %2107 = vmatprep.mubr.bf16.mxu0 0
      %2108 = vmatmul.mubr.bf16.gmra.mrb[0].mxu0 %v2047
      %v2109 = vpop.f32.mrb[0].mxu0
      %v2110 = vadd.f32 0.0, %v2109
      %v2111 = vpop.f32.mrb[0].mxu0
      %v2112 = vpop.f32.mrb[0].mxu0
      %v2113 = vadd.f32 0.0, %v2112
      %v2114 = vpop.f32.mrb[0].mxu0
      %2115 = vmatprep.mubr.bf16.mxu0 0
      %2116 = vmatmul.mubr.bf16.gmra.mrb[0].mxu0 %v2050
      %v2117 = vpop.f32.mrb[0].mxu0
      %v2118 = vadd.f32 0.0, %v2117
      %v2119 = vpop.f32.mrb[0].mxu0
      %v2120 = vpop.f32.mrb[0].mxu0
      %v2121 = vadd.f32 0.0, %v2120
      %v2122 = vpop.f32.mrb[0].mxu0
      %2123 = vmatprep.mubr.bf16.mxu0 0
      %2124 = vmatmul.mubr.bf16.gmra.mrb[0].mxu0 %v2053
      %v2125 = vpop.f32.mrb[0].mxu0
      %v2126 = vadd.f32 0.0, %v2125
      %v2127 = vpop.f32.mrb[0].mxu0
      %v2128 = vpop.f32.mrb[0].mxu0
      %v2129 = vadd.f32 0.0, %v2128
      %v2130 = vpop.f32.mrb[0].mxu0
      %2131 = vdwg.mxu0
      %v2132 = vmul.f32 %v2102, 0.25
      %v2133 = vmul.f32 %v2105, 0.25
      %v2134 = vmul.f32 %v2110, 0.25
      %v2135 = vmul.f32 %v2113, 0.25
      %v2136 = vmul.f32 %v2118, 0.25
      %v2137 = vmul.f32 %v2121, 0.25
      %v2138 = vmul.f32 %v2126, 0.25
      %v2139 = vmul.f32 %v2129, 0.25
      %v2140 = vsel %vm868, %v2132, -inf
      %2141 = vmax.xlane.f32.xlu0 %v2140
      %v2142 = vpop.xlane.xlu0 %2141
      %v2143 = vsel %vm868, %v2133, -inf
      %2144 = vmax.xlane.f32.xlu0 %v2143
      %v2145 = vpop.xlane.xlu0 %2144
      %v2146 = vsel %vm868, %v2134, -inf
      %2147 = vmax.xlane.f32.xlu0 %v2146
      %v2148 = vpop.xlane.xlu0 %2147
      %v2149 = vsel %vm868, %v2135, -inf
      %2150 = vmax.xlane.f32.xlu0 %v2149
      %v2151 = vpop.xlane.xlu0 %2150
      %v2152 = vsel %vm868, %v2136, -inf
      %2153 = vmax.xlane.f32.xlu0 %v2152
      %v2154 = vpop.xlane.xlu0 %2153
      %v2155 = vsel %vm868, %v2137, -inf
      %2156 = vmax.xlane.f32.xlu0 %v2155
      %v2157 = vpop.xlane.xlu0 %2156
      %v2158 = vsel %vm868, %v2138, -inf
      %2159 = vmax.xlane.f32.xlu0 %v2158
      %v2160 = vpop.xlane.xlu0 %2159
      %v2161 = vsel %vm868, %v2139, -inf
      %2162 = vmax.xlane.f32.xlu0 %v2161
      %v2163 = vpop.xlane.xlu0 %2162
      %v2164 = vsub.f32 %v2132, %v2142
      %v2165 = vsub.f32 %v2133, %v2145
      %v2166 = vsub.f32 %v2134, %v2148
      %v2167 = vsub.f32 %v2135, %v2151
      %v2168 = vsub.f32 %v2136, %v2154
      %v2169 = vsub.f32 %v2137, %v2157
      %v2170 = vsub.f32 %v2138, %v2160
      %v2171 = vsub.f32 %v2139, %v2163
      %v2172 = vmul.f32 %v2164, 1.442695
      %v2173 = vpow.pop %v2172
      %v2174 = vmul.f32 %v2165, 1.442695
      %v2175 = vpow.pop %v2174
      %v2176 = vmul.f32 %v2166, 1.442695
      %v2177 = vpow.pop %v2176
      %v2178 = vmul.f32 %v2167, 1.442695
      %v2179 = vpow.pop %v2178
      %v2180 = vmul.f32 %v2168, 1.442695
      %v2181 = vpow.pop %v2180
      %v2182 = vmul.f32 %v2169, 1.442695
      %v2183 = vpow.pop %v2182
      %v2184 = vmul.f32 %v2170, 1.442695
      %v2185 = vpow.pop %v2184
      %v2186 = vmul.f32 %v2171, 1.442695
      %v2187 = vpow.pop %v2186
      %v2188 = vsel %vm868, %v2173, 0.0
      %2189 = vadd.xlane.f32.xlu0 %v2188
      %v2190 = vpop.xlane.xlu0 %2189
      %v2191 = vsel %vm868, %v2175, 0.0
      %2192 = vadd.xlane.f32.xlu0 %v2191
      %v2193 = vpop.xlane.xlu0 %2192
      %v2194 = vsel %vm868, %v2177, 0.0
      %2195 = vadd.xlane.f32.xlu0 %v2194
      %v2196 = vpop.xlane.xlu0 %2195
      %v2197 = vsel %vm868, %v2179, 0.0
      %2198 = vadd.xlane.f32.xlu0 %v2197
      %v2199 = vpop.xlane.xlu0 %2198
      %v2200 = vsel %vm868, %v2181, 0.0
      %2201 = vadd.xlane.f32.xlu0 %v2200
      %v2202 = vpop.xlane.xlu0 %2201
      %v2203 = vsel %vm868, %v2183, 0.0
      %2204 = vadd.xlane.f32.xlu0 %v2203
      %v2205 = vpop.xlane.xlu0 %2204
      %v2206 = vsel %vm868, %v2185, 0.0
      %2207 = vadd.xlane.f32.xlu0 %v2206
      %v2208 = vpop.xlane.xlu0 %2207
      %v2209 = vsel %vm868, %v2187, 0.0
      %2210 = vadd.xlane.f32.xlu0 %v2209
      %v2211 = vpop.xlane.xlu0 %2210
      %v2212 = vrcp.pop %v2190
      %v2213 = vrcp.pop %v2193
      %v2214 = vrcp.pop %v2196
      %v2215 = vrcp.pop %v2199
      %v2216 = vrcp.pop %v2202
      %v2217 = vrcp.pop %v2205
      %v2218 = vrcp.pop %v2208
      %v2219 = vrcp.pop %v2211
      %v2220 = vmul.f32 %v2173, %v2212
      %v2221 = vmul.f32 %v2175, %v2213
      %v2222 = vmul.f32 %v2177, %v2214
      %v2223 = vmul.f32 %v2179, %v2215
      %v2224 = vmul.f32 %v2181, %v2216
      %v2225 = vmul.f32 %v2183, %v2217
      %v2226 = vmul.f32 %v2185, %v2218
      %v2227 = vmul.f32 %v2187, %v2219
      %v2228 = vpack.c.bf16 %v2221, %v2220
      %v2229 = vpack.c.bf16 %v2223, %v2222
      %v2230 = vpack.c.bf16 %v2225, %v2224
      %v2231 = vpack.c.bf16 %v2227, %v2226
      %2232 = vrot.lane.b32.xlu0 %v1149, 80
      %v2233 = vpop.permute.xlu0 %2232
      %2234 = vrot.lane.b32.xlu0 %v1151, 80
      %v2235 = vpop.permute.xlu0 %2234
      %2236 = vrot.lane.b32.xlu0 %v1153, 80
      %v2237 = vpop.permute.xlu0 %2236
      %2238 = vrot.lane.b32.xlu0 %v1155, 80
      %v2239 = vpop.permute.xlu0 %2238
      %v2245 = vsel %vm868, %v2228, 0
      %v2248 = vsel %vm868, %v2229, 0
      %v2251 = vsel %vm868, %v2230, 0
      %v2254 = vsel %vm868, %v2231, 0
      %2256 = vmatprep.subr.bf16.mxu0 0
      %2257 = vmatpush1.bf16.msra.mxu0 %v2233
      %2258 = vmatprep.subr.bf16.mxu0 0
      %2259 = vmatpush1.bf16.msra.mxu0 %v2235
      %2260 = vmatprep.subr.bf16.mxu0 0
      %2261 = vmatpush1.bf16.msra.mxu0 %v2237
      %2262 = vmatprep.subr.bf16.mxu0 0
      %2263 = vmatpush1.bf16.msra.mxu0 %v2239
      %2264 = vmatprep.subr.bf16.mxu0 0
      %2265 = vmatpush1.bf16.msra.mxu0 0
      %2266 = vmatprep.subr.bf16.mxu0 0
      %2267 = vmatpush1.bf16.msra.mxu0 0
      %2268 = vmatprep.subr.bf16.mxu0 0
      %2269 = vmatpush1.bf16.msra.mxu0 0
      %2270 = vmatprep.subr.bf16.mxu0 0
      %2271 = vmatpush1.bf16.msra.mxu0 0
      %2272 = vmatprep.subr.bf16.mxu0 0
      %2273 = vmatpush1.bf16.msra.mxu0 0
      %2274 = vmatprep.subr.bf16.mxu0 0
      %2275 = vmatpush1.bf16.msra.mxu0 0
      %2276 = vmatprep.subr.bf16.mxu0 0
      %2277 = vmatpush1.bf16.msra.mxu0 0
      %2278 = vmatprep.subr.bf16.mxu0 0
      %2279 = vmatpush1.bf16.msra.mxu0 0
      %2280 = vmatprep.subr.bf16.mxu0 0
      %2281 = vmatpush1.bf16.msra.mxu0 0
      %2282 = vmatprep.subr.bf16.mxu0 0
      %2283 = vmatpush1.bf16.msra.mxu0 0
      %2284 = vmatprep.subr.bf16.mxu0 0
      %2285 = vmatpush1.bf16.msra.mxu0 0
      %2286 = vmatprep.subr.bf16.mxu0 0
      %2287 = vmatpush1.bf16.msra.mxu0 0
      %2288 = vmatprep.mubr.bf16.mxu0 0
      %2289 = vmatmul.mubr.bf16.gmra.mrb[0].mxu0 %v2245
      %v2290 = vpop.f32.mrb[0].mxu0
      %v2291 = vadd.f32 0.0, %v2290
      %v2292 = vpop.f32.mrb[0].mxu0
      %v2293 = vpop.f32.mrb[0].mxu0
      %v2294 = vadd.f32 0.0, %v2293
      %v2295 = vpop.f32.mrb[0].mxu0
      %2296 = vmatprep.mubr.bf16.mxu0 0
      %2297 = vmatmul.mubr.bf16.gmra.mrb[0].mxu0 %v2248
      %v2298 = vpop.f32.mrb[0].mxu0
      %v2299 = vadd.f32 0.0, %v2298
      %v2300 = vpop.f32.mrb[0].mxu0
      %v2301 = vpop.f32.mrb[0].mxu0
      %v2302 = vadd.f32 0.0, %v2301
      %v2303 = vpop.f32.mrb[0].mxu0
      %2304 = vmatprep.mubr.bf16.mxu0 0
      %2305 = vmatmul.mubr.bf16.gmra.mrb[0].mxu0 %v2251
      %v2306 = vpop.f32.mrb[0].mxu0
      %v2307 = vadd.f32 0.0, %v2306
      %v2308 = vpop.f32.mrb[0].mxu0
      %v2309 = vpop.f32.mrb[0].mxu0
      %v2310 = vadd.f32 0.0, %v2309
      %v2311 = vpop.f32.mrb[0].mxu0
      %2312 = vmatprep.mubr.bf16.mxu0 0
      %2313 = vmatmul.mubr.bf16.gmra.mrb[0].mxu0 %v2254
      %v2314 = vpop.f32.mrb[0].mxu0
      %v2315 = vadd.f32 0.0, %v2314
      %v2316 = vpop.f32.mrb[0].mxu0
      %v2317 = vpop.f32.mrb[0].mxu0
      %v2318 = vadd.f32 0.0, %v2317
      %v2319 = vpop.f32.mrb[0].mxu0
      %2320 = vdwg.mxu0
      %2329 = vrot.lane.b32.xlu0 %v1703, 16
      %v2330 = vpop.permute.xlu0 %2329
      %2331 = vrot.lane.b32.xlu0 %v1706, 16
      %v2332 = vpop.permute.xlu0 %2331
      %2333 = vrot.lane.b32.xlu0 %v1711, 16
      %v2334 = vpop.permute.xlu0 %2333
      %2335 = vrot.lane.b32.xlu0 %v1714, 16
      %v2336 = vpop.permute.xlu0 %2335
      %2337 = vrot.lane.b32.xlu0 %v1719, 16
      %v2338 = vpop.permute.xlu0 %2337
      %2339 = vrot.lane.b32.xlu0 %v1722, 16
      %v2340 = vpop.permute.xlu0 %2339
      %2341 = vrot.lane.b32.xlu0 %v1727, 16
      %v2342 = vpop.permute.xlu0 %2341
      %2343 = vrot.lane.b32.xlu0 %v1730, 16
      %v2344 = vpop.permute.xlu0 %2343
      %2361 = vrot.lane.b32.xlu0 %v1997, 32
      %v2362 = vpop.permute.xlu0 %2361
      %2363 = vrot.lane.b32.xlu0 %v2000, 32
      %v2364 = vpop.permute.xlu0 %2363
      %2365 = vrot.lane.b32.xlu0 %v2005, 32
      %v2366 = vpop.permute.xlu0 %2365
      %2367 = vrot.lane.b32.xlu0 %v2008, 32
      %v2368 = vpop.permute.xlu0 %2367
      %2369 = vrot.lane.b32.xlu0 %v2013, 32
      %v2370 = vpop.permute.xlu0 %2369
      %2371 = vrot.lane.b32.xlu0 %v2016, 32
      %v2372 = vpop.permute.xlu0 %2371
      %2373 = vrot.lane.b32.xlu0 %v2021, 32
      %v2374 = vpop.permute.xlu0 %2373
      %2375 = vrot.lane.b32.xlu0 %v2024, 32
      %v2376 = vpop.permute.xlu0 %2375
      %2393 = vrot.lane.b32.xlu0 %v2291, 48
      %v2394 = vpop.permute.xlu0 %2393
      %2395 = vrot.lane.b32.xlu0 %v2294, 48
      %v2396 = vpop.permute.xlu0 %2395
      %2397 = vrot.lane.b32.xlu0 %v2299, 48
      %v2398 = vpop.permute.xlu0 %2397
      %2399 = vrot.lane.b32.xlu0 %v2302, 48
      %v2400 = vpop.permute.xlu0 %2399
      %2401 = vrot.lane.b32.xlu0 %v2307, 48
      %v2402 = vpop.permute.xlu0 %2401
      %2403 = vrot.lane.b32.xlu0 %v2310, 48
      %v2404 = vpop.permute.xlu0 %2403
      %2405 = vrot.lane.b32.xlu0 %v2315, 48
      %v2406 = vpop.permute.xlu0 %2405
      %2407 = vrot.lane.b32.xlu0 %v2318, 48
      %v2408 = vpop.permute.xlu0 %2407
      %v2417 = vsel %vm1168, %v1405, %v2330
      %v2418 = vsel %vm1168, %v1408, %v2332
      %v2419 = vsel %vm1168, %v1413, %v2334
      %v2420 = vsel %vm1168, %v1416, %v2336
      %v2421 = vsel %vm1168, %v1421, %v2338
      %v2422 = vsel %vm1168, %v1424, %v2340
      %v2423 = vsel %vm1168, %v1429, %v2342
      %v2424 = vsel %vm1168, %v1432, %v2344
      %vm2425 = vcmask 261120
      %v2426 = vsel %vm2425, %v2417, %v2362
      %v2427 = vsel %vm2425, %v2418, %v2364
      %v2428 = vsel %vm2425, %v2419, %v2366
      %v2429 = vsel %vm2425, %v2420, %v2368
      %v2430 = vsel %vm2425, %v2421, %v2370
      %v2431 = vsel %vm2425, %v2422, %v2372
      %v2432 = vsel %vm2425, %v2423, %v2374
      %v2433 = vsel %vm2425, %v2424, %v2376
      %vm2434 = vcmask 392192
      %v2435 = vsel %vm2434, %v2426, %v2394
      %v2436 = vsel %vm2434, %v2427, %v2396
      %v2437 = vsel %vm2434, %v2428, %v2398
      %v2438 = vsel %vm2434, %v2429, %v2400
      %v2439 = vsel %vm2434, %v2430, %v2402
      %v2440 = vsel %vm2434, %v2431, %v2404
      %v2441 = vsel %vm2434, %v2432, %v2406
      %v2442 = vsel %vm2434, %v2433, %v2408
      %v2443 = vpack.c.bf16 %v2436, %v2435
      %v2444 = vpack.c.bf16 %v2438, %v2437
      %v2445 = vpack.c.bf16 %v2440, %v2439
      %v2446 = vpack.c.bf16 %v2442, %v2441
      %v2447 = vld [vmem:[%s694] sm:$0xf]
      %v2448 = vld [vmem:[%s694 + $0x4] sm:$0xf]
      %v2449 = vld [vmem:[%s694 + $0x8] sm:$0xf]
      %v2450 = vld [vmem:[%s694 + $0xc] sm:$0xf]
      %v2451 = vld [vmem:[%s694 + $0x10] sm:$0xf]
      %v2452 = vld [vmem:[%s694 + $0x14] sm:$0xf]
      %v2453 = vld [vmem:[%s694 + $0x18] sm:$0xf]
      %v2454 = vld [vmem:[%s694 + $0x1c] sm:$0xf]
      %v2455 = vld [vmem:[%s697] sm:$0x1]
      %v2457 = vlaneseq
      %v2458 = vshrl.u32 %v2457, 7
      %v2459 = vsub.s32 0, %v2458
      %v2460 = vrot.slane %v2455, %v2459
      %v2470 = vunpack.c.l.b16 %v2447
      %v2471 = vunpack.c.l.b16 %v2448
      %v2472 = vunpack.c.l.b16 %v2449
      %v2473 = vunpack.c.l.b16 %v2450
      %v2474 = vunpack.c.l.b16 %v2451
      %v2475 = vunpack.c.l.b16 %v2452
      %v2476 = vunpack.c.l.b16 %v2453
      %v2477 = vunpack.c.l.b16 %v2454
      %v2478 = vpack.c.b16 %v2471, %v2470
      %v2479 = vpack.c.b16 %v2473, %v2472
      %v2480 = vpack.c.b16 %v2475, %v2474
      %v2481 = vpack.c.b16 %v2477, %v2476
      %v2487 = vsel %vm868, %v2443, 0
      %v2490 = vsel %vm868, %v2444, 0
      %v2493 = vsel %vm868, %v2445, 0
      %v2496 = vsel %vm868, %v2446, 0
      %2498 = vmatprep.subr.bf16.mxu0 0
      %2499 = vmatpush1.bf16.msra.mxu0 %v2478
      %2500 = vmatprep.subr.bf16.mxu0 0
      %2501 = vmatpush1.bf16.msra.mxu0 %v2479
      %2502 = vmatprep.subr.bf16.mxu0 0
      %2503 = vmatpush1.bf16.msra.mxu0 %v2480
      %2504 = vmatprep.subr.bf16.mxu0 0
      %2505 = vmatpush1.bf16.msra.mxu0 %v2481
      %2506 = vmatprep.subr.bf16.mxu0 0
      %2507 = vmatpush1.bf16.msra.mxu0 0
      %2508 = vmatprep.subr.bf16.mxu0 0
      %2509 = vmatpush1.bf16.msra.mxu0 0
      %2510 = vmatprep.subr.bf16.mxu0 0
      %2511 = vmatpush1.bf16.msra.mxu0 0
      %2512 = vmatprep.subr.bf16.mxu0 0
      %2513 = vmatpush1.bf16.msra.mxu0 0
      %2514 = vmatprep.subr.bf16.mxu0 0
      %2515 = vmatpush1.bf16.msra.mxu0 0
      %2516 = vmatprep.subr.bf16.mxu0 0
      %2517 = vmatpush1.bf16.msra.mxu0 0
      %2518 = vmatprep.subr.bf16.mxu0 0
      %2519 = vmatpush1.bf16.msra.mxu0 0
      %2520 = vmatprep.subr.bf16.mxu0 0
      %2521 = vmatpush1.bf16.msra.mxu0 0
      %2522 = vmatprep.subr.bf16.mxu0 0
      %2523 = vmatpush1.bf16.msra.mxu0 0
      %2524 = vmatprep.subr.bf16.mxu0 0
      %2525 = vmatpush1.bf16.msra.mxu0 0
      %2526 = vmatprep.subr.bf16.mxu0 0
      %2527 = vmatpush1.bf16.msra.mxu0 0
      %2528 = vmatprep.subr.bf16.mxu0 0
      %2529 = vmatpush1.bf16.msra.mxu0 0
      %2530 = vmatprep.mubr.bf16.mxu0 0
      %2531 = vmatmul.mubr.bf16.gmra.mrb[0].mxu0 %v2487
      %v2532 = vpop.f32.mrb[0].mxu0
      %v2533 = vadd.f32 %v2460, %v2532
      %v2534 = vpop.f32.mrb[0].mxu0
      %v2535 = vpop.f32.mrb[0].mxu0
      %v2536 = vadd.f32 %v2460, %v2535
      %v2537 = vpop.f32.mrb[0].mxu0
      %2538 = vmatprep.mubr.bf16.mxu0 0
      %2539 = vmatmul.mubr.bf16.gmra.mrb[0].mxu0 %v2490
      %v2540 = vpop.f32.mrb[0].mxu0
      %v2541 = vadd.f32 %v2460, %v2540
      %v2542 = vpop.f32.mrb[0].mxu0
      %v2543 = vpop.f32.mrb[0].mxu0
      %v2544 = vadd.f32 %v2460, %v2543
      %v2545 = vpop.f32.mrb[0].mxu0
      %2546 = vmatprep.mubr.bf16.mxu0 0
      %2547 = vmatmul.mubr.bf16.gmra.mrb[0].mxu0 %v2493
      %v2548 = vpop.f32.mrb[0].mxu0
      %v2549 = vadd.f32 %v2460, %v2548
      %v2550 = vpop.f32.mrb[0].mxu0
      %v2551 = vpop.f32.mrb[0].mxu0
      %v2552 = vadd.f32 %v2460, %v2551
      %v2553 = vpop.f32.mrb[0].mxu0
      %2554 = vmatprep.mubr.bf16.mxu0 0
      %2555 = vmatmul.mubr.bf16.gmra.mrb[0].mxu0 %v2496
      %v2556 = vpop.f32.mrb[0].mxu0
      %v2557 = vadd.f32 %v2460, %v2556
      %v2558 = vpop.f32.mrb[0].mxu0
      %v2559 = vpop.f32.mrb[0].mxu0
      %v2560 = vadd.f32 %v2460, %v2559
      %v2561 = vpop.f32.mrb[0].mxu0
      %2562 = vdwg.mxu0
      %v2563 = vlaneseq
      %v2564 = vshrl.u32 %v2563, 7
      %v2565 = vsub.s32 2, %v2564
      %v2566 = vrot.slane %v867, %v2565
      %v2567 = vmul.f32 %v2566, %v2533
      %v2568 = vmul.f32 %v2566, %v2536
      %v2569 = vmul.f32 %v2566, %v2541
      %v2570 = vmul.f32 %v2566, %v2544
      %v2571 = vmul.f32 %v2566, %v2549
      %v2572 = vmul.f32 %v2566, %v2552
      %v2573 = vmul.f32 %v2566, %v2557
      %v2574 = vmul.f32 %v2566, %v2560
      %v2575 = vadd.f32 %v859, %v2567
      %v2576 = vadd.f32 %v860, %v2568
      %v2577 = vadd.f32 %v861, %v2569
      %v2578 = vadd.f32 %v862, %v2570
      %v2579 = vadd.f32 %v863, %v2571
      %v2580 = vadd.f32 %v864, %v2572
      %v2581 = vadd.f32 %v865, %v2573
      %v2582 = vadd.f32 %v866, %v2574
      %v2583 = vsel %vm868, %v2575, 0.0
      %2584 = vadd.xlane.f32.xlu0 %v2583
      %v2585 = vpop.xlane.xlu0 %2584
      %v2586 = vsel %vm868, %v2576, 0.0
      %2587 = vadd.xlane.f32.xlu0 %v2586
      %v2588 = vpop.xlane.xlu0 %2587
      %v2589 = vsel %vm868, %v2577, 0.0
      %2590 = vadd.xlane.f32.xlu0 %v2589
      %v2591 = vpop.xlane.xlu0 %2590
      %v2592 = vsel %vm868, %v2578, 0.0
      %2593 = vadd.xlane.f32.xlu0 %v2592
      %v2594 = vpop.xlane.xlu0 %2593
      %v2595 = vsel %vm868, %v2579, 0.0
      %2596 = vadd.xlane.f32.xlu0 %v2595
      %v2597 = vpop.xlane.xlu0 %2596
      %v2598 = vsel %vm868, %v2580, 0.0
      %2599 = vadd.xlane.f32.xlu0 %v2598
      %v2600 = vpop.xlane.xlu0 %2599
      %v2601 = vsel %vm868, %v2581, 0.0
      %2602 = vadd.xlane.f32.xlu0 %v2601
      %v2603 = vpop.xlane.xlu0 %2602
      %v2604 = vsel %vm868, %v2582, 0.0
      %2605 = vadd.xlane.f32.xlu0 %v2604
      %v2606 = vpop.xlane.xlu0 %2605
      %v2607 = vmul.f32 %v2585, %v893
      %v2608 = vmul.f32 %v2588, %v893
      %v2609 = vmul.f32 %v2591, %v893
      %v2610 = vmul.f32 %v2594, %v893
      %v2611 = vmul.f32 %v2597, %v893
      %v2612 = vmul.f32 %v2600, %v893
      %v2613 = vmul.f32 %v2603, %v893
      %v2614 = vmul.f32 %v2606, %v893
      %v2615 = vsub.f32 %v2575, %v2607
      %v2616 = vsub.f32 %v2576, %v2608
      %v2617 = vsub.f32 %v2577, %v2609
      %v2618 = vsub.f32 %v2578, %v2610
      %v2619 = vsub.f32 %v2579, %v2611
      %v2620 = vsub.f32 %v2580, %v2612
      %v2621 = vsub.f32 %v2581, %v2613
      %v2622 = vsub.f32 %v2582, %v2614
      %v2623 = vmul.f32 %v2615, %v2615
      %v2624 = vmul.f32 %v2616, %v2616
      %v2625 = vmul.f32 %v2617, %v2617
      %v2626 = vmul.f32 %v2618, %v2618
      %v2627 = vmul.f32 %v2619, %v2619
      %v2628 = vmul.f32 %v2620, %v2620
      %v2629 = vmul.f32 %v2621, %v2621
      %v2630 = vmul.f32 %v2622, %v2622
      %v2631 = vsel %vm868, %v2623, 0.0
      %2632 = vadd.xlane.f32.xlu0 %v2631
      %v2633 = vpop.xlane.xlu0 %2632
      %v2634 = vsel %vm868, %v2624, 0.0
      %2635 = vadd.xlane.f32.xlu0 %v2634
      %v2636 = vpop.xlane.xlu0 %2635
      %v2637 = vsel %vm868, %v2625, 0.0
      %2638 = vadd.xlane.f32.xlu0 %v2637
      %v2639 = vpop.xlane.xlu0 %2638
      %v2640 = vsel %vm868, %v2626, 0.0
      %2641 = vadd.xlane.f32.xlu0 %v2640
      %v2642 = vpop.xlane.xlu0 %2641
      %v2643 = vsel %vm868, %v2627, 0.0
      %2644 = vadd.xlane.f32.xlu0 %v2643
      %v2645 = vpop.xlane.xlu0 %2644
      %v2646 = vsel %vm868, %v2628, 0.0
      %2647 = vadd.xlane.f32.xlu0 %v2646
      %v2648 = vpop.xlane.xlu0 %2647
      %v2649 = vsel %vm868, %v2629, 0.0
      %2650 = vadd.xlane.f32.xlu0 %v2649
      %v2651 = vpop.xlane.xlu0 %2650
      %v2652 = vsel %vm868, %v2630, 0.0
      %2653 = vadd.xlane.f32.xlu0 %v2652
      %v2654 = vpop.xlane.xlu0 %2653
      %v2655 = vmul.f32 %v2633, %v893
      %v2656 = vmul.f32 %v2636, %v893
      %v2657 = vmul.f32 %v2639, %v893
      %v2658 = vmul.f32 %v2642, %v893
      %v2659 = vmul.f32 %v2645, %v893
      %v2660 = vmul.f32 %v2648, %v893
      %v2661 = vmul.f32 %v2651, %v893
      %v2662 = vmul.f32 %v2654, %v893
      %v2663 = vadd.f32 %v2655, 1e-06
      %v2664 = vadd.f32 %v2656, 1e-06
      %v2665 = vadd.f32 %v2657, 1e-06
      %v2666 = vadd.f32 %v2658, 1e-06
      %v2667 = vadd.f32 %v2659, 1e-06
      %v2668 = vadd.f32 %v2660, 1e-06
      %v2669 = vadd.f32 %v2661, 1e-06
      %v2670 = vadd.f32 %v2662, 1e-06
      %v2671 = vrsqrt.pop %v2663
      %v2672 = vrsqrt.pop %v2664
      %v2673 = vrsqrt.pop %v2665
      %v2674 = vrsqrt.pop %v2666
      %v2675 = vrsqrt.pop %v2667
      %v2676 = vrsqrt.pop %v2668
      %v2677 = vrsqrt.pop %v2669
      %v2678 = vrsqrt.pop %v2670
      %v2679 = vmul.f32 %v2615, %v2671
      %v2680 = vmul.f32 %v2616, %v2672
      %v2681 = vmul.f32 %v2617, %v2673
      %v2682 = vmul.f32 %v2618, %v2674
      %v2683 = vmul.f32 %v2619, %v2675
      %v2684 = vmul.f32 %v2620, %v2676
      %v2685 = vmul.f32 %v2621, %v2677
      %v2686 = vmul.f32 %v2622, %v2678
      %v2687 = vlaneseq
      %v2688 = vshrl.u32 %v2687, 7
      %v2689 = vsub.s32 4, %v2688
      %v2690 = vrot.slane %v974, %v2689
      %v2691 = vmul.f32 %v2679, %v2690
      %v2692 = vmul.f32 %v2680, %v2690
      %v2693 = vmul.f32 %v2681, %v2690
      %v2694 = vmul.f32 %v2682, %v2690
      %v2695 = vmul.f32 %v2683, %v2690
      %v2696 = vmul.f32 %v2684, %v2690
      %v2697 = vmul.f32 %v2685, %v2690
      %v2698 = vmul.f32 %v2686, %v2690
      %v2699 = vlaneseq
      %v2700 = vshrl.u32 %v2699, 7
      %v2701 = vsub.s32 3, %v2700
      %v2702 = vrot.slane %v867, %v2701
      %v2703 = vadd.f32 %v2691, %v2702
      %v2704 = vadd.f32 %v2692, %v2702
      %v2705 = vadd.f32 %v2693, %v2702
      %v2706 = vadd.f32 %v2694, %v2702
      %v2707 = vadd.f32 %v2695, %v2702
      %v2708 = vadd.f32 %v2696, %v2702
      %v2709 = vadd.f32 %v2697, %v2702
      %v2710 = vadd.f32 %v2698, %v2702
      %v2711 = vpack.c.bf16 %v2704, %v2703
      %v2712 = vpack.c.bf16 %v2706, %v2705
      %v2713 = vpack.c.bf16 %v2708, %v2707
      %v2714 = vpack.c.bf16 %v2710, %v2709
      %v2715 = vld [vmem:[%s702] sm:$0xff]
      %v2716 = vld [vmem:[%s702 + $0x8] sm:$0xff]
      %v2717 = vld [vmem:[%s702 + $0x10] sm:$0xff]
      %v2718 = vld [vmem:[%s702 + $0x18] sm:$0xff]
      %v2719 = vld [vmem:[%s702 + $0x20] sm:$0xff]
      %v2720 = vld [vmem:[%s702 + $0x28] sm:$0xff]
      %v2721 = vld [vmem:[%s702 + $0x30] sm:$0xff]
      %v2722 = vld [vmem:[%s702 + $0x38] sm:$0xff]
      %v2723 = vld [vmem:[%s706] sm:$0x3]
      %v2725 = vlaneseq
      %v2726 = vshrl.u32 %v2725, 7
      %v2727 = vsub.s32 0, %v2726
      %v2728 = vrot.slane %v2723, %v2727
      %v2729 = vlaneseq
      %v2730 = vshrl.u32 %v2729, 7
      %v2731 = vsub.s32 1, %v2730
      %v2732 = vrot.slane %v2723, %v2731
      %v2743 = vunpack.c.l.b16 %v2715
      %v2744 = vunpack.c.h.b16 %v2715
      %v2745 = vunpack.c.l.b16 %v2716
      %v2746 = vunpack.c.h.b16 %v2716
      %v2747 = vunpack.c.l.b16 %v2717
      %v2748 = vunpack.c.h.b16 %v2717
      %v2749 = vunpack.c.l.b16 %v2718
      %v2750 = vunpack.c.h.b16 %v2718
      %v2751 = vunpack.c.l.b16 %v2719
      %v2752 = vunpack.c.h.b16 %v2719
      %v2753 = vunpack.c.l.b16 %v2720
      %v2754 = vunpack.c.h.b16 %v2720
      %v2755 = vunpack.c.l.b16 %v2721
      %v2756 = vunpack.c.h.b16 %v2721
      %v2757 = vunpack.c.l.b16 %v2722
      %v2758 = vunpack.c.h.b16 %v2722
      %v2759 = vpack.c.b16 %v2745, %v2743
      %v2760 = vpack.c.b16 %v2746, %v2744
      %v2761 = vpack.c.b16 %v2749, %v2747
      %v2762 = vpack.c.b16 %v2750, %v2748
      %v2763 = vpack.c.b16 %v2753, %v2751
      %v2764 = vpack.c.b16 %v2754, %v2752
      %v2765 = vpack.c.b16 %v2757, %v2755
      %v2766 = vpack.c.b16 %v2758, %v2756
      %v2776 = vsel %vm868, %v2711, 0
      %v2779 = vsel %vm868, %v2712, 0
      %v2782 = vsel %vm868, %v2713, 0
      %v2785 = vsel %vm868, %v2714, 0
      %2787 = vmatprep.subr.bf16.mxu0 %v2760
      %2788 = vmatpush1.bf16.msra.mxu0 %v2759
      %2789 = vmatprep.subr.bf16.mxu0 %v2762
      %2790 = vmatpush1.bf16.msra.mxu0 %v2761
      %2791 = vmatprep.subr.bf16.mxu0 %v2764
      %2792 = vmatpush1.bf16.msra.mxu0 %v2763
      %2793 = vmatprep.subr.bf16.mxu0 %v2766
      %2794 = vmatpush1.bf16.msra.mxu0 %v2765
      %2795 = vmatprep.subr.bf16.mxu0 0
      %2796 = vmatpush1.bf16.msra.mxu0 0
      %2797 = vmatprep.subr.bf16.mxu0 0
      %2798 = vmatpush1.bf16.msra.mxu0 0
      %2799 = vmatprep.subr.bf16.mxu0 0
      %2800 = vmatpush1.bf16.msra.mxu0 0
      %2801 = vmatprep.subr.bf16.mxu0 0
      %2802 = vmatpush1.bf16.msra.mxu0 0
      %2803 = vmatprep.subr.bf16.mxu0 0
      %2804 = vmatpush1.bf16.msra.mxu0 0
      %2805 = vmatprep.subr.bf16.mxu0 0
      %2806 = vmatpush1.bf16.msra.mxu0 0
      %2807 = vmatprep.subr.bf16.mxu0 0
      %2808 = vmatpush1.bf16.msra.mxu0 0
      %2809 = vmatprep.subr.bf16.mxu0 0
      %2810 = vmatpush1.bf16.msra.mxu0 0
      %2811 = vmatprep.subr.bf16.mxu0 0
      %2812 = vmatpush1.bf16.msra.mxu0 0
      %2813 = vmatprep.subr.bf16.mxu0 0
      %2814 = vmatpush1.bf16.msra.mxu0 0
      %2815 = vmatprep.subr.bf16.mxu0 0
      %2816 = vmatpush1.bf16.msra.mxu0 0
      %2817 = vmatprep.subr.bf16.mxu0 0
      %2818 = vmatpush1.bf16.msra.mxu0 0
      %2819 = vmatprep.mubr.bf16.mxu0 0
      %2820 = vmatmul.mubr.bf16.gmra.mrb[0].mxu0 %v2776
      %v2821 = vpop.f32.mrb[0].mxu0
      %v2822 = vadd.f32 %v2728, %v2821
      %v2823 = vpop.f32.mrb[0].mxu0
      %v2824 = vadd.f32 %v2732, %v2823
      %v2825 = vpop.f32.mrb[0].mxu0
      %v2826 = vadd.f32 %v2728, %v2825
      %v2827 = vpop.f32.mrb[0].mxu0
      %v2828 = vadd.f32 %v2732, %v2827
      %2829 = vmatprep.mubr.bf16.mxu0 0
      %2830 = vmatmul.mubr.bf16.gmra.mrb[0].mxu0 %v2779
      %v2831 = vpop.f32.mrb[0].mxu0
      %v2832 = vadd.f32 %v2728, %v2831
      %v2833 = vpop.f32.mrb[0].mxu0
      %v2834 = vadd.f32 %v2732, %v2833
      %v2835 = vpop.f32.mrb[0].mxu0
      %v2836 = vadd.f32 %v2728, %v2835
      %v2837 = vpop.f32.mrb[0].mxu0
      %v2838 = vadd.f32 %v2732, %v2837
      %2839 = vmatprep.mubr.bf16.mxu0 0
      %2840 = vmatmul.mubr.bf16.gmra.mrb[0].mxu0 %v2782
      %v2841 = vpop.f32.mrb[0].mxu0
      %v2842 = vadd.f32 %v2728, %v2841
      %v2843 = vpop.f32.mrb[0].mxu0
      %v2844 = vadd.f32 %v2732, %v2843
      %v2845 = vpop.f32.mrb[0].mxu0
      %v2846 = vadd.f32 %v2728, %v2845
      %v2847 = vpop.f32.mrb[0].mxu0
      %v2848 = vadd.f32 %v2732, %v2847
      %2849 = vmatprep.mubr.bf16.mxu0 0
      %2850 = vmatmul.mubr.bf16.gmra.mrb[0].mxu0 %v2785
      %v2851 = vpop.f32.mrb[0].mxu0
      %v2852 = vadd.f32 %v2728, %v2851
      %v2853 = vpop.f32.mrb[0].mxu0
      %v2854 = vadd.f32 %v2732, %v2853
      %v2855 = vpop.f32.mrb[0].mxu0
      %v2856 = vadd.f32 %v2728, %v2855
      %v2857 = vpop.f32.mrb[0].mxu0
      %v2858 = vadd.f32 %v2732, %v2857
      %2859 = vdwg.mxu0
      %v2860 = vmul.f32 %v2822, 0.5
      %v2861 = vmul.f32 %v2824, 0.5
      %v2862 = vmul.f32 %v2826, 0.5
      %v2863 = vmul.f32 %v2828, 0.5
      %v2864 = vmul.f32 %v2832, 0.5
      %v2865 = vmul.f32 %v2834, 0.5
      %v2866 = vmul.f32 %v2836, 0.5
      %v2867 = vmul.f32 %v2838, 0.5
      %v2868 = vmul.f32 %v2842, 0.5
      %v2869 = vmul.f32 %v2844, 0.5
      %v2870 = vmul.f32 %v2846, 0.5
      %v2871 = vmul.f32 %v2848, 0.5
      %v2872 = vmul.f32 %v2852, 0.5
      %v2873 = vmul.f32 %v2854, 0.5
      %v2874 = vmul.f32 %v2856, 0.5
      %v2875 = vmul.f32 %v2858, 0.5
      %v2876 = vmul.f32 %v2822, %v2822
      %v2877 = vmul.f32 %v2824, %v2824
      %v2878 = vmul.f32 %v2826, %v2826
      %v2879 = vmul.f32 %v2828, %v2828
      %v2880 = vmul.f32 %v2832, %v2832
      %v2881 = vmul.f32 %v2834, %v2834
      %v2882 = vmul.f32 %v2836, %v2836
      %v2883 = vmul.f32 %v2838, %v2838
      %v2884 = vmul.f32 %v2842, %v2842
      %v2885 = vmul.f32 %v2844, %v2844
      %v2886 = vmul.f32 %v2846, %v2846
      %v2887 = vmul.f32 %v2848, %v2848
      %v2888 = vmul.f32 %v2852, %v2852
      %v2889 = vmul.f32 %v2854, %v2854
      %v2890 = vmul.f32 %v2856, %v2856
      %v2891 = vmul.f32 %v2858, %v2858
      %v2892 = vmul.f32 %v2822, %v2876
      %v2893 = vmul.f32 %v2824, %v2877
      %v2894 = vmul.f32 %v2826, %v2878
      %v2895 = vmul.f32 %v2828, %v2879
      %v2896 = vmul.f32 %v2832, %v2880
      %v2897 = vmul.f32 %v2834, %v2881
      %v2898 = vmul.f32 %v2836, %v2882
      %v2899 = vmul.f32 %v2838, %v2883
      %v2900 = vmul.f32 %v2842, %v2884
      %v2901 = vmul.f32 %v2844, %v2885
      %v2902 = vmul.f32 %v2846, %v2886
      %v2903 = vmul.f32 %v2848, %v2887
      %v2904 = vmul.f32 %v2852, %v2888
      %v2905 = vmul.f32 %v2854, %v2889
      %v2906 = vmul.f32 %v2856, %v2890
      %v2907 = vmul.f32 %v2858, %v2891
      %v2908 = vmul.f32 %v2892, 0.044715
      %v2909 = vmul.f32 %v2893, 0.044715
      %v2910 = vmul.f32 %v2894, 0.044715
      %v2911 = vmul.f32 %v2895, 0.044715
      %v2912 = vmul.f32 %v2896, 0.044715
      %v2913 = vmul.f32 %v2897, 0.044715
      %v2914 = vmul.f32 %v2898, 0.044715
      %v2915 = vmul.f32 %v2899, 0.044715
      %v2916 = vmul.f32 %v2900, 0.044715
      %v2917 = vmul.f32 %v2901, 0.044715
      %v2918 = vmul.f32 %v2902, 0.044715
      %v2919 = vmul.f32 %v2903, 0.044715
      %v2920 = vmul.f32 %v2904, 0.044715
      %v2921 = vmul.f32 %v2905, 0.044715
      %v2922 = vmul.f32 %v2906, 0.044715
      %v2923 = vmul.f32 %v2907, 0.044715
      %v2924 = vadd.f32 %v2822, %v2908
      %v2925 = vadd.f32 %v2824, %v2909
      %v2926 = vadd.f32 %v2826, %v2910
      %v2927 = vadd.f32 %v2828, %v2911
      %v2928 = vadd.f32 %v2832, %v2912
      %v2929 = vadd.f32 %v2834, %v2913
      %v2930 = vadd.f32 %v2836, %v2914
      %v2931 = vadd.f32 %v2838, %v2915
      %v2932 = vadd.f32 %v2842, %v2916
      %v2933 = vadd.f32 %v2844, %v2917
      %v2934 = vadd.f32 %v2846, %v2918
      %v2935 = vadd.f32 %v2848, %v2919
      %v2936 = vadd.f32 %v2852, %v2920
      %v2937 = vadd.f32 %v2854, %v2921
      %v2938 = vadd.f32 %v2856, %v2922
      %v2939 = vadd.f32 %v2858, %v2923
      %v2940 = vmul.f32 %v2924, 0.7978846
      %v2941 = vmul.f32 %v2925, 0.7978846
      %v2942 = vmul.f32 %v2926, 0.7978846
      %v2943 = vmul.f32 %v2927, 0.7978846
      %v2944 = vmul.f32 %v2928, 0.7978846
      %v2945 = vmul.f32 %v2929, 0.7978846
      %v2946 = vmul.f32 %v2930, 0.7978846
      %v2947 = vmul.f32 %v2931, 0.7978846
      %v2948 = vmul.f32 %v2932, 0.7978846
      %v2949 = vmul.f32 %v2933, 0.7978846
      %v2950 = vmul.f32 %v2934, 0.7978846
      %v2951 = vmul.f32 %v2935, 0.7978846
      %v2952 = vmul.f32 %v2936, 0.7978846
      %v2953 = vmul.f32 %v2937, 0.7978846
      %v2954 = vmul.f32 %v2938, 0.7978846
      %v2955 = vmul.f32 %v2939, 0.7978846
      %v2956 = vtanh.pop %v2940
      %v2957 = vtanh.pop %v2941
      %v2958 = vtanh.pop %v2942
      %v2959 = vtanh.pop %v2943
      %v2960 = vtanh.pop %v2944
      %v2961 = vtanh.pop %v2945
      %v2962 = vtanh.pop %v2946
      %v2963 = vtanh.pop %v2947
      %v2964 = vtanh.pop %v2948
      %v2965 = vtanh.pop %v2949
      %v2966 = vtanh.pop %v2950
      %v2967 = vtanh.pop %v2951
      %v2968 = vtanh.pop %v2952
      %v2969 = vtanh.pop %v2953
      %v2970 = vtanh.pop %v2954
      %v2971 = vtanh.pop %v2955
      %v2972 = vadd.f32 %v2956, 1.0
      %v2973 = vadd.f32 %v2957, 1.0
      %v2974 = vadd.f32 %v2958, 1.0
      %v2975 = vadd.f32 %v2959, 1.0
      %v2976 = vadd.f32 %v2960, 1.0
      %v2977 = vadd.f32 %v2961, 1.0
      %v2978 = vadd.f32 %v2962, 1.0
      %v2979 = vadd.f32 %v2963, 1.0
      %v2980 = vadd.f32 %v2964, 1.0
      %v2981 = vadd.f32 %v2965, 1.0
      %v2982 = vadd.f32 %v2966, 1.0
      %v2983 = vadd.f32 %v2967, 1.0
      %v2984 = vadd.f32 %v2968, 1.0
      %v2985 = vadd.f32 %v2969, 1.0
      %v2986 = vadd.f32 %v2970, 1.0
      %v2987 = vadd.f32 %v2971, 1.0
      %v2988 = vmul.f32 %v2860, %v2972
      %v2989 = vmul.f32 %v2861, %v2973
      %v2990 = vmul.f32 %v2862, %v2974
      %v2991 = vmul.f32 %v2863, %v2975
      %v2992 = vmul.f32 %v2864, %v2976
      %v2993 = vmul.f32 %v2865, %v2977
      %v2994 = vmul.f32 %v2866, %v2978
      %v2995 = vmul.f32 %v2867, %v2979
      %v2996 = vmul.f32 %v2868, %v2980
      %v2997 = vmul.f32 %v2869, %v2981
      %v2998 = vmul.f32 %v2870, %v2982
      %v2999 = vmul.f32 %v2871, %v2983
      %v3000 = vmul.f32 %v2872, %v2984
      %v3001 = vmul.f32 %v2873, %v2985
      %v3002 = vmul.f32 %v2874, %v2986
      %v3003 = vmul.f32 %v2875, %v2987
      %v3004 = vpack.c.bf16 %v2990, %v2988
      %v3005 = vpack.c.bf16 %v2991, %v2989
      %v3006 = vpack.c.bf16 %v2994, %v2992
      %v3007 = vpack.c.bf16 %v2995, %v2993
      %v3008 = vpack.c.bf16 %v2998, %v2996
      %v3009 = vpack.c.bf16 %v2999, %v2997
      %v3010 = vpack.c.bf16 %v3002, %v3000
      %v3011 = vpack.c.bf16 %v3003, %v3001
      %v3012 = vld [vmem:[%s711] sm:$0xf]
      %v3013 = vld [vmem:[%s711 + $0x4] sm:$0xf]
      %v3014 = vld [vmem:[%s711 + $0x8] sm:$0xf]
      %v3015 = vld [vmem:[%s711 + $0xc] sm:$0xf]
      %v3016 = vld [vmem:[%s711 + $0x10] sm:$0xf]
      %v3017 = vld [vmem:[%s711 + $0x14] sm:$0xf]
      %v3018 = vld [vmem:[%s711 + $0x18] sm:$0xf]
      %v3019 = vld [vmem:[%s711 + $0x1c] sm:$0xf]
      %v3020 = vld [vmem:[%s711 + $0x20] sm:$0xf]
      %v3021 = vld [vmem:[%s711 + $0x24] sm:$0xf]
      %v3022 = vld [vmem:[%s711 + $0x28] sm:$0xf]
      %v3023 = vld [vmem:[%s711 + $0x2c] sm:$0xf]
      %v3024 = vld [vmem:[%s711 + $0x30] sm:$0xf]
      %v3025 = vld [vmem:[%s711 + $0x34] sm:$0xf]
      %v3026 = vld [vmem:[%s711 + $0x38] sm:$0xf]
      %v3027 = vld [vmem:[%s711 + $0x3c] sm:$0xf]
      %v3028 = vld [vmem:[%s711 + $0x40] sm:$0xf]
      %v3029 = vld [vmem:[%s711 + $0x44] sm:$0xf]
      %v3030 = vld [vmem:[%s711 + $0x48] sm:$0xf]
      %v3031 = vld [vmem:[%s711 + $0x4c] sm:$0xf]
      %v3032 = vld [vmem:[%s711 + $0x50] sm:$0xf]
      %v3033 = vld [vmem:[%s711 + $0x54] sm:$0xf]
      %v3034 = vld [vmem:[%s711 + $0x58] sm:$0xf]
      %v3035 = vld [vmem:[%s711 + $0x5c] sm:$0xf]
      %v3036 = vld [vmem:[%s711 + $0x60] sm:$0xf]
      %v3037 = vld [vmem:[%s711 + $0x64] sm:$0xf]
      %v3038 = vld [vmem:[%s711 + $0x68] sm:$0xf]
      %v3039 = vld [vmem:[%s711 + $0x6c] sm:$0xf]
      %v3040 = vld [vmem:[%s711 + $0x70] sm:$0xf]
      %v3041 = vld [vmem:[%s711 + $0x74] sm:$0xf]
      %v3042 = vld [vmem:[%s711 + $0x78] sm:$0xf]
      %v3043 = vld [vmem:[%s711 + $0x7c] sm:$0xf]
      %v3044 = vld [vmem:[%s714] sm:$0x1]
      %v3046 = vlaneseq
      %v3047 = vshrl.u32 %v3046, 7
      %v3048 = vsub.s32 0, %v3047
      %v3049 = vrot.slane %v3044, %v3048
      %v3083 = vunpack.c.l.b16 %v3012
      %v3084 = vunpack.c.l.b16 %v3013
      %v3085 = vunpack.c.l.b16 %v3014
      %v3086 = vunpack.c.l.b16 %v3015
      %v3087 = vunpack.c.l.b16 %v3016
      %v3088 = vunpack.c.l.b16 %v3017
      %v3089 = vunpack.c.l.b16 %v3018
      %v3090 = vunpack.c.l.b16 %v3019
      %v3091 = vunpack.c.l.b16 %v3020
      %v3092 = vunpack.c.l.b16 %v3021
      %v3093 = vunpack.c.l.b16 %v3022
      %v3094 = vunpack.c.l.b16 %v3023
      %v3095 = vunpack.c.l.b16 %v3024
      %v3096 = vunpack.c.l.b16 %v3025
      %v3097 = vunpack.c.l.b16 %v3026
      %v3098 = vunpack.c.l.b16 %v3027
      %v3099 = vunpack.c.l.b16 %v3028
      %v3100 = vunpack.c.l.b16 %v3029
      %v3101 = vunpack.c.l.b16 %v3030
      %v3102 = vunpack.c.l.b16 %v3031
      %v3103 = vunpack.c.l.b16 %v3032
      %v3104 = vunpack.c.l.b16 %v3033
      %v3105 = vunpack.c.l.b16 %v3034
      %v3106 = vunpack.c.l.b16 %v3035
      %v3107 = vunpack.c.l.b16 %v3036
      %v3108 = vunpack.c.l.b16 %v3037
      %v3109 = vunpack.c.l.b16 %v3038
      %v3110 = vunpack.c.l.b16 %v3039
      %v3111 = vunpack.c.l.b16 %v3040
      %v3112 = vunpack.c.l.b16 %v3041
      %v3113 = vunpack.c.l.b16 %v3042
      %v3114 = vunpack.c.l.b16 %v3043
      %v3115 = vpack.c.b16 %v3084, %v3083
      %v3116 = vpack.c.b16 %v3086, %v3085
      %v3117 = vpack.c.b16 %v3088, %v3087
      %v3118 = vpack.c.b16 %v3090, %v3089
      %v3119 = vpack.c.b16 %v3092, %v3091
      %v3120 = vpack.c.b16 %v3094, %v3093
      %v3121 = vpack.c.b16 %v3096, %v3095
      %v3122 = vpack.c.b16 %v3098, %v3097
      %v3123 = vpack.c.b16 %v3100, %v3099
      %v3124 = vpack.c.b16 %v3102, %v3101
      %v3125 = vpack.c.b16 %v3104, %v3103
      %v3126 = vpack.c.b16 %v3106, %v3105
      %v3127 = vpack.c.b16 %v3108, %v3107
      %v3128 = vpack.c.b16 %v3110, %v3109
      %v3129 = vpack.c.b16 %v3112, %v3111
      %v3130 = vpack.c.b16 %v3114, %v3113
      %3147 = vmatprep.subr.bf16.mxu0 0
      %3148 = vmatpush1.bf16.msra.mxu0 %v3115
      %3149 = vmatprep.subr.bf16.mxu0 0
      %3150 = vmatpush1.bf16.msra.mxu0 %v3116
      %3151 = vmatprep.subr.bf16.mxu0 0
      %3152 = vmatpush1.bf16.msra.mxu0 %v3117
      %3153 = vmatprep.subr.bf16.mxu0 0
      %3154 = vmatpush1.bf16.msra.mxu0 %v3118
      %3155 = vmatprep.subr.bf16.mxu0 0
      %3156 = vmatpush1.bf16.msra.mxu0 %v3119
      %3157 = vmatprep.subr.bf16.mxu0 0
      %3158 = vmatpush1.bf16.msra.mxu0 %v3120
      %3159 = vmatprep.subr.bf16.mxu0 0
      %3160 = vmatpush1.bf16.msra.mxu0 %v3121
      %3161 = vmatprep.subr.bf16.mxu0 0
      %3162 = vmatpush1.bf16.msra.mxu0 %v3122
      %3163 = vmatprep.subr.bf16.mxu0 0
      %3164 = vmatpush1.bf16.msra.mxu0 %v3123
      %3165 = vmatprep.subr.bf16.mxu0 0
      %3166 = vmatpush1.bf16.msra.mxu0 %v3124
      %3167 = vmatprep.subr.bf16.mxu0 0
      %3168 = vmatpush1.bf16.msra.mxu0 %v3125
      %3169 = vmatprep.subr.bf16.mxu0 0
      %3170 = vmatpush1.bf16.msra.mxu0 %v3126
      %3171 = vmatprep.subr.bf16.mxu0 0
      %3172 = vmatpush1.bf16.msra.mxu0 %v3127
      %3173 = vmatprep.subr.bf16.mxu0 0
      %3174 = vmatpush1.bf16.msra.mxu0 %v3128
      %3175 = vmatprep.subr.bf16.mxu0 0
      %3176 = vmatpush1.bf16.msra.mxu0 %v3129
      %3177 = vmatprep.subr.bf16.mxu0 0
      %3178 = vmatpush1.bf16.msra.mxu0 %v3130
      %3179 = vmatprep.mubr.bf16.mxu0 %v3005
      %3180 = vmatmul.mubr.bf16.gmra.mrb[0].mxu0 %v3004
      %v3181 = vpop.f32.mrb[0].mxu0
      %v3182 = vadd.f32 %v3049, %v3181
      %v3183 = vpop.f32.mrb[0].mxu0
      %v3184 = vpop.f32.mrb[0].mxu0
      %v3185 = vadd.f32 %v3049, %v3184
      %v3186 = vpop.f32.mrb[0].mxu0
      %3187 = vmatprep.mubr.bf16.mxu0 %v3007
      %3188 = vmatmul.mubr.bf16.gmra.mrb[0].mxu0 %v3006
      %v3189 = vpop.f32.mrb[0].mxu0
      %v3190 = vadd.f32 %v3049, %v3189
      %v3191 = vpop.f32.mrb[0].mxu0
      %v3192 = vpop.f32.mrb[0].mxu0
      %v3193 = vadd.f32 %v3049, %v3192
      %v3194 = vpop.f32.mrb[0].mxu0
      %3195 = vmatprep.mubr.bf16.mxu0 %v3009
      %3196 = vmatmul.mubr.bf16.gmra.mrb[0].mxu0 %v3008
      %v3197 = vpop.f32.mrb[0].mxu0
      %v3198 = vadd.f32 %v3049, %v3197
      %v3199 = vpop.f32.mrb[0].mxu0
      %v3200 = vpop.f32.mrb[0].mxu0
      %v3201 = vadd.f32 %v3049, %v3200
      %v3202 = vpop.f32.mrb[0].mxu0
      %3203 = vmatprep.mubr.bf16.mxu0 %v3011
      %3204 = vmatmul.mubr.bf16.gmra.mrb[0].mxu0 %v3010
      %v3205 = vpop.f32.mrb[0].mxu0
      %v3206 = vadd.f32 %v3049, %v3205
      %v3207 = vpop.f32.mrb[0].mxu0
      %v3208 = vpop.f32.mrb[0].mxu0
      %v3209 = vadd.f32 %v3049, %v3208
      %v3210 = vpop.f32.mrb[0].mxu0
      %3211 = vdwg.mxu0
      %v3212 = vlaneseq
      %v3213 = vshrl.u32 %v3212, 7
      %v3214 = vsub.s32 5, %v3213
      %v3215 = vrot.slane %v867, %v3214
      %v3216 = vmul.f32 %v3215, %v3182
      %v3217 = vmul.f32 %v3215, %v3185
      %v3218 = vmul.f32 %v3215, %v3190
      %v3219 = vmul.f32 %v3215, %v3193
      %v3220 = vmul.f32 %v3215, %v3198
      %v3221 = vmul.f32 %v3215, %v3201
      %v3222 = vmul.f32 %v3215, %v3206
      %v3223 = vmul.f32 %v3215, %v3209
      %v3224 = vadd.f32 %v2575, %v3216
      %v3225 = vadd.f32 %v2576, %v3217
      %v3226 = vadd.f32 %v2577, %v3218
      %v3227 = vadd.f32 %v2578, %v3219
      %v3228 = vadd.f32 %v2579, %v3220
      %v3229 = vadd.f32 %v2580, %v3221
      %v3230 = vadd.f32 %v2581, %v3222
      %v3231 = vadd.f32 %v2582, %v3223
      %3232 = vst.msk [vmem:[#allocation2] sm:$0xff] %vm868, %v3224
      %3233 = vst.msk [vmem:[#allocation2 + $0x8] sm:$0xff] %vm868, %v3225
      %3234 = vst.msk [vmem:[#allocation2 + $0x10] sm:$0xff] %vm868, %v3226
      %3235 = vst.msk [vmem:[#allocation2 + $0x18] sm:$0xff] %vm868, %v3227
      %3236 = vst.msk [vmem:[#allocation2 + $0x20] sm:$0xff] %vm868, %v3228
      %3237 = vst.msk [vmem:[#allocation2 + $0x28] sm:$0xff] %vm868, %v3229
      %3238 = vst.msk [vmem:[#allocation2 + $0x30] sm:$0xff] %vm868, %v3230
      %3239 = vst.msk [vmem:[#allocation2 + $0x38] sm:$0xff] %vm868, %v3231
      %p3240 = scmp.eq.s32.totalorder %s32, 1
      // Predicated region
      $region89: #{_lambda_.3} parent=83 // pred_check
        %p3241 = pneg %p3240
      $region90: #{_lambda_.3} parent=83 // pred_check_branch
        %3243 = sbr.rel (%p3241) target = $region92
      $region91: #{_lambda_.3} parent=83 // pred_region
        %v3244 = vld [vmem:[%s718] sm:$0x3]
        %v3245 = vsel %vm868, %v3224, 0.0
        %3246 = vadd.xlane.f32.xlu0 %v3245
        %v3247 = vpop.xlane.xlu0 %3246
        %v3248 = vsel %vm868, %v3225, 0.0
        %3249 = vadd.xlane.f32.xlu0 %v3248
        %v3250 = vpop.xlane.xlu0 %3249
        %v3251 = vsel %vm868, %v3226, 0.0
        %3252 = vadd.xlane.f32.xlu0 %v3251
        %v3253 = vpop.xlane.xlu0 %3252
        %v3254 = vsel %vm868, %v3227, 0.0
        %3255 = vadd.xlane.f32.xlu0 %v3254
        %v3256 = vpop.xlane.xlu0 %3255
        %v3257 = vsel %vm868, %v3228, 0.0
        %3258 = vadd.xlane.f32.xlu0 %v3257
        %v3259 = vpop.xlane.xlu0 %3258
        %v3260 = vsel %vm868, %v3229, 0.0
        %3261 = vadd.xlane.f32.xlu0 %v3260
        %v3262 = vpop.xlane.xlu0 %3261
        %v3263 = vsel %vm868, %v3230, 0.0
        %3264 = vadd.xlane.f32.xlu0 %v3263
        %v3265 = vpop.xlane.xlu0 %3264
        %v3266 = vsel %vm868, %v3231, 0.0
        %3267 = vadd.xlane.f32.xlu0 %v3266
        %v3268 = vpop.xlane.xlu0 %3267
        %v3269 = vmul.f32 %v3247, %v893
        %v3270 = vmul.f32 %v3250, %v893
        %v3271 = vmul.f32 %v3253, %v893
        %v3272 = vmul.f32 %v3256, %v893
        %v3273 = vmul.f32 %v3259, %v893
        %v3274 = vmul.f32 %v3262, %v893
        %v3275 = vmul.f32 %v3265, %v893
        %v3276 = vmul.f32 %v3268, %v893
        %v3277 = vsub.f32 %v3224, %v3269
        %v3278 = vsub.f32 %v3225, %v3270
        %v3279 = vsub.f32 %v3226, %v3271
        %v3280 = vsub.f32 %v3227, %v3272
        %v3281 = vsub.f32 %v3228, %v3273
        %v3282 = vsub.f32 %v3229, %v3274
        %v3283 = vsub.f32 %v3230, %v3275
        %v3284 = vsub.f32 %v3231, %v3276
        %v3285 = vmul.f32 %v3277, %v3277
        %v3286 = vmul.f32 %v3278, %v3278
        %v3287 = vmul.f32 %v3279, %v3279
        %v3288 = vmul.f32 %v3280, %v3280
        %v3289 = vmul.f32 %v3281, %v3281
        %v3290 = vmul.f32 %v3282, %v3282
        %v3291 = vmul.f32 %v3283, %v3283
        %v3292 = vmul.f32 %v3284, %v3284
        %v3293 = vsel %vm868, %v3285, 0.0
        %3294 = vadd.xlane.f32.xlu0 %v3293
        %v3295 = vpop.xlane.xlu0 %3294
        %v3296 = vsel %vm868, %v3286, 0.0
        %3297 = vadd.xlane.f32.xlu0 %v3296
        %v3298 = vpop.xlane.xlu0 %3297
        %v3299 = vsel %vm868, %v3287, 0.0
        %3300 = vadd.xlane.f32.xlu0 %v3299
        %v3301 = vpop.xlane.xlu0 %3300
        %v3302 = vsel %vm868, %v3288, 0.0
        %3303 = vadd.xlane.f32.xlu0 %v3302
        %v3304 = vpop.xlane.xlu0 %3303
        %v3305 = vsel %vm868, %v3289, 0.0
        %3306 = vadd.xlane.f32.xlu0 %v3305
        %v3307 = vpop.xlane.xlu0 %3306
        %v3308 = vsel %vm868, %v3290, 0.0
        %3309 = vadd.xlane.f32.xlu0 %v3308
        %v3310 = vpop.xlane.xlu0 %3309
        %v3311 = vsel %vm868, %v3291, 0.0
        %3312 = vadd.xlane.f32.xlu0 %v3311
        %v3313 = vpop.xlane.xlu0 %3312
        %v3314 = vsel %vm868, %v3292, 0.0
        %3315 = vadd.xlane.f32.xlu0 %v3314
        %v3316 = vpop.xlane.xlu0 %3315
        %v3317 = vmul.f32 %v3295, %v893
        %v3318 = vmul.f32 %v3298, %v893
        %v3319 = vmul.f32 %v3301, %v893
        %v3320 = vmul.f32 %v3304, %v893
        %v3321 = vmul.f32 %v3307, %v893
        %v3322 = vmul.f32 %v3310, %v893
        %v3323 = vmul.f32 %v3313, %v893
        %v3324 = vmul.f32 %v3316, %v893
        %v3325 = vadd.f32 %v3317, 1e-06
        %v3326 = vadd.f32 %v3318, 1e-06
        %v3327 = vadd.f32 %v3319, 1e-06
        %v3328 = vadd.f32 %v3320, 1e-06
        %v3329 = vadd.f32 %v3321, 1e-06
        %v3330 = vadd.f32 %v3322, 1e-06
        %v3331 = vadd.f32 %v3323, 1e-06
        %v3332 = vadd.f32 %v3324, 1e-06
        %v3333 = vrsqrt.pop %v3325
        %v3334 = vrsqrt.pop %v3326
        %v3335 = vrsqrt.pop %v3327
        %v3336 = vrsqrt.pop %v3328
        %v3337 = vrsqrt.pop %v3329
        %v3338 = vrsqrt.pop %v3330
        %v3339 = vrsqrt.pop %v3331
        %v3340 = vrsqrt.pop %v3332
        %v3341 = vmul.f32 %v3277, %v3333
        %v3342 = vmul.f32 %v3278, %v3334
        %v3343 = vmul.f32 %v3279, %v3335
        %v3344 = vmul.f32 %v3280, %v3336
        %v3345 = vmul.f32 %v3281, %v3337
        %v3346 = vmul.f32 %v3282, %v3338
        %v3347 = vmul.f32 %v3283, %v3339
        %v3348 = vmul.f32 %v3284, %v3340
        %v3349 = vadd.f32 %v3244, 1.0
        %v3350 = vlaneseq
        %v3351 = vshrl.u32 %v3350, 7
        %v3352 = vsub.s32 1, %v3351
        %v3353 = vrot.slane %v3349, %v3352
        %v3354 = vmul.f32 %v3341, %v3353
        %v3355 = vmul.f32 %v3342, %v3353
        %v3356 = vmul.f32 %v3343, %v3353
        %v3357 = vmul.f32 %v3344, %v3353
        %v3358 = vmul.f32 %v3345, %v3353
        %v3359 = vmul.f32 %v3346, %v3353
        %v3360 = vmul.f32 %v3347, %v3353
        %v3361 = vmul.f32 %v3348, %v3353
        %v3362 = vlaneseq
        %v3363 = vshrl.u32 %v3362, 7
        %v3364 = vsub.s32 0, %v3363
        %v3365 = vrot.slane %v3244, %v3364
        %v3366 = vadd.f32 %v3354, %v3365
        %v3367 = vadd.f32 %v3355, %v3365
        %v3368 = vadd.f32 %v3356, %v3365
        %v3369 = vadd.f32 %v3357, %v3365
        %v3370 = vadd.f32 %v3358, %v3365
        %v3371 = vadd.f32 %v3359, %v3365
        %v3372 = vadd.f32 %v3360, %v3365
        %v3373 = vadd.f32 %v3361, %v3365
        %v3374 = vpack.c.bf16 %v3367, %v3366
        %v3375 = vpack.c.bf16 %v3369, %v3368
        %v3376 = vpack.c.bf16 %v3371, %v3370
        %v3377 = vpack.c.bf16 %v3373, %v3372
        %v3378 = vld [vmem:[%s14] sm:$0xf]
        %v3379 = vld [vmem:[%s14 + $0x4] sm:$0xf]
        %v3380 = vld [vmem:[%s14 + $0x8] sm:$0xf]
        %v3381 = vld [vmem:[%s14 + $0xc] sm:$0xf]
        %v3382 = vld [vmem:[%s14 + $0x10] sm:$0xf]
        %v3383 = vld [vmem:[%s14 + $0x14] sm:$0xf]
        %v3384 = vld [vmem:[%s14 + $0x18] sm:$0xf]
        %v3385 = vld [vmem:[%s14 + $0x1c] sm:$0xf]
        %v3386 = vld [vmem:[%s15] sm:$0x1]
        %v3388 = vlaneseq
        %v3389 = vshrl.u32 %v3388, 7
        %v3390 = vsub.s32 0, %v3389
        %v3391 = vrot.slane %v3386, %v3390
        %v3401 = vunpack.c.l.b16 %v3378
        %v3402 = vunpack.c.l.b16 %v3379
        %v3403 = vunpack.c.l.b16 %v3380
        %v3404 = vunpack.c.l.b16 %v3381
        %v3405 = vunpack.c.l.b16 %v3382
        %v3406 = vunpack.c.l.b16 %v3383
        %v3407 = vunpack.c.l.b16 %v3384
        %v3408 = vunpack.c.l.b16 %v3385
        %v3409 = vpack.c.b16 %v3402, %v3401
        %v3410 = vpack.c.b16 %v3404, %v3403
        %v3411 = vpack.c.b16 %v3406, %v3405
        %v3412 = vpack.c.b16 %v3408, %v3407
        %v3418 = vsel %vm868, %v3374, 0
        %v3421 = vsel %vm868, %v3375, 0
        %v3424 = vsel %vm868, %v3376, 0
        %v3427 = vsel %vm868, %v3377, 0
        %3429 = vmatprep.subr.bf16.mxu0 0
        %3430 = vmatpush1.bf16.msra.mxu0 %v3409
        %3431 = vmatprep.subr.bf16.mxu0 0
        %3432 = vmatpush1.bf16.msra.mxu0 %v3410
        %3433 = vmatprep.subr.bf16.mxu0 0
        %3434 = vmatpush1.bf16.msra.mxu0 %v3411
        %3435 = vmatprep.subr.bf16.mxu0 0
        %3436 = vmatpush1.bf16.msra.mxu0 %v3412
        %3437 = vmatprep.subr.bf16.mxu0 0
        %3438 = vmatpush1.bf16.msra.mxu0 0
        %3439 = vmatprep.subr.bf16.mxu0 0
        %3440 = vmatpush1.bf16.msra.mxu0 0
        %3441 = vmatprep.subr.bf16.mxu0 0
        %3442 = vmatpush1.bf16.msra.mxu0 0
        %3443 = vmatprep.subr.bf16.mxu0 0
        %3444 = vmatpush1.bf16.msra.mxu0 0
        %3445 = vmatprep.subr.bf16.mxu0 0
        %3446 = vmatpush1.bf16.msra.mxu0 0
        %3447 = vmatprep.subr.bf16.mxu0 0
        %3448 = vmatpush1.bf16.msra.mxu0 0
        %3449 = vmatprep.subr.bf16.mxu0 0
        %3450 = vmatpush1.bf16.msra.mxu0 0
        %3451 = vmatprep.subr.bf16.mxu0 0
        %3452 = vmatpush1.bf16.msra.mxu0 0
        %3453 = vmatprep.subr.bf16.mxu0 0
        %3454 = vmatpush1.bf16.msra.mxu0 0
        %3455 = vmatprep.subr.bf16.mxu0 0
        %3456 = vmatpush1.bf16.msra.mxu0 0
        %3457 = vmatprep.subr.bf16.mxu0 0
        %3458 = vmatpush1.bf16.msra.mxu0 0
        %3459 = vmatprep.subr.bf16.mxu0 0
        %3460 = vmatpush1.bf16.msra.mxu0 0
        %3461 = vmatprep.mubr.bf16.mxu0 0
        %3462 = vmatmul.mubr.bf16.gmra.mrb[0].mxu0 %v3418
        %v3463 = vpop.f32.mrb[0].mxu0
        %v3464 = vadd.f32 %v3391, %v3463
        %v3465 = vpop.f32.mrb[0].mxu0
        %v3466 = vpop.f32.mrb[0].mxu0
        %v3467 = vadd.f32 %v3391, %v3466
        %v3468 = vpop.f32.mrb[0].mxu0
        %3469 = vmatprep.mubr.bf16.mxu0 0
        %3470 = vmatmul.mubr.bf16.gmra.mrb[0].mxu0 %v3421
        %v3471 = vpop.f32.mrb[0].mxu0
        %v3472 = vadd.f32 %v3391, %v3471
        %v3473 = vpop.f32.mrb[0].mxu0
        %v3474 = vpop.f32.mrb[0].mxu0
        %v3475 = vadd.f32 %v3391, %v3474
        %v3476 = vpop.f32.mrb[0].mxu0
        %3477 = vmatprep.mubr.bf16.mxu0 0
        %3478 = vmatmul.mubr.bf16.gmra.mrb[0].mxu0 %v3424
        %v3479 = vpop.f32.mrb[0].mxu0
        %v3480 = vadd.f32 %v3391, %v3479
        %v3481 = vpop.f32.mrb[0].mxu0
        %v3482 = vpop.f32.mrb[0].mxu0
        %v3483 = vadd.f32 %v3391, %v3482
        %v3484 = vpop.f32.mrb[0].mxu0
        %3485 = vmatprep.mubr.bf16.mxu0 0
        %3486 = vmatmul.mubr.bf16.gmra.mrb[0].mxu0 %v3427
        %v3487 = vpop.f32.mrb[0].mxu0
        %v3488 = vadd.f32 %v3391, %v3487
        %v3489 = vpop.f32.mrb[0].mxu0
        %v3490 = vpop.f32.mrb[0].mxu0
        %v3491 = vadd.f32 %v3391, %v3490
        %v3492 = vpop.f32.mrb[0].mxu0
        %3493 = vdwg.mxu0
        %3494 = vst [vmem:[%s723] sm:$0xff] %v3464
        %3495 = vst [vmem:[%s723 + $0x8] sm:$0xff] %v3467
        %3496 = vst [vmem:[%s723 + $0x10] sm:$0xff] %v3472
        %3497 = vst [vmem:[%s723 + $0x18] sm:$0xff] %v3475
        %3498 = vst [vmem:[%s723 + $0x20] sm:$0xff] %v3480
        %3499 = vst [vmem:[%s723 + $0x28] sm:$0xff] %v3483
        %3500 = vst [vmem:[%s723 + $0x30] sm:$0xff] %v3488
        %3501 = vst [vmem:[%s723 + $0x38] sm:$0xff] %v3491
      $region92: #{_lambda_.3} parent=83 // pred_fallthru
        _
      %p3502 = scmp.lt.s32.totalorder %s31, 1
      %s3503 = scalar_select %p3502, %s31, 1
      %s3504 = smul.addr %s3503, 8
      %s3505 = smul.addr %s3504, 8
      %s3506 = scalar_lea.vmem %s16, %s3505
      // Predicated region
      $region93: #{_lambda_.3} parent=83 // pred_check
        %p3507 = pneg %p450
      $region94: #{_lambda_.3} parent=83 // pred_check_branch
        %3509 = sbr.rel (%p3507) target = $region96
      $region95: #{_lambda_.3} parent=83 // pred_region
        _
      $region96: #{_lambda_.3} parent=83 // pred_fallthru
        _
    $region84: #{_lambda_.3} parent=5 // pred_fallthru
      _
    %p3510 = scmp.le.s32.totalorder 2, %s22
    // Predicated region
    $region97: #{_lambda_.3} parent=5 // pred_check
      %p3511 = pneg %p3510
    $region98: #{_lambda_.3} parent=5 // pred_check_branch
      %3513 = sbr.rel (%p3511) target = $region100
    $region99: #{_lambda_.3} parent=5 // pred_region
      %s3514 = ssub.s32 %s22, 2
      // Predicated region
      $region101: #{_lambda_.3} parent=99 // pred_check
        %p3515 = pneg %p456
      $region102: #{_lambda_.3} parent=99 // pred_check_branch
        %3517 = sbr.rel (%p3515) target = $region104
      $region103: #{_lambda_.3} parent=99 // pred_region
        %p3518 = scmp.lt.s32.totalorder %s33, 1
        %s3519 = scalar_select %p3518, %s33, 1
        %s3520 = smul.addr %s3519, 8
        %s3521 = smul.addr %s3520, 8
        %s3522 = scalar_lea.vmem %s16, %s3521
      $region104: #{_lambda_.3} parent=99 // pred_fallthru
        _
    $region100: #{_lambda_.3} parent=5 // pred_fallthru
      _
  $region6: #{_lambda_.3} parent=0 // loop_footer
    %s26 = sadd.s32 1, %s22
  $region7: #{_lambda_.3} parent=0 // loop_footer_branch
    %21 = sbr.rel target = $region3
  $region8: #{_lambda_.3} parent=0 // loop_exit
    _

</llo_original>
